<compile_context>
chip_gen: v7x
topology: tpu7x:2x2x1
jax: 0.10.0
libtpu: 0.0.40
codegen_flags: <defaults>
</compile_context>

<pallas_src>
import functools

import jax
import jax.numpy as jnp
from jax.experimental import pallas as pl
from jax.experimental.pallas import tpu as pltpu

LANE = 128  # TPU lane width


def _round_up(n, m):
    return ((n + m - 1) // m) * m


def vae_forward_kernel(
    x_ref, eps_ref,
    w1_ref, b1_ref,      # img2hid[0] : IN_P -> H_P
    w2_ref, b2_ref,      # img2hid[2] : H_P  -> H_P
    wms_ref, bms_ref,    # fused hid2mu | hid2std : H_P -> 2*Z_P
    w3_ref, b3_ref,      # z2hid[0]   : Z_P  -> H_P
    w4_ref, b4_ref,      # z2hid[2]   : H_P  -> H_P
    w5_ref, b5_ref,      # hid2img    : H_P  -> IN_P
    xrec_ref, musig_ref,
):
    x = x_ref[...]  # bf16 (TB, IN_P)

    # ---- encode: Linear -> ReLU -> Linear, then outer ReLU ----
    h1 = jnp.dot(x, w1_ref[...], preferred_element_type=jnp.float32) + b1_ref[...]
    h1 = jnp.maximum(h1, 0.0).astype(jnp.bfloat16)
    h2 = jnp.dot(h1, w2_ref[...], preferred_element_type=jnp.float32) + b2_ref[...]
    h = jnp.maximum(h2, 0.0).astype(jnp.bfloat16)

    # ---- fused mu / sigma projection (one MXU pass, lane-dense output) ----
    ms = jnp.dot(h, wms_ref[...], preferred_element_type=jnp.float32) + bms_ref[...]
    musig_ref[...] = ms  # single lane-dense (TB, 2*Z_P) store

    half = ms.shape[-1] // 2          # = Z_P, a multiple of 128 -> aligned slices
    mu = ms[:, :half]
    sigma = ms[:, half:]

    # ---- reparameterize (f32 elementwise on the VPU) ----
    z = mu + sigma * eps_ref[...]

    # ---- decode: Linear -> ReLU -> Linear, outer ReLU, hid2img, sigmoid ----
    zb = z.astype(jnp.bfloat16)
    d1 = jnp.dot(zb, w3_ref[...], preferred_element_type=jnp.float32) + b3_ref[...]
    d1 = jnp.maximum(d1, 0.0).astype(jnp.bfloat16)
    d2 = jnp.dot(d1, w4_ref[...], preferred_element_type=jnp.float32) + b4_ref[...]
    hd = jnp.maximum(d2, 0.0).astype(jnp.bfloat16)
    logits = jnp.dot(hd, w5_ref[...], preferred_element_type=jnp.float32) + b5_ref[...]

    xrec_ref[...] = jax.nn.sigmoid(logits)  # EUP exp + VPU recip, lane-dense store


@functools.partial(jax.jit, static_argnames=("tb",))
def vae_forward(x, eps, params, *, tb=128):
    """x: (B, input_dim) f32, eps: (B, z_dim) f32. Returns (x_rec, mu, sigma)."""
    assert tb % 8 == 0, "batch tile must be a multiple of the 8-sublane height"
    B, input_dim = x.shape
    z_dim = eps.shape[1]
    (w1, b1, w2, b2, wmu, bmu, wst, bst, w3, b3, w4, b4, w5, b5) = params
    hid_dim = w1.shape[1]

    IN_P = _round_up(input_dim, LANE)
    H_P = _round_up(hid_dim, LANE)
    Z_P = _round_up(z_dim, LANE)
    B_P = _round_up(B, tb)

    def pad2(a, rows, cols):
        return jnp.pad(a, ((0, rows - a.shape[0]), (0, cols - a.shape[1])))

    # ---- pad inputs (zeros in padded lanes/rows so they cannot leak) ----
    x_p = pad2(x, B_P, IN_P).astype(jnp.bfloat16)
    eps_p = pad2(eps, B_P, Z_P).astype(jnp.float32)

    # ---- pad + cast weights (bf16); biases stay f32 rows (1, out) ----
    w1p = pad2(w1, IN_P, H_P).astype(jnp.bfloat16)
    b1p = pad2(b1, 1, H_P)
    w2p = pad2(w2, H_P, H_P).astype(jnp.bfloat16)
    b2p = pad2(b2, 1, H_P)

    # fused mu|sigma projection: mu -> lanes [0:z_dim], sigma -> lanes [Z_P:Z_P+z_dim]
    wms = jnp.zeros((H_P, 2 * Z_P), jnp.float32)
    wms = wms.at[:hid_dim, :z_dim].set(wmu)
    wms = wms.at[:hid_dim, Z_P:Z_P + z_dim].set(wst)
    wms = wms.astype(jnp.bfloat16)
    bms = jnp.zeros((1, 2 * Z_P), jnp.float32)
    bms = bms.at[:, :z_dim].set(bmu)
    bms = bms.at[:, Z_P:Z_P + z_dim].set(bst)

    w3p = pad2(w3, Z_P, H_P).astype(jnp.bfloat16)
    b3p = pad2(b3, 1, H_P)
    w4p = pad2(w4, H_P, H_P).astype(jnp.bfloat16)
    b4p = pad2(b4, 1, H_P)
    w5p = pad2(w5, H_P, IN_P).astype(jnp.bfloat16)
    b5p = pad2(b5, 1, IN_P)

    grid = (B_P // tb,)

    def row_spec(cols):
        return pl.BlockSpec((tb, cols), lambda i: (i, 0))

    def resident_spec(shape):
        # Constant block index -> DMA'd once, stays resident across batch tiles.
        return pl.BlockSpec(shape, lambda i: (0, 0))

    in_specs = [
        row_spec(IN_P),                 # x tile
        row_spec(Z_P),                  # eps tile
        resident_spec((IN_P, H_P)), resident_spec((1, H_P)),
        resident_spec((H_P, H_P)), resident_spec((1, H_P)),
        resident_spec((H_P, 2 * Z_P)), resident_spec((1, 2 * Z_P)),
        resident_spec((Z_P, H_P)), resident_spec((1, H_P)),
        resident_spec((H_P, H_P)), resident_spec((1, H_P)),
        resident_spec((H_P, IN_P)), resident_spec((1, IN_P)),
    ]
    out_specs = (row_spec(IN_P), row_spec(2 * Z_P))
    out_shapes = (
        jax.ShapeDtypeStruct((B_P, IN_P), jnp.float32),      # x_reconstructed (padded)
        jax.ShapeDtypeStruct((B_P, 2 * Z_P), jnp.float32),   # [mu | sigma] slab (padded)
    )

    xrec_p, musig_p = pl.pallas_call(
        vae_forward_kernel,
        out_shape=out_shapes,
        grid=grid,
        in_specs=in_specs,
        out_specs=out_specs,
        compiler_params=pltpu.CompilerParams(
            dimension_semantics=("parallel",),  # shard batch tiles across TCs (v7x)
        ),
    )(x_p, eps_p, w1p, b1p, w2p, b2p, wms, bms, w3p, b3p, w4p, b4p, w5p, b5p)

    x_rec = xrec_p[:B, :input_dim]
    mu = musig_p[:B, :z_dim]
    sigma = musig_p[:B, Z_P:Z_P + z_dim]
    return x_rec, mu, sigma


def vae_forward_ref(x, eps, params):
    """Pure-JAX f32 reference matching the PyTorch module semantics."""
    (w1, b1, w2, b2, wmu, bmu, wst, bst, w3, b3, w4, b4, w5, b5) = params
    h = jnp.maximum(jnp.maximum(x @ w1 + b1, 0.0) @ w2 + b2, 0.0)
    mu = h @ wmu + bmu
    sigma = h @ wst + bst
    z = mu + sigma * eps
    hd = jnp.maximum(jnp.maximum(z @ w3 + b3, 0.0) @ w4 + b4, 0.0)
    x_rec = jax.nn.sigmoid(hd @ w5 + b5)
    return x_rec, mu, sigma


def init_params(key, input_dim, hid_dim, z_dim):
    """PyTorch-Linear-style init (U(-k, k), k = 1/sqrt(fan_in)).

    Weights stored as (in_features, out_features); biases as (1, out_features).
    """
    def linear(k, fan_in, fan_out):
        kw, kb = jax.random.split(k)
        bound = 1.0 / jnp.sqrt(fan_in)
        w = jax.random.uniform(kw, (fan_in, fan_out), jnp.float32, -bound, bound)
        b = jax.random.uniform(kb, (1, fan_out), jnp.float32, -bound, bound)
        return w, b

    keys = jax.random.split(key, 7)
    w1, b1 = linear(keys[0], input_dim, hid_dim)   # img2hid[0]
    w2, b2 = linear(keys[1], hid_dim, hid_dim)     # img2hid[2]
    wmu, bmu = linear(keys[2], hid_dim, z_dim)     # hid2mu
    wst, bst = linear(keys[3], hid_dim, z_dim)     # hid2std
    w3, b3 = linear(keys[4], z_dim, hid_dim)       # z2hid[0]
    w4, b4 = linear(keys[5], hid_dim, hid_dim)     # z2hid[2]
    w5, b5 = linear(keys[6], hid_dim, input_dim)   # hid2img
    return (w1, b1, w2, b2, wmu, bmu, wst, bst, w3, b3, w4, b4, w5, b5)


if __name__ == "__main__":
    # MNIST-like shapes (module defaults): flat 28x28 images, hid 200, z 20.
    batch = 128
    input_dim = 784
    hid_dim = 200
    z_dim = 20

    root = jax.random.PRNGKey(0)
    k_x, k_eps, k_params = jax.random.split(root, 3)

    x = jax.random.uniform(k_x, (batch, input_dim), jnp.float32)   # pixel-like inputs
    # TODO(synk): epsilon is sampled here (mirrors torch.randn_like); an in-kernel
    # variant could use pltpu.prng_seed + pltpu.stateful_normal instead.
    eps = jax.random.normal(k_eps, (batch, z_dim), jnp.float32)
    params = init_params(k_params, input_dim, hid_dim, z_dim)

    # tb=64 -> two batch tiles, exercising the double-buffered pipeline.
    x_rec, mu, sigma = jax.block_until_ready(vae_forward(x, eps, params, tb=64))

    # Shape / sanity checks.
    assert x_rec.shape == (batch, input_dim) and x_rec.dtype == jnp.float32
    assert mu.shape == (batch, z_dim) and sigma.shape == (batch, z_dim)
    assert bool(jnp.all(jnp.isfinite(x_rec)))
    assert bool(jnp.all((x_rec >= 0.0) & (x_rec <= 1.0)))  # sigmoid range

    # Numerical check against pure-f32 reference (loose tol: bf16 matmul inputs).
    xr_ref, mu_ref, sg_ref = vae_forward_ref(x, eps, params)
    assert bool(jnp.max(jnp.abs(x_rec - xr_ref)) < 0.1)
    assert bool(jnp.max(jnp.abs(mu - mu_ref)) < 0.1)
    assert bool(jnp.max(jnp.abs(sigma - sg_ref)) < 0.1)

    print("KERNEL_OK")
</pallas_src>

<mosaic_0001>
module attributes {stable_mosaic.version = 11 : i64} {
  func.func @vae_forward_kernel(%arg0: i32, %arg1: memref<64x896xbf16, #tpu.memory_space<vmem>>, %arg2: memref<64x128xf32, #tpu.memory_space<vmem>>, %arg3: memref<896x256xbf16, #tpu.memory_space<vmem>>, %arg4: memref<1x256xf32, #tpu.memory_space<vmem>>, %arg5: memref<256x256xbf16, #tpu.memory_space<vmem>>, %arg6: memref<1x256xf32, #tpu.memory_space<vmem>>, %arg7: memref<256x256xbf16, #tpu.memory_space<vmem>>, %arg8: memref<1x256xf32, #tpu.memory_space<vmem>>, %arg9: memref<128x256xbf16, #tpu.memory_space<vmem>>, %arg10: memref<1x256xf32, #tpu.memory_space<vmem>>, %arg11: memref<256x256xbf16, #tpu.memory_space<vmem>>, %arg12: memref<1x256xf32, #tpu.memory_space<vmem>>, %arg13: memref<256x896xbf16, #tpu.memory_space<vmem>>, %arg14: memref<1x896xf32, #tpu.memory_space<vmem>>, %arg15: memref<64x896xf32, #tpu.memory_space<vmem>>, %arg16: memref<64x256xf32, #tpu.memory_space<vmem>>) attributes {dimension_semantics = [#tpu.dimension_semantics<parallel>], iteration_bounds = array<i64: 2>, scalar_prefetch = 0 : i64, scratch_operands = 0 : i64, tpu.core_type = #tpu.core_type<tc>, window_params = [{transform_indices = @transform_0, window_bounds = array<i64: 64, 896>}, {transform_indices = @transform_1, window_bounds = array<i64: 64, 128>}, {pipeline_mode = #tpu.pipeline_mode<synchronous>, transform_indices = @transform_2, window_bounds = array<i64: 896, 256>}, {pipeline_mode = #tpu.pipeline_mode<synchronous>, transform_indices = @transform_3, window_bounds = array<i64: 1, 256>}, {pipeline_mode = #tpu.pipeline_mode<synchronous>, transform_indices = @transform_4, window_bounds = array<i64: 256, 256>}, {pipeline_mode = #tpu.pipeline_mode<synchronous>, transform_indices = @transform_5, window_bounds = array<i64: 1, 256>}, {pipeline_mode = #tpu.pipeline_mode<synchronous>, transform_indices = @transform_6, window_bounds = array<i64: 256, 256>}, {pipeline_mode = #tpu.pipeline_mode<synchronous>, transform_indices = @transform_7, window_bounds = array<i64: 1, 256>}, {pipeline_mode = #tpu.pipeline_mode<synchronous>, transform_indices = @transform_8, window_bounds = array<i64: 128, 256>}, {pipeline_mode = #tpu.pipeline_mode<synchronous>, transform_indices = @transform_9, window_bounds = array<i64: 1, 256>}, {pipeline_mode = #tpu.pipeline_mode<synchronous>, transform_indices = @transform_10, window_bounds = array<i64: 256, 256>}, {pipeline_mode = #tpu.pipeline_mode<synchronous>, transform_indices = @transform_11, window_bounds = array<i64: 1, 256>}, {pipeline_mode = #tpu.pipeline_mode<synchronous>, transform_indices = @transform_12, window_bounds = array<i64: 256, 896>}, {pipeline_mode = #tpu.pipeline_mode<synchronous>, transform_indices = @transform_13, window_bounds = array<i64: 1, 896>}, {transform_indices = @transform_14, window_bounds = array<i64: 64, 896>}, {transform_indices = @transform_15, window_bounds = array<i64: 64, 256>}]} {
    %c0 = arith.constant 0 : index
    %c0_0 = arith.constant 0 : index
    %0 = vector.load %arg1[%c0, %c0_0] : memref<64x896xbf16, #tpu.memory_space<vmem>>, vector<64x896xbf16>
    %c0_1 = arith.constant 0 : index
    %c0_2 = arith.constant 0 : index
    %1 = vector.load %arg3[%c0_1, %c0_2] : memref<896x256xbf16, #tpu.memory_space<vmem>>, vector<896x256xbf16>
    %cst = arith.constant dense<0.000000e+00> : vector<64x256xf32>
    %2 = tpu.matmul %0, %1, %cst {dimension_numbers = #tpu.dot_dimension_numbers<[1], [0], [0], [1], [0, 0, 1, 1], [], []>} : vector<64x896xbf16>, vector<896x256xbf16>, vector<64x256xf32> -> vector<64x256xf32>
    %c0_3 = arith.constant 0 : index
    %c0_4 = arith.constant 0 : index
    %3 = vector.load %arg4[%c0_3, %c0_4] : memref<1x256xf32, #tpu.memory_space<vmem>>, vector<1x256xf32>
    %4 = vector.broadcast %3 : vector<1x256xf32> to vector<64x256xf32>
    %5 = arith.addf %2, %4 : vector<64x256xf32>
    %cst_5 = arith.constant 0.000000e+00 : f32
    %6 = vector.broadcast %cst_5 : f32 to vector<64x256xf32>
    %7 = arith.maximumf %5, %6 : vector<64x256xf32>
    %8 = arith.truncf %7 : vector<64x256xf32> to vector<64x256xbf16>
    %c0_6 = arith.constant 0 : index
    %c0_7 = arith.constant 0 : index
    %9 = vector.load %arg5[%c0_6, %c0_7] : memref<256x256xbf16, #tpu.memory_space<vmem>>, vector<256x256xbf16>
    %cst_8 = arith.constant dense<0.000000e+00> : vector<64x256xf32>
    %10 = tpu.matmul %8, %9, %cst_8 {dimension_numbers = #tpu.dot_dimension_numbers<[1], [0], [0], [1], [0, 0, 1, 1], [], []>} : vector<64x256xbf16>, vector<256x256xbf16>, vector<64x256xf32> -> vector<64x256xf32>
    %c0_9 = arith.constant 0 : index
    %c0_10 = arith.constant 0 : index
    %11 = vector.load %arg6[%c0_9, %c0_10] : memref<1x256xf32, #tpu.memory_space<vmem>>, vector<1x256xf32>
    %12 = vector.broadcast %11 : vector<1x256xf32> to vector<64x256xf32>
    %13 = arith.addf %10, %12 : vector<64x256xf32>
    %cst_11 = arith.constant 0.000000e+00 : f32
    %14 = vector.broadcast %cst_11 : f32 to vector<64x256xf32>
    %15 = arith.maximumf %13, %14 : vector<64x256xf32>
    %16 = arith.truncf %15 : vector<64x256xf32> to vector<64x256xbf16>
    %c0_12 = arith.constant 0 : index
    %c0_13 = arith.constant 0 : index
    %17 = vector.load %arg7[%c0_12, %c0_13] : memref<256x256xbf16, #tpu.memory_space<vmem>>, vector<256x256xbf16>
    %cst_14 = arith.constant dense<0.000000e+00> : vector<64x256xf32>
    %18 = tpu.matmul %16, %17, %cst_14 {dimension_numbers = #tpu.dot_dimension_numbers<[1], [0], [0], [1], [0, 0, 1, 1], [], []>} : vector<64x256xbf16>, vector<256x256xbf16>, vector<64x256xf32> -> vector<64x256xf32>
    %c0_15 = arith.constant 0 : index
    %c0_16 = arith.constant 0 : index
    %19 = vector.load %arg8[%c0_15, %c0_16] : memref<1x256xf32, #tpu.memory_space<vmem>>, vector<1x256xf32>
    %20 = vector.broadcast %19 : vector<1x256xf32> to vector<64x256xf32>
    %21 = arith.addf %18, %20 : vector<64x256xf32>
    %c0_17 = arith.constant 0 : index
    %c0_18 = arith.constant 0 : index
    %22 = vector.load %arg16[%c0_17, %c0_18] : memref<64x256xf32, #tpu.memory_space<vmem>>, vector<64x256xf32>
    tpu.vector_store %arg16[%c0_17, %c0_18], %21 {strides = array<i32>} : memref<64x256xf32, #tpu.memory_space<vmem>>, vector<64x256xf32>,
    %23 = vector.extract_strided_slice %21 {offsets = [0, 0], sizes = [64, 128], strides = [1, 1]} : vector<64x256xf32> to vector<64x128xf32>
    %24 = vector.extract_strided_slice %21 {offsets = [0, 128], sizes = [64, 128], strides = [1, 1]} : vector<64x256xf32> to vector<64x128xf32>
    %c0_19 = arith.constant 0 : index
    %c0_20 = arith.constant 0 : index
    %25 = vector.load %arg2[%c0_19, %c0_20] : memref<64x128xf32, #tpu.memory_space<vmem>>, vector<64x128xf32>
    %26 = arith.mulf %24, %25 : vector<64x128xf32>
    %27 = arith.addf %23, %26 : vector<64x128xf32>
    %28 = arith.truncf %27 : vector<64x128xf32> to vector<64x128xbf16>
    %c0_21 = arith.constant 0 : index
    %c0_22 = arith.constant 0 : index
    %29 = vector.load %arg9[%c0_21, %c0_22] : memref<128x256xbf16, #tpu.memory_space<vmem>>, vector<128x256xbf16>
    %cst_23 = arith.constant dense<0.000000e+00> : vector<64x256xf32>
    %30 = tpu.matmul %28, %29, %cst_23 {dimension_numbers = #tpu.dot_dimension_numbers<[1], [0], [0], [1], [0, 0, 1, 1], [], []>} : vector<64x128xbf16>, vector<128x256xbf16>, vector<64x256xf32> -> vector<64x256xf32>
    %c0_24 = arith.constant 0 : index
    %c0_25 = arith.constant 0 : index
    %31 = vector.load %arg10[%c0_24, %c0_25] : memref<1x256xf32, #tpu.memory_space<vmem>>, vector<1x256xf32>
    %32 = vector.broadcast %31 : vector<1x256xf32> to vector<64x256xf32>
    %33 = arith.addf %30, %32 : vector<64x256xf32>
    %cst_26 = arith.constant 0.000000e+00 : f32
    %34 = vector.broadcast %cst_26 : f32 to vector<64x256xf32>
    %35 = arith.maximumf %33, %34 : vector<64x256xf32>
    %36 = arith.truncf %35 : vector<64x256xf32> to vector<64x256xbf16>
    %c0_27 = arith.constant 0 : index
    %c0_28 = arith.constant 0 : index
    %37 = vector.load %arg11[%c0_27, %c0_28] : memref<256x256xbf16, #tpu.memory_space<vmem>>, vector<256x256xbf16>
    %cst_29 = arith.constant dense<0.000000e+00> : vector<64x256xf32>
    %38 = tpu.matmul %36, %37, %cst_29 {dimension_numbers = #tpu.dot_dimension_numbers<[1], [0], [0], [1], [0, 0, 1, 1], [], []>} : vector<64x256xbf16>, vector<256x256xbf16>, vector<64x256xf32> -> vector<64x256xf32>
    %c0_30 = arith.constant 0 : index
    %c0_31 = arith.constant 0 : index
    %39 = vector.load %arg12[%c0_30, %c0_31] : memref<1x256xf32, #tpu.memory_space<vmem>>, vector<1x256xf32>
    %40 = vector.broadcast %39 : vector<1x256xf32> to vector<64x256xf32>
    %41 = arith.addf %38, %40 : vector<64x256xf32>
    %cst_32 = arith.constant 0.000000e+00 : f32
    %42 = vector.broadcast %cst_32 : f32 to vector<64x256xf32>
    %43 = arith.maximumf %41, %42 : vector<64x256xf32>
    %44 = arith.truncf %43 : vector<64x256xf32> to vector<64x256xbf16>
    %c0_33 = arith.constant 0 : index
    %c0_34 = arith.constant 0 : index
    %45 = vector.load %arg13[%c0_33, %c0_34] : memref<256x896xbf16, #tpu.memory_space<vmem>>, vector<256x896xbf16>
    %cst_35 = arith.constant dense<0.000000e+00> : vector<64x896xf32>
    %46 = tpu.matmul %44, %45, %cst_35 {dimension_numbers = #tpu.dot_dimension_numbers<[1], [0], [0], [1], [0, 0, 1, 1], [], []>} : vector<64x256xbf16>, vector<256x896xbf16>, vector<64x896xf32> -> vector<64x896xf32>
    %c0_36 = arith.constant 0 : index
    %c0_37 = arith.constant 0 : index
    %47 = vector.load %arg14[%c0_36, %c0_37] : memref<1x896xf32, #tpu.memory_space<vmem>>, vector<1x896xf32>
    %48 = vector.broadcast %47 : vector<1x896xf32> to vector<64x896xf32>
    %49 = arith.addf %46, %48 : vector<64x896xf32>
    %50 = arith.negf %49 : vector<64x896xf32>
    %51 = math.exp %50 : vector<64x896xf32>
    %cst_38 = arith.constant 1.000000e+00 : f32
    %52 = vector.broadcast %cst_38 : f32 to vector<64x896xf32>
    %53 = arith.addf %52, %51 : vector<64x896xf32>
    %54 = arith.divf %52, %53 : vector<64x896xf32>
    %c0_39 = arith.constant 0 : index
    %c0_40 = arith.constant 0 : index
    %55 = vector.load %arg15[%c0_39, %c0_40] : memref<64x896xf32, #tpu.memory_space<vmem>>, vector<64x896xf32>
    tpu.vector_store %arg15[%c0_39, %c0_40], %54 {strides = array<i32>} : memref<64x896xf32, #tpu.memory_space<vmem>>, vector<64x896xf32>,
    return
  }
  func.func @transform_0(%arg0: i32) -> (i32, i32) {
    %c0_i32 = arith.constant 0 : i32
    %c0_i32_0 = arith.constant 0 : i32
    return %arg0, %c0_i32 : i32, i32
  }
  func.func @transform_1(%arg0: i32) -> (i32, i32) {
    %c0_i32 = arith.constant 0 : i32
    %c0_i32_0 = arith.constant 0 : i32
    return %arg0, %c0_i32 : i32, i32
  }
  func.func @transform_2(%arg0: i32) -> (i32, i32) {
    %c0_i32 = arith.constant 0 : i32
    %c0_i32_0 = arith.constant 0 : i32
    %c0_i32_1 = arith.constant 0 : i32
    return %c0_i32, %c0_i32_0 : i32, i32
  }
  func.func @transform_3(%arg0: i32) -> (i32, i32) {
    %c0_i32 = arith.constant 0 : i32
    %c0_i32_0 = arith.constant 0 : i32
    %c0_i32_1 = arith.constant 0 : i32
    return %c0_i32, %c0_i32_0 : i32, i32
  }
  func.func @transform_4(%arg0: i32) -> (i32, i32) {
    %c0_i32 = arith.constant 0 : i32
    %c0_i32_0 = arith.constant 0 : i32
    %c0_i32_1 = arith.constant 0 : i32
    return %c0_i32, %c0_i32_0 : i32, i32
  }
  func.func @transform_5(%arg0: i32) -> (i32, i32) {
    %c0_i32 = arith.constant 0 : i32
    %c0_i32_0 = arith.constant 0 : i32
    %c0_i32_1 = arith.constant 0 : i32
    return %c0_i32, %c0_i32_0 : i32, i32
  }
  func.func @transform_6(%arg0: i32) -> (i32, i32) {
    %c0_i32 = arith.constant 0 : i32
    %c0_i32_0 = arith.constant 0 : i32
    %c0_i32_1 = arith.constant 0 : i32
    return %c0_i32, %c0_i32_0 : i32, i32
  }
  func.func @transform_7(%arg0: i32) -> (i32, i32) {
    %c0_i32 = arith.constant 0 : i32
    %c0_i32_0 = arith.constant 0 : i32
    %c0_i32_1 = arith.constant 0 : i32
    return %c0_i32, %c0_i32_0 : i32, i32
  }
  func.func @transform_8(%arg0: i32) -> (i32, i32) {
    %c0_i32 = arith.constant 0 : i32
    %c0_i32_0 = arith.constant 0 : i32
    %c0_i32_1 = arith.constant 0 : i32
    return %c0_i32, %c0_i32_0 : i32, i32
  }
  func.func @transform_9(%arg0: i32) -> (i32, i32) {
    %c0_i32 = arith.constant 0 : i32
    %c0_i32_0 = arith.constant 0 : i32
    %c0_i32_1 = arith.constant 0 : i32
    return %c0_i32, %c0_i32_0 : i32, i32
  }
  func.func @transform_10(%arg0: i32) -> (i32, i32) {
    %c0_i32 = arith.constant 0 : i32
    %c0_i32_0 = arith.constant 0 : i32
    %c0_i32_1 = arith.constant 0 : i32
    return %c0_i32, %c0_i32_0 : i32, i32
  }
  func.func @transform_11(%arg0: i32) -> (i32, i32) {
    %c0_i32 = arith.constant 0 : i32
    %c0_i32_0 = arith.constant 0 : i32
    %c0_i32_1 = arith.constant 0 : i32
    return %c0_i32, %c0_i32_0 : i32, i32
  }
  func.func @transform_12(%arg0: i32) -> (i32, i32) {
    %c0_i32 = arith.constant 0 : i32
    %c0_i32_0 = arith.constant 0 : i32
    %c0_i32_1 = arith.constant 0 : i32
    return %c0_i32, %c0_i32_0 : i32, i32
  }
  func.func @transform_13(%arg0: i32) -> (i32, i32) {
    %c0_i32 = arith.constant 0 : i32
    %c0_i32_0 = arith.constant 0 : i32
    %c0_i32_1 = arith.constant 0 : i32
    return %c0_i32, %c0_i32_0 : i32, i32
  }
  func.func @transform_14(%arg0: i32) -> (i32, i32) {
    %c0_i32 = arith.constant 0 : i32
    %c0_i32_0 = arith.constant 0 : i32
    return %arg0, %c0_i32 : i32, i32
  }
  func.func @transform_15(%arg0: i32) -> (i32, i32) {
    %c0_i32 = arith.constant 0 : i32
    %c0_i32_0 = arith.constant 0 : i32
    return %arg0, %c0_i32 : i32, i32
  }
}

</mosaic_0001>

<llo_original>
// kernel: vae_forward.1
$region0: #{vae_forward.1}
  #allocation0 [shape = 'u32[]', space=smem, size = 0x4, offset = 0x4, fixed_abs, tag = 'smem constant byte address 0x4 - core index']
  #allocation1 [shape = 'u32[144,128]{1,0:T(1,128)}', space=vmem, size = 0x12000, scoped, tag = 'internal scratch']
  %s0 = inlined_call_operand.vmem [shape: bf16[128,896], index: 0, kind: input, shape index: {}]
  %s1 = inlined_call_operand.vmem [shape: f32[128,128], index: 1, kind: input, shape index: {}]
  %s2 = inlined_call_operand.vmem [shape: bf16[896,256], index: 2, kind: input, shape index: {}]
  %s3 = inlined_call_operand.vmem [shape: f32[1,256], index: 3, kind: input, shape index: {}]
  %s4 = inlined_call_operand.vmem [shape: bf16[256,256], index: 4, kind: input, shape index: {}]
  %s5 = inlined_call_operand.vmem [shape: f32[1,256], index: 5, kind: input, shape index: {}]
  %s6 = inlined_call_operand.vmem [shape: bf16[256,256], index: 6, kind: input, shape index: {}]
  %s7 = inlined_call_operand.vmem [shape: f32[1,256], index: 7, kind: input, shape index: {}]
  %s8 = inlined_call_operand.vmem [shape: bf16[128,256], index: 8, kind: input, shape index: {}]
  %s9 = inlined_call_operand.vmem [shape: f32[1,256], index: 9, kind: input, shape index: {}]
  %s10 = inlined_call_operand.vmem [shape: bf16[256,256], index: 10, kind: input, shape index: {}]
  %s11 = inlined_call_operand.vmem [shape: f32[1,256], index: 11, kind: input, shape index: {}]
  %s12 = inlined_call_operand.vmem [shape: bf16[256,896], index: 12, kind: input, shape index: {}]
  %s13 = inlined_call_operand.vmem [shape: f32[1,896], index: 13, kind: input, shape index: {}]
  %s14 = inlined_call_operand.vmem [shape: f32[128,896], index: 14, kind: output, shape index: {0}]
  %s15 = inlined_call_operand.vmem [shape: f32[128,256], index: 15, kind: output, shape index: {1}]
  %16 = xla_tuple %s14, %s15
  %s17 = sld [smem:[#allocation0]]
  $region97: #{vae_forward.1} parent=0
    _
  %s19 = ssub.s32 1, %s17
  %s20 = scalar_select 0, %s19, %s17
  loop: start=0, step=1, limit=4
  $region2: #{vae_forward.1} parent=0 // loop_pre_header
    _
  $region3: #{vae_forward.1} parent=0 // loop_header
    %s22 = sphi 0, %s26
    %p23 = scmp.ge.s32.totalorder %s22, 4
    %s32 = sphi 0, %s34
    %s35 = sphi 0, %s32
    %s36 = sphi 0, %s35
    %s52 = sphi 0, %s36
    %s58 = sphi 0, %s60
    %s61 = sphi 0, %s58
    %s62 = sphi 0, %s61
    %s78 = sphi 0, %s62
    %s82 = sphi 0, %s82
    %s84 = sphi 0, %s82
    %s85 = sphi 0, %s84
    %s99 = sphi 0, %s85
    %s103 = sphi 0, %s103
    %s105 = sphi 0, %s103
    %s106 = sphi 0, %s105
    %s120 = sphi 0, %s106
    %s124 = sphi 0, %s124
    %s126 = sphi 0, %s124
    %s127 = sphi 0, %s126
    %s141 = sphi 0, %s127
    %s145 = sphi 0, %s145
    %s147 = sphi 0, %s145
    %s148 = sphi 0, %s147
    %s162 = sphi 0, %s148
    %s166 = sphi 0, %s166
    %s168 = sphi 0, %s166
    %s169 = sphi 0, %s168
    %s183 = sphi 0, %s169
    %s187 = sphi 0, %s187
    %s189 = sphi 0, %s187
    %s190 = sphi 0, %s189
    %s204 = sphi 0, %s190
    %s208 = sphi 0, %s208
    %s210 = sphi 0, %s208
    %s211 = sphi 0, %s210
    %s225 = sphi 0, %s211
    %s229 = sphi 0, %s229
    %s231 = sphi 0, %s229
    %s232 = sphi 0, %s231
    %s246 = sphi 0, %s232
    %s250 = sphi 0, %s250
    %s252 = sphi 0, %s250
    %s253 = sphi 0, %s252
    %s267 = sphi 0, %s253
    %s271 = sphi 0, %s271
    %s273 = sphi 0, %s271
    %s274 = sphi 0, %s273
    %s288 = sphi 0, %s274
    %s292 = sphi 0, %s292
    %s294 = sphi 0, %s292
    %s295 = sphi 0, %s294
    %s309 = sphi 0, %s295
    %s313 = sphi 0, %s313
    %s315 = sphi 0, %s313
    %s316 = sphi 0, %s315
    %s330 = sphi 0, %s316
    %s336 = sphi 0, %s338
    %s339 = sphi 0, %s336
    %s340 = sphi 0, %s339
    %s356 = sphi 0, %s340
    %s362 = sphi 0, %s364
    %s365 = sphi 0, %s362
    %s366 = sphi 0, %s365
    %s382 = sphi 0, %s366
  $region4: #{vae_forward.1} parent=0 // loop_header_branch
    %25 = sbr.rel (%p23) target = $region8
  $region5: #{vae_forward.1} parent=0 // loop_body
    %s27 = ssub.s32 %s22, 1
    %s28 = ssub.s32 %s22, 2
    %s29 = sadd.s32 %s22, 1
    %s30 = ssub.s32 %s22, %s29
    %p31 = scmp.eq.s32.totalorder %s30, 0
    %s33 = sadd.s32 %s32, 1
    %s34 = scalar_select %p31, %s32, %s33
    %p37 = pneg %p31
    %p38 = scmp.eq.s32.totalorder %s22, 1
    %p39 = por %p37, %p38
    %p40 = scmp.ne.s32.totalorder %s32, %s35
    %p41 = scmp.eq.s32.totalorder %s22, 0
    %p42 = por %p40, %p41
    %p43 = scmp.ne.s32.totalorder %s32, %s35
    %p44 = scmp.eq.s32.totalorder %s27, 1
    %p45 = por %p43, %p44
    %p46 = scmp.ne.s32.totalorder %s35, %s36
    %p47 = scmp.eq.s32.totalorder %s27, 0
    %p48 = por %p46, %p47
    %p49 = scmp.ne.s32.totalorder %s35, %s36
    %p50 = scmp.eq.s32.totalorder %s28, 1
    %p51 = por %p49, %p50
    %p53 = scmp.ne.s32.totalorder %s36, %s52
    %p54 = scmp.eq.s32.totalorder %s28, 0
    %p55 = por %p53, %p54
    %s56 = ssub.s32 %s22, %s29
    %p57 = scmp.eq.s32.totalorder %s56, 0
    %s59 = sadd.s32 %s58, 1
    %s60 = scalar_select %p57, %s58, %s59
    %p63 = pneg %p57
    %p64 = scmp.eq.s32.totalorder %s22, 1
    %p65 = por %p63, %p64
    %p66 = scmp.ne.s32.totalorder %s58, %s61
    %p67 = scmp.eq.s32.totalorder %s22, 0
    %p68 = por %p66, %p67
    %p69 = scmp.ne.s32.totalorder %s58, %s61
    %p70 = scmp.eq.s32.totalorder %s27, 1
    %p71 = por %p69, %p70
    %p72 = scmp.ne.s32.totalorder %s61, %s62
    %p73 = scmp.eq.s32.totalorder %s27, 0
    %p74 = por %p72, %p73
    %p75 = scmp.ne.s32.totalorder %s61, %s62
    %p76 = scmp.eq.s32.totalorder %s28, 1
    %p77 = por %p75, %p76
    %p79 = scmp.ne.s32.totalorder %s62, %s78
    %p80 = scmp.eq.s32.totalorder %s28, 0
    %p81 = por %p79, %p80
    %s83 = sadd.s32 %s82, 1
    %p86 = scmp.eq.s32.totalorder %s22, 1
    %p87 = scmp.ne.s32.totalorder %s82, %s84
    %p88 = scmp.eq.s32.totalorder %s22, 0
    %p89 = por %p87, %p88
    %p90 = scmp.ne.s32.totalorder %s82, %s84
    %p91 = scmp.eq.s32.totalorder %s27, 1
    %p92 = por %p90, %p91
    %p93 = scmp.ne.s32.totalorder %s84, %s85
    %p94 = scmp.eq.s32.totalorder %s27, 0
    %p95 = por %p93, %p94
    %p96 = scmp.ne.s32.totalorder %s84, %s85
    %p97 = scmp.eq.s32.totalorder %s28, 1
    %p98 = por %p96, %p97
    %p100 = scmp.ne.s32.totalorder %s85, %s99
    %p101 = scmp.eq.s32.totalorder %s28, 0
    %p102 = por %p100, %p101
    %s104 = sadd.s32 %s103, 1
    %p107 = scmp.eq.s32.totalorder %s22, 1
    %p108 = scmp.ne.s32.totalorder %s103, %s105
    %p109 = scmp.eq.s32.totalorder %s22, 0
    %p110 = por %p108, %p109
    %p111 = scmp.ne.s32.totalorder %s103, %s105
    %p112 = scmp.eq.s32.totalorder %s27, 1
    %p113 = por %p111, %p112
    %p114 = scmp.ne.s32.totalorder %s105, %s106
    %p115 = scmp.eq.s32.totalorder %s27, 0
    %p116 = por %p114, %p115
    %p117 = scmp.ne.s32.totalorder %s105, %s106
    %p118 = scmp.eq.s32.totalorder %s28, 1
    %p119 = por %p117, %p118
    %p121 = scmp.ne.s32.totalorder %s106, %s120
    %p122 = scmp.eq.s32.totalorder %s28, 0
    %p123 = por %p121, %p122
    %s125 = sadd.s32 %s124, 1
    %p128 = scmp.eq.s32.totalorder %s22, 1
    %p129 = scmp.ne.s32.totalorder %s124, %s126
    %p130 = scmp.eq.s32.totalorder %s22, 0
    %p131 = por %p129, %p130
    %p132 = scmp.ne.s32.totalorder %s124, %s126
    %p133 = scmp.eq.s32.totalorder %s27, 1
    %p134 = por %p132, %p133
    %p135 = scmp.ne.s32.totalorder %s126, %s127
    %p136 = scmp.eq.s32.totalorder %s27, 0
    %p137 = por %p135, %p136
    %p138 = scmp.ne.s32.totalorder %s126, %s127
    %p139 = scmp.eq.s32.totalorder %s28, 1
    %p140 = por %p138, %p139
    %p142 = scmp.ne.s32.totalorder %s127, %s141
    %p143 = scmp.eq.s32.totalorder %s28, 0
    %p144 = por %p142, %p143
    %s146 = sadd.s32 %s145, 1
    %p149 = scmp.eq.s32.totalorder %s22, 1
    %p150 = scmp.ne.s32.totalorder %s145, %s147
    %p151 = scmp.eq.s32.totalorder %s22, 0
    %p152 = por %p150, %p151
    %p153 = scmp.ne.s32.totalorder %s145, %s147
    %p154 = scmp.eq.s32.totalorder %s27, 1
    %p155 = por %p153, %p154
    %p156 = scmp.ne.s32.totalorder %s147, %s148
    %p157 = scmp.eq.s32.totalorder %s27, 0
    %p158 = por %p156, %p157
    %p159 = scmp.ne.s32.totalorder %s147, %s148
    %p160 = scmp.eq.s32.totalorder %s28, 1
    %p161 = por %p159, %p160
    %p163 = scmp.ne.s32.totalorder %s148, %s162
    %p164 = scmp.eq.s32.totalorder %s28, 0
    %p165 = por %p163, %p164
    %s167 = sadd.s32 %s166, 1
    %p170 = scmp.eq.s32.totalorder %s22, 1
    %p171 = scmp.ne.s32.totalorder %s166, %s168
    %p172 = scmp.eq.s32.totalorder %s22, 0
    %p173 = por %p171, %p172
    %p174 = scmp.ne.s32.totalorder %s166, %s168
    %p175 = scmp.eq.s32.totalorder %s27, 1
    %p176 = por %p174, %p175
    %p177 = scmp.ne.s32.totalorder %s168, %s169
    %p178 = scmp.eq.s32.totalorder %s27, 0
    %p179 = por %p177, %p178
    %p180 = scmp.ne.s32.totalorder %s168, %s169
    %p181 = scmp.eq.s32.totalorder %s28, 1
    %p182 = por %p180, %p181
    %p184 = scmp.ne.s32.totalorder %s169, %s183
    %p185 = scmp.eq.s32.totalorder %s28, 0
    %p186 = por %p184, %p185
    %s188 = sadd.s32 %s187, 1
    %p191 = scmp.eq.s32.totalorder %s22, 1
    %p192 = scmp.ne.s32.totalorder %s187, %s189
    %p193 = scmp.eq.s32.totalorder %s22, 0
    %p194 = por %p192, %p193
    %p195 = scmp.ne.s32.totalorder %s187, %s189
    %p196 = scmp.eq.s32.totalorder %s27, 1
    %p197 = por %p195, %p196
    %p198 = scmp.ne.s32.totalorder %s189, %s190
    %p199 = scmp.eq.s32.totalorder %s27, 0
    %p200 = por %p198, %p199
    %p201 = scmp.ne.s32.totalorder %s189, %s190
    %p202 = scmp.eq.s32.totalorder %s28, 1
    %p203 = por %p201, %p202
    %p205 = scmp.ne.s32.totalorder %s190, %s204
    %p206 = scmp.eq.s32.totalorder %s28, 0
    %p207 = por %p205, %p206
    %s209 = sadd.s32 %s208, 1
    %p212 = scmp.eq.s32.totalorder %s22, 1
    %p213 = scmp.ne.s32.totalorder %s208, %s210
    %p214 = scmp.eq.s32.totalorder %s22, 0
    %p215 = por %p213, %p214
    %p216 = scmp.ne.s32.totalorder %s208, %s210
    %p217 = scmp.eq.s32.totalorder %s27, 1
    %p218 = por %p216, %p217
    %p219 = scmp.ne.s32.totalorder %s210, %s211
    %p220 = scmp.eq.s32.totalorder %s27, 0
    %p221 = por %p219, %p220
    %p222 = scmp.ne.s32.totalorder %s210, %s211
    %p223 = scmp.eq.s32.totalorder %s28, 1
    %p224 = por %p222, %p223
    %p226 = scmp.ne.s32.totalorder %s211, %s225
    %p227 = scmp.eq.s32.totalorder %s28, 0
    %p228 = por %p226, %p227
    %s230 = sadd.s32 %s229, 1
    %p233 = scmp.eq.s32.totalorder %s22, 1
    %p234 = scmp.ne.s32.totalorder %s229, %s231
    %p235 = scmp.eq.s32.totalorder %s22, 0
    %p236 = por %p234, %p235
    %p237 = scmp.ne.s32.totalorder %s229, %s231
    %p238 = scmp.eq.s32.totalorder %s27, 1
    %p239 = por %p237, %p238
    %p240 = scmp.ne.s32.totalorder %s231, %s232
    %p241 = scmp.eq.s32.totalorder %s27, 0
    %p242 = por %p240, %p241
    %p243 = scmp.ne.s32.totalorder %s231, %s232
    %p244 = scmp.eq.s32.totalorder %s28, 1
    %p245 = por %p243, %p244
    %p247 = scmp.ne.s32.totalorder %s232, %s246
    %p248 = scmp.eq.s32.totalorder %s28, 0
    %p249 = por %p247, %p248
    %s251 = sadd.s32 %s250, 1
    %p254 = scmp.eq.s32.totalorder %s22, 1
    %p255 = scmp.ne.s32.totalorder %s250, %s252
    %p256 = scmp.eq.s32.totalorder %s22, 0
    %p257 = por %p255, %p256
    %p258 = scmp.ne.s32.totalorder %s250, %s252
    %p259 = scmp.eq.s32.totalorder %s27, 1
    %p260 = por %p258, %p259
    %p261 = scmp.ne.s32.totalorder %s252, %s253
    %p262 = scmp.eq.s32.totalorder %s27, 0
    %p263 = por %p261, %p262
    %p264 = scmp.ne.s32.totalorder %s252, %s253
    %p265 = scmp.eq.s32.totalorder %s28, 1
    %p266 = por %p264, %p265
    %p268 = scmp.ne.s32.totalorder %s253, %s267
    %p269 = scmp.eq.s32.totalorder %s28, 0
    %p270 = por %p268, %p269
    %s272 = sadd.s32 %s271, 1
    %p275 = scmp.eq.s32.totalorder %s22, 1
    %p276 = scmp.ne.s32.totalorder %s271, %s273
    %p277 = scmp.eq.s32.totalorder %s22, 0
    %p278 = por %p276, %p277
    %p279 = scmp.ne.s32.totalorder %s271, %s273
    %p280 = scmp.eq.s32.totalorder %s27, 1
    %p281 = por %p279, %p280
    %p282 = scmp.ne.s32.totalorder %s273, %s274
    %p283 = scmp.eq.s32.totalorder %s27, 0
    %p284 = por %p282, %p283
    %p285 = scmp.ne.s32.totalorder %s273, %s274
    %p286 = scmp.eq.s32.totalorder %s28, 1
    %p287 = por %p285, %p286
    %p289 = scmp.ne.s32.totalorder %s274, %s288
    %p290 = scmp.eq.s32.totalorder %s28, 0
    %p291 = por %p289, %p290
    %s293 = sadd.s32 %s292, 1
    %p296 = scmp.eq.s32.totalorder %s22, 1
    %p297 = scmp.ne.s32.totalorder %s292, %s294
    %p298 = scmp.eq.s32.totalorder %s22, 0
    %p299 = por %p297, %p298
    %p300 = scmp.ne.s32.totalorder %s292, %s294
    %p301 = scmp.eq.s32.totalorder %s27, 1
    %p302 = por %p300, %p301
    %p303 = scmp.ne.s32.totalorder %s294, %s295
    %p304 = scmp.eq.s32.totalorder %s27, 0
    %p305 = por %p303, %p304
    %p306 = scmp.ne.s32.totalorder %s294, %s295
    %p307 = scmp.eq.s32.totalorder %s28, 1
    %p308 = por %p306, %p307
    %p310 = scmp.ne.s32.totalorder %s295, %s309
    %p311 = scmp.eq.s32.totalorder %s28, 0
    %p312 = por %p310, %p311
    %s314 = sadd.s32 %s313, 1
    %p317 = scmp.eq.s32.totalorder %s22, 1
    %p318 = scmp.ne.s32.totalorder %s313, %s315
    %p319 = scmp.eq.s32.totalorder %s22, 0
    %p320 = por %p318, %p319
    %p321 = scmp.ne.s32.totalorder %s313, %s315
    %p322 = scmp.eq.s32.totalorder %s27, 1
    %p323 = por %p321, %p322
    %p324 = scmp.ne.s32.totalorder %s315, %s316
    %p325 = scmp.eq.s32.totalorder %s27, 0
    %p326 = por %p324, %p325
    %p327 = scmp.ne.s32.totalorder %s315, %s316
    %p328 = scmp.eq.s32.totalorder %s28, 1
    %p329 = por %p327, %p328
    %p331 = scmp.ne.s32.totalorder %s316, %s330
    %p332 = scmp.eq.s32.totalorder %s28, 0
    %p333 = por %p331, %p332
    %s334 = ssub.s32 %s22, %s29
    %p335 = scmp.eq.s32.totalorder %s334, 0
    %s337 = sadd.s32 %s336, 1
    %s338 = scalar_select %p335, %s336, %s337
    %p341 = pneg %p335
    %p342 = scmp.eq.s32.totalorder %s22, 1
    %p343 = por %p341, %p342
    %p344 = scmp.ne.s32.totalorder %s336, %s339
    %p345 = scmp.eq.s32.totalorder %s22, 0
    %p346 = por %p344, %p345
    %p347 = scmp.ne.s32.totalorder %s336, %s339
    %p348 = scmp.eq.s32.totalorder %s27, 1
    %p349 = por %p347, %p348
    %p350 = scmp.ne.s32.totalorder %s339, %s340
    %p351 = scmp.eq.s32.totalorder %s27, 0
    %p352 = por %p350, %p351
    %p353 = scmp.ne.s32.totalorder %s339, %s340
    %p354 = scmp.eq.s32.totalorder %s28, 1
    %p355 = por %p353, %p354
    %p357 = scmp.ne.s32.totalorder %s340, %s356
    %p358 = scmp.eq.s32.totalorder %s28, 0
    %p359 = por %p357, %p358
    %s360 = ssub.s32 %s22, %s29
    %p361 = scmp.eq.s32.totalorder %s360, 0
    %s363 = sadd.s32 %s362, 1
    %s364 = scalar_select %p361, %s362, %s363
    %p367 = pneg %p361
    %p368 = scmp.eq.s32.totalorder %s22, 1
    %p369 = por %p367, %p368
    %p370 = scmp.ne.s32.totalorder %s362, %s365
    %p371 = scmp.eq.s32.totalorder %s22, 0
    %p372 = por %p370, %p371
    %p373 = scmp.ne.s32.totalorder %s362, %s365
    %p374 = scmp.eq.s32.totalorder %s27, 1
    %p375 = por %p373, %p374
    %p376 = scmp.ne.s32.totalorder %s365, %s366
    %p377 = scmp.eq.s32.totalorder %s27, 0
    %p378 = por %p376, %p377
    %p379 = scmp.ne.s32.totalorder %s365, %s366
    %p380 = scmp.eq.s32.totalorder %s28, 1
    %p381 = por %p379, %p380
    %p383 = scmp.ne.s32.totalorder %s366, %s382
    %p384 = scmp.eq.s32.totalorder %s28, 0
    %p385 = por %p383, %p384
    %p386 = scmp.le.s32.totalorder 1, %s22
    %p387 = scmp.lt.s32.totalorder %s22, 3
    %p388 = pnand %p386, %p387
    %p389 = pneg %p388
    // Predicated region
    $region9: #{vae_forward.1} parent=5 // pred_check
      _
    $region10: #{vae_forward.1} parent=5 // pred_check_branch
      %391 = sbr.rel (%p388) target = $region12
    $region11: #{vae_forward.1} parent=5 // pred_region
      %s392 = ssub.s32 %s22, 1
      // Predicated region
      $region13: #{vae_forward.1} parent=11 // pred_check
        %p393 = pneg %p95
      $region14: #{vae_forward.1} parent=11 // pred_check_branch
        %395 = sbr.rel (%p393) target = $region16
      $region15: #{vae_forward.1} parent=11 // pred_region
        _
      $region16: #{vae_forward.1} parent=11 // pred_fallthru
        _
      // Predicated region
      $region17: #{vae_forward.1} parent=11 // pred_check
        %p396 = pneg %p116
      $region18: #{vae_forward.1} parent=11 // pred_check_branch
        %398 = sbr.rel (%p396) target = $region20
      $region19: #{vae_forward.1} parent=11 // pred_region
        _
      $region20: #{vae_forward.1} parent=11 // pred_fallthru
        _
      // Predicated region
      $region21: #{vae_forward.1} parent=11 // pred_check
        %p399 = pneg %p137
      $region22: #{vae_forward.1} parent=11 // pred_check_branch
        %401 = sbr.rel (%p399) target = $region24
      $region23: #{vae_forward.1} parent=11 // pred_region
        _
      $region24: #{vae_forward.1} parent=11 // pred_fallthru
        _
      // Predicated region
      $region25: #{vae_forward.1} parent=11 // pred_check
        %p402 = pneg %p158
      $region26: #{vae_forward.1} parent=11 // pred_check_branch
        %404 = sbr.rel (%p402) target = $region28
      $region27: #{vae_forward.1} parent=11 // pred_region
        _
      $region28: #{vae_forward.1} parent=11 // pred_fallthru
        _
      // Predicated region
      $region29: #{vae_forward.1} parent=11 // pred_check
        %p405 = pneg %p179
      $region30: #{vae_forward.1} parent=11 // pred_check_branch
        %407 = sbr.rel (%p405) target = $region32
      $region31: #{vae_forward.1} parent=11 // pred_region
        _
      $region32: #{vae_forward.1} parent=11 // pred_fallthru
        _
      // Predicated region
      $region33: #{vae_forward.1} parent=11 // pred_check
        %p408 = pneg %p200
      $region34: #{vae_forward.1} parent=11 // pred_check_branch
        %410 = sbr.rel (%p408) target = $region36
      $region35: #{vae_forward.1} parent=11 // pred_region
        _
      $region36: #{vae_forward.1} parent=11 // pred_fallthru
        _
      // Predicated region
      $region37: #{vae_forward.1} parent=11 // pred_check
        %p411 = pneg %p221
      $region38: #{vae_forward.1} parent=11 // pred_check_branch
        %413 = sbr.rel (%p411) target = $region40
      $region39: #{vae_forward.1} parent=11 // pred_region
        _
      $region40: #{vae_forward.1} parent=11 // pred_fallthru
        _
      // Predicated region
      $region41: #{vae_forward.1} parent=11 // pred_check
        %p414 = pneg %p242
      $region42: #{vae_forward.1} parent=11 // pred_check_branch
        %416 = sbr.rel (%p414) target = $region44
      $region43: #{vae_forward.1} parent=11 // pred_region
        _
      $region44: #{vae_forward.1} parent=11 // pred_fallthru
        _
      // Predicated region
      $region45: #{vae_forward.1} parent=11 // pred_check
        %p417 = pneg %p263
      $region46: #{vae_forward.1} parent=11 // pred_check_branch
        %419 = sbr.rel (%p417) target = $region48
      $region47: #{vae_forward.1} parent=11 // pred_region
        _
      $region48: #{vae_forward.1} parent=11 // pred_fallthru
        _
      // Predicated region
      $region49: #{vae_forward.1} parent=11 // pred_check
        %p420 = pneg %p284
      $region50: #{vae_forward.1} parent=11 // pred_check_branch
        %422 = sbr.rel (%p420) target = $region52
      $region51: #{vae_forward.1} parent=11 // pred_region
        _
      $region52: #{vae_forward.1} parent=11 // pred_fallthru
        _
      // Predicated region
      $region53: #{vae_forward.1} parent=11 // pred_check
        %p423 = pneg %p305
      $region54: #{vae_forward.1} parent=11 // pred_check_branch
        %425 = sbr.rel (%p423) target = $region56
      $region55: #{vae_forward.1} parent=11 // pred_region
        _
      $region56: #{vae_forward.1} parent=11 // pred_fallthru
        _
      // Predicated region
      $region57: #{vae_forward.1} parent=11 // pred_check
        %p426 = pneg %p326
      $region58: #{vae_forward.1} parent=11 // pred_check_branch
        %428 = sbr.rel (%p426) target = $region60
      $region59: #{vae_forward.1} parent=11 // pred_region
        _
      $region60: #{vae_forward.1} parent=11 // pred_fallthru
        _
    $region12: #{vae_forward.1} parent=5 // pred_fallthru
      _
    %p429 = scmp.lt.s32.totalorder %s22, 2
    // Predicated region
    $region61: #{vae_forward.1} parent=5 // pred_check
      %p430 = pneg %p429
    $region62: #{vae_forward.1} parent=5 // pred_check_branch
      %432 = sbr.rel (%p430) target = $region64
    $region63: #{vae_forward.1} parent=5 // pred_region
      // Predicated region
      $region65: #{vae_forward.1} parent=63 // pred_check
        %p433 = pneg %p42
      $region66: #{vae_forward.1} parent=63 // pred_check_branch
        %435 = sbr.rel (%p433) target = $region68
      $region67: #{vae_forward.1} parent=63 // pred_region
        %s436 = smul.u32 8, %s22
        %p437 = scmp.lt.s32.totalorder %s436, 15
        %s438 = scalar_select %p437, %s436, 15
        %s439 = smul.addr %s438, 7
        %s440 = smul.addr %s439, 4
        %s441 = scalar_lea.vmem %s0, %s440
        %s442 = smul.u32 8, %s22
      $region68: #{vae_forward.1} parent=63 // pred_fallthru
        _
      // Predicated region
      $region69: #{vae_forward.1} parent=63 // pred_check
        %p443 = pneg %p68
      $region70: #{vae_forward.1} parent=63 // pred_check_branch
        %445 = sbr.rel (%p443) target = $region72
      $region71: #{vae_forward.1} parent=63 // pred_region
        %s446 = smul.u32 8, %s22
        %p447 = scmp.lt.s32.totalorder %s446, 15
        %s448 = scalar_select %p447, %s446, 15
        %s449 = smul.addr %s448, 8
        %s450 = scalar_lea.vmem %s1, %s449
        %s451 = smul.u32 8, %s22
      $region72: #{vae_forward.1} parent=63 // pred_fallthru
        _
    $region64: #{vae_forward.1} parent=5 // pred_fallthru
      _
    %p452 = scmp.le.s32.totalorder 1, %s22
    %p453 = scmp.lt.s32.totalorder %s22, 3
    %p454 = pnand %p452, %p453
    %p455 = pneg %p454
    // Predicated region
    $region73: #{vae_forward.1} parent=5 // pred_check
      _
    $region74: #{vae_forward.1} parent=5 // pred_check_branch
      %457 = sbr.rel (%p454) target = $region76
    $region75: #{vae_forward.1} parent=5 // pred_region
      %s458 = ssub.s32 %s22, 1
      %s459 = smul.u32 8, %s27
      %p460 = scmp.lt.s32.totalorder %s459, 15
      %s461 = scalar_select %p460, %s459, 15
      %s462 = smul.addr %s461, 7
      %s463 = smul.addr %s462, 4
      %s464 = scalar_lea.vmem %s0, %s463
      %p465 = pneg %p48
      %p466 = pneg %p45
      %s467 = smul.u32 8, %s27
      %p468 = scmp.lt.s32.totalorder %s467, 15
      %s469 = scalar_select %p468, %s467, 15
      %s470 = smul.addr %s469, 8
      %s471 = scalar_lea.vmem %s1, %s470
      %p472 = pneg %p74
      %p473 = pneg %p71
      %p474 = pneg %p95
      %p475 = pneg %p92
      %p476 = pneg %p116
      %p477 = pneg %p113
      %p478 = pneg %p137
      %p479 = pneg %p134
      %p480 = pneg %p158
      %p481 = pneg %p155
      %p482 = pneg %p179
      %p483 = pneg %p176
      %p484 = pneg %p200
      %p485 = pneg %p197
      %p486 = pneg %p221
      %p487 = pneg %p218
      %p488 = pneg %p242
      %p489 = pneg %p239
      %p490 = pneg %p263
      %p491 = pneg %p260
      %p492 = pneg %p284
      %p493 = pneg %p281
      %p494 = pneg %p305
      %p495 = pneg %p302
      %p496 = pneg %p326
      %p497 = pneg %p323
      %p498 = pneg %p352
      %p499 = pneg %p349
      %s500 = smul.u32 8, %s27
      %p501 = scmp.lt.s32.totalorder %s500, 15
      %s502 = scalar_select %p501, %s500, 15
      %s503 = smul.addr %s502, 7
      %s504 = smul.addr %s503, 8
      %s505 = scalar_lea.vmem %s14, %s504
      %p506 = pneg %p378
      %p507 = pneg %p375
      %s508 = smul.u32 8, %s27
      %p509 = scmp.lt.s32.totalorder %s508, 15
      %s510 = scalar_select %p509, %s508, 15
      %s511 = smul.addr %s510, 2
      %s512 = smul.addr %s511, 8
      %s513 = scalar_lea.vmem %s15, %s512
      %s514 = smul.u32 8, %s27
      %p515 = scmp.lt.s32.totalorder %s514, 15
      %s516 = scalar_select %p515, %s514, 15
      %s517 = smul.addr %s516, 7
      %s518 = smul.addr %s517, 4
      %s519 = scalar_lea.vmem %s0, %s518
      %s520 = smul.u32 8, %s27
      %s521 = smul.u32 8, %s27
      %p522 = scmp.lt.s32.totalorder %s521, 15
      %s523 = scalar_select %p522, %s521, 15
      %s524 = smul.addr %s523, 8
      %s525 = scalar_lea.vmem %s1, %s524
      %s526 = smul.u32 8, %s27
      %s527 = smul.u32 8, %s27
      %p528 = scmp.lt.s32.totalorder %s527, 15
      %s529 = scalar_select %p528, %s527, 15
      %s530 = smul.addr %s529, 7
      %s531 = smul.addr %s530, 8
      %s532 = scalar_lea.vmem %s14, %s531
      %s533 = smul.u32 8, %s27
      %s534 = smul.u32 8, %s27
      %p535 = scmp.lt.s32.totalorder %s534, 15
      %s536 = scalar_select %p535, %s534, 15
      %s537 = smul.addr %s536, 2
      %s538 = smul.addr %s537, 8
      %s539 = scalar_lea.vmem %s15, %s538
      %s540 = smul.u32 8, %s27
      %v542 = vld [vmem:[%s519] sm:$0xff]
      %v543 = vld [vmem:[%s519 + $0x8] sm:$0xff]
      %v544 = vld [vmem:[%s519 + $0x10] sm:$0xff]
      %v545 = vld [vmem:[%s519 + $0x18] sm:$0xf]
      %v546 = vld [vmem:[%s519 + $0x1c] sm:$0xff]
      %v547 = vld [vmem:[%s519 + $0x24] sm:$0xff]
      %v548 = vld [vmem:[%s519 + $0x2c] sm:$0xff]
      %v549 = vld [vmem:[%s519 + $0x34] sm:$0xf]
      %v550 = vld [vmem:[%s519 + $0x38] sm:$0xff]
      %v551 = vld [vmem:[%s519 + $0x40] sm:$0xff]
      %v552 = vld [vmem:[%s519 + $0x48] sm:$0xff]
      %v553 = vld [vmem:[%s519 + $0x50] sm:$0xf]
      %v554 = vld [vmem:[%s519 + $0x54] sm:$0xff]
      %v555 = vld [vmem:[%s519 + $0x5c] sm:$0xff]
      %v556 = vld [vmem:[%s519 + $0x64] sm:$0xff]
      %v557 = vld [vmem:[%s519 + $0x6c] sm:$0xf]
      %v558 = vld [vmem:[%s519 + $0x70] sm:$0xff]
      %v559 = vld [vmem:[%s519 + $0x78] sm:$0xff]
      %v560 = vld [vmem:[%s519 + $0x80] sm:$0xff]
      %v561 = vld [vmem:[%s519 + $0x88] sm:$0xf]
      %v562 = vld [vmem:[%s519 + $0x8c] sm:$0xff]
      %v563 = vld [vmem:[%s519 + $0x94] sm:$0xff]
      %v564 = vld [vmem:[%s519 + $0x9c] sm:$0xff]
      %v565 = vld [vmem:[%s519 + $0xa4] sm:$0xf]
      %v566 = vld [vmem:[%s519 + $0xa8] sm:$0xff]
      %v567 = vld [vmem:[%s519 + $0xb0] sm:$0xff]
      %v568 = vld [vmem:[%s519 + $0xb8] sm:$0xff]
      %v569 = vld [vmem:[%s519 + $0xc0] sm:$0xf]
      %v570 = vld [vmem:[%s519 + $0xc4] sm:$0xff]
      %v571 = vld [vmem:[%s519 + $0xcc] sm:$0xff]
      %v572 = vld [vmem:[%s519 + $0xd4] sm:$0xff]
      %v573 = vld [vmem:[%s519 + $0xdc] sm:$0xf]
      %v574 = vld [vmem:[%s2] sm:$0xff]
      %v575 = vld [vmem:[%s2 + $0x8] sm:$0xff]
      %v576 = vld [vmem:[%s2 + $0x10] sm:$0xff]
      %v577 = vld [vmem:[%s2 + $0x18] sm:$0xff]
      %v578 = vld [vmem:[%s2 + $0x20] sm:$0xff]
      %v579 = vld [vmem:[%s2 + $0x28] sm:$0xff]
      %v580 = vld [vmem:[%s2 + $0x30] sm:$0xff]
      %v581 = vld [vmem:[%s2 + $0x38] sm:$0xff]
      %v582 = vld [vmem:[%s2 + $0x40] sm:$0xff]
      %v583 = vld [vmem:[%s2 + $0x48] sm:$0xff]
      %v584 = vld [vmem:[%s2 + $0x50] sm:$0xff]
      %v585 = vld [vmem:[%s2 + $0x58] sm:$0xff]
      %v586 = vld [vmem:[%s2 + $0x60] sm:$0xff]
      %v587 = vld [vmem:[%s2 + $0x68] sm:$0xff]
      %v588 = vld [vmem:[%s2 + $0x70] sm:$0xff]
      %v589 = vld [vmem:[%s2 + $0x78] sm:$0xff]
      %v590 = vld [vmem:[%s2 + $0x80] sm:$0xff]
      %v591 = vld [vmem:[%s2 + $0x88] sm:$0xff]
      %v592 = vld [vmem:[%s2 + $0x90] sm:$0xff]
      %v593 = vld [vmem:[%s2 + $0x98] sm:$0xff]
      %v594 = vld [vmem:[%s2 + $0xa0] sm:$0xff]
      %v595 = vld [vmem:[%s2 + $0xa8] sm:$0xff]
      %v596 = vld [vmem:[%s2 + $0xb0] sm:$0xff]
      %v597 = vld [vmem:[%s2 + $0xb8] sm:$0xff]
      %v598 = vld [vmem:[%s2 + $0xc0] sm:$0xff]
      %v599 = vld [vmem:[%s2 + $0xc8] sm:$0xff]
      %v600 = vld [vmem:[%s2 + $0xd0] sm:$0xff]
      %v601 = vld [vmem:[%s2 + $0xd8] sm:$0xff]
      %v602 = vld [vmem:[%s2 + $0xe0] sm:$0xff]
      %v603 = vld [vmem:[%s2 + $0xe8] sm:$0xff]
      %v604 = vld [vmem:[%s2 + $0xf0] sm:$0xff]
      %v605 = vld [vmem:[%s2 + $0xf8] sm:$0xff]
      %v606 = vld [vmem:[%s2 + $0x100] sm:$0xff]
      %v607 = vld [vmem:[%s2 + $0x108] sm:$0xff]
      %v608 = vld [vmem:[%s2 + $0x110] sm:$0xff]
      %v609 = vld [vmem:[%s2 + $0x118] sm:$0xff]
      %v610 = vld [vmem:[%s2 + $0x120] sm:$0xff]
      %v611 = vld [vmem:[%s2 + $0x128] sm:$0xff]
      %v612 = vld [vmem:[%s2 + $0x130] sm:$0xff]
      %v613 = vld [vmem:[%s2 + $0x138] sm:$0xff]
      %v614 = vld [vmem:[%s2 + $0x140] sm:$0xff]
      %v615 = vld [vmem:[%s2 + $0x148] sm:$0xff]
      %v616 = vld [vmem:[%s2 + $0x150] sm:$0xff]
      %v617 = vld [vmem:[%s2 + $0x158] sm:$0xff]
      %v618 = vld [vmem:[%s2 + $0x160] sm:$0xff]
      %v619 = vld [vmem:[%s2 + $0x168] sm:$0xff]
      %v620 = vld [vmem:[%s2 + $0x170] sm:$0xff]
      %v621 = vld [vmem:[%s2 + $0x178] sm:$0xff]
      %v622 = vld [vmem:[%s2 + $0x180] sm:$0xff]
      %v623 = vld [vmem:[%s2 + $0x188] sm:$0xff]
      %v624 = vld [vmem:[%s2 + $0x190] sm:$0xff]
      %v625 = vld [vmem:[%s2 + $0x198] sm:$0xff]
      %v626 = vld [vmem:[%s2 + $0x1a0] sm:$0xff]
      %v627 = vld [vmem:[%s2 + $0x1a8] sm:$0xff]
      %v628 = vld [vmem:[%s2 + $0x1b0] sm:$0xff]
      %v629 = vld [vmem:[%s2 + $0x1b8] sm:$0xff]
      %v630 = vld [vmem:[%s2 + $0x1c0] sm:$0xff]
      %v631 = vld [vmem:[%s2 + $0x1c8] sm:$0xff]
      %v632 = vld [vmem:[%s2 + $0x1d0] sm:$0xff]
      %v633 = vld [vmem:[%s2 + $0x1d8] sm:$0xff]
      %v634 = vld [vmem:[%s2 + $0x1e0] sm:$0xff]
      %v635 = vld [vmem:[%s2 + $0x1e8] sm:$0xff]
      %v636 = vld [vmem:[%s2 + $0x1f0] sm:$0xff]
      %v637 = vld [vmem:[%s2 + $0x1f8] sm:$0xff]
      %v638 = vld [vmem:[%s2 + $0x200] sm:$0xff]
      %v639 = vld [vmem:[%s2 + $0x208] sm:$0xff]
      %v640 = vld [vmem:[%s2 + $0x210] sm:$0xff]
      %v641 = vld [vmem:[%s2 + $0x218] sm:$0xff]
      %v642 = vld [vmem:[%s2 + $0x220] sm:$0xff]
      %v643 = vld [vmem:[%s2 + $0x228] sm:$0xff]
      %v644 = vld [vmem:[%s2 + $0x230] sm:$0xff]
      %v645 = vld [vmem:[%s2 + $0x238] sm:$0xff]
      %v646 = vld [vmem:[%s2 + $0x240] sm:$0xff]
      %v647 = vld [vmem:[%s2 + $0x248] sm:$0xff]
      %v648 = vld [vmem:[%s2 + $0x250] sm:$0xff]
      %v649 = vld [vmem:[%s2 + $0x258] sm:$0xff]
      %v650 = vld [vmem:[%s2 + $0x260] sm:$0xff]
      %v651 = vld [vmem:[%s2 + $0x268] sm:$0xff]
      %v652 = vld [vmem:[%s2 + $0x270] sm:$0xff]
      %v653 = vld [vmem:[%s2 + $0x278] sm:$0xff]
      %v654 = vld [vmem:[%s2 + $0x280] sm:$0xff]
      %v655 = vld [vmem:[%s2 + $0x288] sm:$0xff]
      %v656 = vld [vmem:[%s2 + $0x290] sm:$0xff]
      %v657 = vld [vmem:[%s2 + $0x298] sm:$0xff]
      %v658 = vld [vmem:[%s2 + $0x2a0] sm:$0xff]
      %v659 = vld [vmem:[%s2 + $0x2a8] sm:$0xff]
      %v660 = vld [vmem:[%s2 + $0x2b0] sm:$0xff]
      %v661 = vld [vmem:[%s2 + $0x2b8] sm:$0xff]
      %v662 = vld [vmem:[%s2 + $0x2c0] sm:$0xff]
      %v663 = vld [vmem:[%s2 + $0x2c8] sm:$0xff]
      %v664 = vld [vmem:[%s2 + $0x2d0] sm:$0xff]
      %v665 = vld [vmem:[%s2 + $0x2d8] sm:$0xff]
      %v666 = vld [vmem:[%s2 + $0x2e0] sm:$0xff]
      %v667 = vld [vmem:[%s2 + $0x2e8] sm:$0xff]
      %v668 = vld [vmem:[%s2 + $0x2f0] sm:$0xff]
      %v669 = vld [vmem:[%s2 + $0x2f8] sm:$0xff]
      %v670 = vld [vmem:[%s2 + $0x300] sm:$0xff]
      %v671 = vld [vmem:[%s2 + $0x308] sm:$0xff]
      %v672 = vld [vmem:[%s2 + $0x310] sm:$0xff]
      %v673 = vld [vmem:[%s2 + $0x318] sm:$0xff]
      %v674 = vld [vmem:[%s2 + $0x320] sm:$0xff]
      %v675 = vld [vmem:[%s2 + $0x328] sm:$0xff]
      %v676 = vld [vmem:[%s2 + $0x330] sm:$0xff]
      %v677 = vld [vmem:[%s2 + $0x338] sm:$0xff]
      %v678 = vld [vmem:[%s2 + $0x340] sm:$0xff]
      %v679 = vld [vmem:[%s2 + $0x348] sm:$0xff]
      %v680 = vld [vmem:[%s2 + $0x350] sm:$0xff]
      %v681 = vld [vmem:[%s2 + $0x358] sm:$0xff]
      %v682 = vld [vmem:[%s2 + $0x360] sm:$0xff]
      %v683 = vld [vmem:[%s2 + $0x368] sm:$0xff]
      %v684 = vld [vmem:[%s2 + $0x370] sm:$0xff]
      %v685 = vld [vmem:[%s2 + $0x378] sm:$0xff]
      %v686 = vld [vmem:[%s3] sm:$0x3]
      %v688 = vlaneseq
      %v689 = vshrl.u32 %v688, 7
      %v690 = vsub.s32 0, %v689
      %v691 = vrot.slane %v686, %v690
      %v692 = vlaneseq
      %v693 = vshrl.u32 %v692, 7
      %v694 = vsub.s32 1, %v693
      %v695 = vrot.slane %v686, %v694
      %v730 = vunpack.c.l.b16 %v542
      %v731 = vunpack.c.h.b16 %v542
      %v732 = vunpack.c.l.b16 %v543
      %v733 = vunpack.c.h.b16 %v543
      %v734 = vunpack.c.l.b16 %v544
      %v735 = vunpack.c.h.b16 %v544
      %v736 = vunpack.c.l.b16 %v545
      %v737 = vunpack.c.l.b16 %v546
      %v738 = vunpack.c.h.b16 %v546
      %v739 = vunpack.c.l.b16 %v547
      %v740 = vunpack.c.h.b16 %v547
      %v741 = vunpack.c.l.b16 %v548
      %v742 = vunpack.c.h.b16 %v548
      %v743 = vunpack.c.l.b16 %v549
      %v744 = vunpack.c.l.b16 %v550
      %v745 = vunpack.c.h.b16 %v550
      %v746 = vunpack.c.l.b16 %v551
      %v747 = vunpack.c.h.b16 %v551
      %v748 = vunpack.c.l.b16 %v552
      %v749 = vunpack.c.h.b16 %v552
      %v750 = vunpack.c.l.b16 %v553
      %v751 = vunpack.c.l.b16 %v554
      %v752 = vunpack.c.h.b16 %v554
      %v753 = vunpack.c.l.b16 %v555
      %v754 = vunpack.c.h.b16 %v555
      %v755 = vunpack.c.l.b16 %v556
      %v756 = vunpack.c.h.b16 %v556
      %v757 = vunpack.c.l.b16 %v557
      %v758 = vunpack.c.l.b16 %v558
      %v759 = vunpack.c.h.b16 %v558
      %v760 = vunpack.c.l.b16 %v559
      %v761 = vunpack.c.h.b16 %v559
      %v762 = vunpack.c.l.b16 %v560
      %v763 = vunpack.c.h.b16 %v560
      %v764 = vunpack.c.l.b16 %v561
      %v765 = vunpack.c.l.b16 %v562
      %v766 = vunpack.c.h.b16 %v562
      %v767 = vunpack.c.l.b16 %v563
      %v768 = vunpack.c.h.b16 %v563
      %v769 = vunpack.c.l.b16 %v564
      %v770 = vunpack.c.h.b16 %v564
      %v771 = vunpack.c.l.b16 %v565
      %v772 = vunpack.c.l.b16 %v566
      %v773 = vunpack.c.h.b16 %v566
      %v774 = vunpack.c.l.b16 %v567
      %v775 = vunpack.c.h.b16 %v567
      %v776 = vunpack.c.l.b16 %v568
      %v777 = vunpack.c.h.b16 %v568
      %v778 = vunpack.c.l.b16 %v569
      %v779 = vunpack.c.l.b16 %v570
      %v780 = vunpack.c.h.b16 %v570
      %v781 = vunpack.c.l.b16 %v571
      %v782 = vunpack.c.h.b16 %v571
      %v783 = vunpack.c.l.b16 %v572
      %v784 = vunpack.c.h.b16 %v572
      %v785 = vunpack.c.l.b16 %v573
      %v786 = vpack.c.b16 %v737, %v730
      %v787 = vpack.c.b16 %v738, %v731
      %v788 = vpack.c.b16 %v739, %v732
      %v789 = vpack.c.b16 %v740, %v733
      %v790 = vpack.c.b16 %v741, %v734
      %v791 = vpack.c.b16 %v742, %v735
      %v792 = vpack.c.b16 %v743, %v736
      %v793 = vpack.c.b16 %v751, %v744
      %v794 = vpack.c.b16 %v752, %v745
      %v795 = vpack.c.b16 %v753, %v746
      %v796 = vpack.c.b16 %v754, %v747
      %v797 = vpack.c.b16 %v755, %v748
      %v798 = vpack.c.b16 %v756, %v749
      %v799 = vpack.c.b16 %v757, %v750
      %v800 = vpack.c.b16 %v765, %v758
      %v801 = vpack.c.b16 %v766, %v759
      %v802 = vpack.c.b16 %v767, %v760
      %v803 = vpack.c.b16 %v768, %v761
      %v804 = vpack.c.b16 %v769, %v762
      %v805 = vpack.c.b16 %v770, %v763
      %v806 = vpack.c.b16 %v771, %v764
      %v807 = vpack.c.b16 %v779, %v772
      %v808 = vpack.c.b16 %v780, %v773
      %v809 = vpack.c.b16 %v781, %v774
      %v810 = vpack.c.b16 %v782, %v775
      %v811 = vpack.c.b16 %v783, %v776
      %v812 = vpack.c.b16 %v784, %v777
      %v813 = vpack.c.b16 %v785, %v778
      %v954 = vunpack.c.l.b16 %v574
      %v955 = vunpack.c.h.b16 %v574
      %v956 = vunpack.c.l.b16 %v575
      %v957 = vunpack.c.h.b16 %v575
      %v958 = vunpack.c.l.b16 %v576
      %v959 = vunpack.c.h.b16 %v576
      %v960 = vunpack.c.l.b16 %v577
      %v961 = vunpack.c.h.b16 %v577
      %v962 = vunpack.c.l.b16 %v578
      %v963 = vunpack.c.h.b16 %v578
      %v964 = vunpack.c.l.b16 %v579
      %v965 = vunpack.c.h.b16 %v579
      %v966 = vunpack.c.l.b16 %v580
      %v967 = vunpack.c.h.b16 %v580
      %v968 = vunpack.c.l.b16 %v581
      %v969 = vunpack.c.h.b16 %v581
      %v970 = vunpack.c.l.b16 %v582
      %v971 = vunpack.c.h.b16 %v582
      %v972 = vunpack.c.l.b16 %v583
      %v973 = vunpack.c.h.b16 %v583
      %v974 = vunpack.c.l.b16 %v584
      %v975 = vunpack.c.h.b16 %v584
      %v976 = vunpack.c.l.b16 %v585
      %v977 = vunpack.c.h.b16 %v585
      %v978 = vunpack.c.l.b16 %v586
      %v979 = vunpack.c.h.b16 %v586
      %v980 = vunpack.c.l.b16 %v587
      %v981 = vunpack.c.h.b16 %v587
      %v982 = vunpack.c.l.b16 %v588
      %v983 = vunpack.c.h.b16 %v588
      %v984 = vunpack.c.l.b16 %v589
      %v985 = vunpack.c.h.b16 %v589
      %v986 = vunpack.c.l.b16 %v590
      %v987 = vunpack.c.h.b16 %v590
      %v988 = vunpack.c.l.b16 %v591
      %v989 = vunpack.c.h.b16 %v591
      %v990 = vunpack.c.l.b16 %v592
      %v991 = vunpack.c.h.b16 %v592
      %v992 = vunpack.c.l.b16 %v593
      %v993 = vunpack.c.h.b16 %v593
      %v994 = vunpack.c.l.b16 %v594
      %v995 = vunpack.c.h.b16 %v594
      %v996 = vunpack.c.l.b16 %v595
      %v997 = vunpack.c.h.b16 %v595
      %v998 = vunpack.c.l.b16 %v596
      %v999 = vunpack.c.h.b16 %v596
      %v1000 = vunpack.c.l.b16 %v597
      %v1001 = vunpack.c.h.b16 %v597
      %v1002 = vunpack.c.l.b16 %v598
      %v1003 = vunpack.c.h.b16 %v598
      %v1004 = vunpack.c.l.b16 %v599
      %v1005 = vunpack.c.h.b16 %v599
      %v1006 = vunpack.c.l.b16 %v600
      %v1007 = vunpack.c.h.b16 %v600
      %v1008 = vunpack.c.l.b16 %v601
      %v1009 = vunpack.c.h.b16 %v601
      %v1010 = vunpack.c.l.b16 %v602
      %v1011 = vunpack.c.h.b16 %v602
      %v1012 = vunpack.c.l.b16 %v603
      %v1013 = vunpack.c.h.b16 %v603
      %v1014 = vunpack.c.l.b16 %v604
      %v1015 = vunpack.c.h.b16 %v604
      %v1016 = vunpack.c.l.b16 %v605
      %v1017 = vunpack.c.h.b16 %v605
      %v1018 = vunpack.c.l.b16 %v606
      %v1019 = vunpack.c.h.b16 %v606
      %v1020 = vunpack.c.l.b16 %v607
      %v1021 = vunpack.c.h.b16 %v607
      %v1022 = vunpack.c.l.b16 %v608
      %v1023 = vunpack.c.h.b16 %v608
      %v1024 = vunpack.c.l.b16 %v609
      %v1025 = vunpack.c.h.b16 %v609
      %v1026 = vunpack.c.l.b16 %v610
      %v1027 = vunpack.c.h.b16 %v610
      %v1028 = vunpack.c.l.b16 %v611
      %v1029 = vunpack.c.h.b16 %v611
      %v1030 = vunpack.c.l.b16 %v612
      %v1031 = vunpack.c.h.b16 %v612
      %v1032 = vunpack.c.l.b16 %v613
      %v1033 = vunpack.c.h.b16 %v613
      %v1034 = vunpack.c.l.b16 %v614
      %v1035 = vunpack.c.h.b16 %v614
      %v1036 = vunpack.c.l.b16 %v615
      %v1037 = vunpack.c.h.b16 %v615
      %v1038 = vunpack.c.l.b16 %v616
      %v1039 = vunpack.c.h.b16 %v616
      %v1040 = vunpack.c.l.b16 %v617
      %v1041 = vunpack.c.h.b16 %v617
      %v1042 = vunpack.c.l.b16 %v618
      %v1043 = vunpack.c.h.b16 %v618
      %v1044 = vunpack.c.l.b16 %v619
      %v1045 = vunpack.c.h.b16 %v619
      %v1046 = vunpack.c.l.b16 %v620
      %v1047 = vunpack.c.h.b16 %v620
      %v1048 = vunpack.c.l.b16 %v621
      %v1049 = vunpack.c.h.b16 %v621
      %v1050 = vunpack.c.l.b16 %v622
      %v1051 = vunpack.c.h.b16 %v622
      %v1052 = vunpack.c.l.b16 %v623
      %v1053 = vunpack.c.h.b16 %v623
      %v1054 = vunpack.c.l.b16 %v624
      %v1055 = vunpack.c.h.b16 %v624
      %v1056 = vunpack.c.l.b16 %v625
      %v1057 = vunpack.c.h.b16 %v625
      %v1058 = vunpack.c.l.b16 %v626
      %v1059 = vunpack.c.h.b16 %v626
      %v1060 = vunpack.c.l.b16 %v627
      %v1061 = vunpack.c.h.b16 %v627
      %v1062 = vunpack.c.l.b16 %v628
      %v1063 = vunpack.c.h.b16 %v628
      %v1064 = vunpack.c.l.b16 %v629
      %v1065 = vunpack.c.h.b16 %v629
      %v1066 = vunpack.c.l.b16 %v630
      %v1067 = vunpack.c.h.b16 %v630
      %v1068 = vunpack.c.l.b16 %v631
      %v1069 = vunpack.c.h.b16 %v631
      %v1070 = vunpack.c.l.b16 %v632
      %v1071 = vunpack.c.h.b16 %v632
      %v1072 = vunpack.c.l.b16 %v633
      %v1073 = vunpack.c.h.b16 %v633
      %v1074 = vunpack.c.l.b16 %v634
      %v1075 = vunpack.c.h.b16 %v634
      %v1076 = vunpack.c.l.b16 %v635
      %v1077 = vunpack.c.h.b16 %v635
      %v1078 = vunpack.c.l.b16 %v636
      %v1079 = vunpack.c.h.b16 %v636
      %v1080 = vunpack.c.l.b16 %v637
      %v1081 = vunpack.c.h.b16 %v637
      %v1082 = vunpack.c.l.b16 %v638
      %v1083 = vunpack.c.h.b16 %v638
      %v1084 = vunpack.c.l.b16 %v639
      %v1085 = vunpack.c.h.b16 %v639
      %v1086 = vunpack.c.l.b16 %v640
      %v1087 = vunpack.c.h.b16 %v640
      %v1088 = vunpack.c.l.b16 %v641
      %v1089 = vunpack.c.h.b16 %v641
      %v1090 = vunpack.c.l.b16 %v642
      %v1091 = vunpack.c.h.b16 %v642
      %v1092 = vunpack.c.l.b16 %v643
      %v1093 = vunpack.c.h.b16 %v643
      %v1094 = vunpack.c.l.b16 %v644
      %v1095 = vunpack.c.h.b16 %v644
      %v1096 = vunpack.c.l.b16 %v645
      %v1097 = vunpack.c.h.b16 %v645
      %v1098 = vunpack.c.l.b16 %v646
      %v1099 = vunpack.c.h.b16 %v646
      %v1100 = vunpack.c.l.b16 %v647
      %v1101 = vunpack.c.h.b16 %v647
      %v1102 = vunpack.c.l.b16 %v648
      %v1103 = vunpack.c.h.b16 %v648
      %v1104 = vunpack.c.l.b16 %v649
      %v1105 = vunpack.c.h.b16 %v649
      %v1106 = vunpack.c.l.b16 %v650
      %v1107 = vunpack.c.h.b16 %v650
      %v1108 = vunpack.c.l.b16 %v651
      %v1109 = vunpack.c.h.b16 %v651
      %v1110 = vunpack.c.l.b16 %v652
      %v1111 = vunpack.c.h.b16 %v652
      %v1112 = vunpack.c.l.b16 %v653
      %v1113 = vunpack.c.h.b16 %v653
      %v1114 = vunpack.c.l.b16 %v654
      %v1115 = vunpack.c.h.b16 %v654
      %v1116 = vunpack.c.l.b16 %v655
      %v1117 = vunpack.c.h.b16 %v655
      %v1118 = vunpack.c.l.b16 %v656
      %v1119 = vunpack.c.h.b16 %v656
      %v1120 = vunpack.c.l.b16 %v657
      %v1121 = vunpack.c.h.b16 %v657
      %v1122 = vunpack.c.l.b16 %v658
      %v1123 = vunpack.c.h.b16 %v658
      %v1124 = vunpack.c.l.b16 %v659
      %v1125 = vunpack.c.h.b16 %v659
      %v1126 = vunpack.c.l.b16 %v660
      %v1127 = vunpack.c.h.b16 %v660
      %v1128 = vunpack.c.l.b16 %v661
      %v1129 = vunpack.c.h.b16 %v661
      %v1130 = vunpack.c.l.b16 %v662
      %v1131 = vunpack.c.h.b16 %v662
      %v1132 = vunpack.c.l.b16 %v663
      %v1133 = vunpack.c.h.b16 %v663
      %v1134 = vunpack.c.l.b16 %v664
      %v1135 = vunpack.c.h.b16 %v664
      %v1136 = vunpack.c.l.b16 %v665
      %v1137 = vunpack.c.h.b16 %v665
      %v1138 = vunpack.c.l.b16 %v666
      %v1139 = vunpack.c.h.b16 %v666
      %v1140 = vunpack.c.l.b16 %v667
      %v1141 = vunpack.c.h.b16 %v667
      %v1142 = vunpack.c.l.b16 %v668
      %v1143 = vunpack.c.h.b16 %v668
      %v1144 = vunpack.c.l.b16 %v669
      %v1145 = vunpack.c.h.b16 %v669
      %v1146 = vunpack.c.l.b16 %v670
      %v1147 = vunpack.c.h.b16 %v670
      %v1148 = vunpack.c.l.b16 %v671
      %v1149 = vunpack.c.h.b16 %v671
      %v1150 = vunpack.c.l.b16 %v672
      %v1151 = vunpack.c.h.b16 %v672
      %v1152 = vunpack.c.l.b16 %v673
      %v1153 = vunpack.c.h.b16 %v673
      %v1154 = vunpack.c.l.b16 %v674
      %v1155 = vunpack.c.h.b16 %v674
      %v1156 = vunpack.c.l.b16 %v675
      %v1157 = vunpack.c.h.b16 %v675
      %v1158 = vunpack.c.l.b16 %v676
      %v1159 = vunpack.c.h.b16 %v676
      %v1160 = vunpack.c.l.b16 %v677
      %v1161 = vunpack.c.h.b16 %v677
      %v1162 = vunpack.c.l.b16 %v678
      %v1163 = vunpack.c.h.b16 %v678
      %v1164 = vunpack.c.l.b16 %v679
      %v1165 = vunpack.c.h.b16 %v679
      %v1166 = vunpack.c.l.b16 %v680
      %v1167 = vunpack.c.h.b16 %v680
      %v1168 = vunpack.c.l.b16 %v681
      %v1169 = vunpack.c.h.b16 %v681
      %v1170 = vunpack.c.l.b16 %v682
      %v1171 = vunpack.c.h.b16 %v682
      %v1172 = vunpack.c.l.b16 %v683
      %v1173 = vunpack.c.h.b16 %v683
      %v1174 = vunpack.c.l.b16 %v684
      %v1175 = vunpack.c.h.b16 %v684
      %v1176 = vunpack.c.l.b16 %v685
      %v1177 = vunpack.c.h.b16 %v685
      %v1178 = vpack.c.b16 %v956, %v954
      %v1179 = vpack.c.b16 %v957, %v955
      %v1180 = vpack.c.b16 %v960, %v958
      %v1181 = vpack.c.b16 %v961, %v959
      %v1182 = vpack.c.b16 %v964, %v962
      %v1183 = vpack.c.b16 %v965, %v963
      %v1184 = vpack.c.b16 %v968, %v966
      %v1185 = vpack.c.b16 %v969, %v967
      %v1186 = vpack.c.b16 %v972, %v970
      %v1187 = vpack.c.b16 %v973, %v971
      %v1188 = vpack.c.b16 %v976, %v974
      %v1189 = vpack.c.b16 %v977, %v975
      %v1190 = vpack.c.b16 %v980, %v978
      %v1191 = vpack.c.b16 %v981, %v979
      %v1192 = vpack.c.b16 %v984, %v982
      %v1193 = vpack.c.b16 %v985, %v983
      %v1194 = vpack.c.b16 %v988, %v986
      %v1195 = vpack.c.b16 %v989, %v987
      %v1196 = vpack.c.b16 %v992, %v990
      %v1197 = vpack.c.b16 %v993, %v991
      %v1198 = vpack.c.b16 %v996, %v994
      %v1199 = vpack.c.b16 %v997, %v995
      %v1200 = vpack.c.b16 %v1000, %v998
      %v1201 = vpack.c.b16 %v1001, %v999
      %v1202 = vpack.c.b16 %v1004, %v1002
      %v1203 = vpack.c.b16 %v1005, %v1003
      %v1204 = vpack.c.b16 %v1008, %v1006
      %v1205 = vpack.c.b16 %v1009, %v1007
      %v1206 = vpack.c.b16 %v1012, %v1010
      %v1207 = vpack.c.b16 %v1013, %v1011
      %v1208 = vpack.c.b16 %v1016, %v1014
      %v1209 = vpack.c.b16 %v1017, %v1015
      %v1210 = vpack.c.b16 %v1020, %v1018
      %v1211 = vpack.c.b16 %v1021, %v1019
      %v1212 = vpack.c.b16 %v1024, %v1022
      %v1213 = vpack.c.b16 %v1025, %v1023
      %v1214 = vpack.c.b16 %v1028, %v1026
      %v1215 = vpack.c.b16 %v1029, %v1027
      %v1216 = vpack.c.b16 %v1032, %v1030
      %v1217 = vpack.c.b16 %v1033, %v1031
      %v1218 = vpack.c.b16 %v1036, %v1034
      %v1219 = vpack.c.b16 %v1037, %v1035
      %v1220 = vpack.c.b16 %v1040, %v1038
      %v1221 = vpack.c.b16 %v1041, %v1039
      %v1222 = vpack.c.b16 %v1044, %v1042
      %v1223 = vpack.c.b16 %v1045, %v1043
      %v1224 = vpack.c.b16 %v1048, %v1046
      %v1225 = vpack.c.b16 %v1049, %v1047
      %v1226 = vpack.c.b16 %v1052, %v1050
      %v1227 = vpack.c.b16 %v1053, %v1051
      %v1228 = vpack.c.b16 %v1056, %v1054
      %v1229 = vpack.c.b16 %v1057, %v1055
      %v1230 = vpack.c.b16 %v1060, %v1058
      %v1231 = vpack.c.b16 %v1061, %v1059
      %v1232 = vpack.c.b16 %v1064, %v1062
      %v1233 = vpack.c.b16 %v1065, %v1063
      %v1234 = vpack.c.b16 %v1068, %v1066
      %v1235 = vpack.c.b16 %v1069, %v1067
      %v1236 = vpack.c.b16 %v1072, %v1070
      %v1237 = vpack.c.b16 %v1073, %v1071
      %v1238 = vpack.c.b16 %v1076, %v1074
      %v1239 = vpack.c.b16 %v1077, %v1075
      %v1240 = vpack.c.b16 %v1080, %v1078
      %v1241 = vpack.c.b16 %v1081, %v1079
      %v1242 = vpack.c.b16 %v1084, %v1082
      %v1243 = vpack.c.b16 %v1085, %v1083
      %v1244 = vpack.c.b16 %v1088, %v1086
      %v1245 = vpack.c.b16 %v1089, %v1087
      %v1246 = vpack.c.b16 %v1092, %v1090
      %v1247 = vpack.c.b16 %v1093, %v1091
      %v1248 = vpack.c.b16 %v1096, %v1094
      %v1249 = vpack.c.b16 %v1097, %v1095
      %v1250 = vpack.c.b16 %v1100, %v1098
      %v1251 = vpack.c.b16 %v1101, %v1099
      %v1252 = vpack.c.b16 %v1104, %v1102
      %v1253 = vpack.c.b16 %v1105, %v1103
      %v1254 = vpack.c.b16 %v1108, %v1106
      %v1255 = vpack.c.b16 %v1109, %v1107
      %v1256 = vpack.c.b16 %v1112, %v1110
      %v1257 = vpack.c.b16 %v1113, %v1111
      %v1258 = vpack.c.b16 %v1116, %v1114
      %v1259 = vpack.c.b16 %v1117, %v1115
      %v1260 = vpack.c.b16 %v1120, %v1118
      %v1261 = vpack.c.b16 %v1121, %v1119
      %v1262 = vpack.c.b16 %v1124, %v1122
      %v1263 = vpack.c.b16 %v1125, %v1123
      %v1264 = vpack.c.b16 %v1128, %v1126
      %v1265 = vpack.c.b16 %v1129, %v1127
      %v1266 = vpack.c.b16 %v1132, %v1130
      %v1267 = vpack.c.b16 %v1133, %v1131
      %v1268 = vpack.c.b16 %v1136, %v1134
      %v1269 = vpack.c.b16 %v1137, %v1135
      %v1270 = vpack.c.b16 %v1140, %v1138
      %v1271 = vpack.c.b16 %v1141, %v1139
      %v1272 = vpack.c.b16 %v1144, %v1142
      %v1273 = vpack.c.b16 %v1145, %v1143
      %v1274 = vpack.c.b16 %v1148, %v1146
      %v1275 = vpack.c.b16 %v1149, %v1147
      %v1276 = vpack.c.b16 %v1152, %v1150
      %v1277 = vpack.c.b16 %v1153, %v1151
      %v1278 = vpack.c.b16 %v1156, %v1154
      %v1279 = vpack.c.b16 %v1157, %v1155
      %v1280 = vpack.c.b16 %v1160, %v1158
      %v1281 = vpack.c.b16 %v1161, %v1159
      %v1282 = vpack.c.b16 %v1164, %v1162
      %v1283 = vpack.c.b16 %v1165, %v1163
      %v1284 = vpack.c.b16 %v1168, %v1166
      %v1285 = vpack.c.b16 %v1169, %v1167
      %v1286 = vpack.c.b16 %v1172, %v1170
      %v1287 = vpack.c.b16 %v1173, %v1171
      %v1288 = vpack.c.b16 %v1176, %v1174
      %v1289 = vpack.c.b16 %v1177, %v1175
      %1402 = vmatprep.subr.bf16.mxu0 %v1179
      %1403 = vmatpush1.bf16.msra.mxu0 %v1178
      %1404 = vmatprep.subr.bf16.mxu0 %v1181
      %1405 = vmatpush1.bf16.msra.mxu0 %v1180
      %1406 = vmatprep.subr.bf16.mxu0 %v1183
      %1407 = vmatpush1.bf16.msra.mxu0 %v1182
      %1408 = vmatprep.subr.bf16.mxu0 %v1185
      %1409 = vmatpush1.bf16.msra.mxu0 %v1184
      %1410 = vmatprep.subr.bf16.mxu0 %v1187
      %1411 = vmatpush1.bf16.msra.mxu0 %v1186
      %1412 = vmatprep.subr.bf16.mxu0 %v1189
      %1413 = vmatpush1.bf16.msra.mxu0 %v1188
      %1414 = vmatprep.subr.bf16.mxu0 %v1191
      %1415 = vmatpush1.bf16.msra.mxu0 %v1190
      %1416 = vmatprep.subr.bf16.mxu0 %v1193
      %1417 = vmatpush1.bf16.msra.mxu0 %v1192
      %1418 = vmatprep.subr.bf16.mxu0 %v1195
      %1419 = vmatpush1.bf16.msra.mxu0 %v1194
      %1420 = vmatprep.subr.bf16.mxu0 %v1197
      %1421 = vmatpush1.bf16.msra.mxu0 %v1196
      %1422 = vmatprep.subr.bf16.mxu0 %v1199
      %1423 = vmatpush1.bf16.msra.mxu0 %v1198
      %1424 = vmatprep.subr.bf16.mxu0 %v1201
      %1425 = vmatpush1.bf16.msra.mxu0 %v1200
      %1426 = vmatprep.subr.bf16.mxu0 %v1203
      %1427 = vmatpush1.bf16.msra.mxu0 %v1202
      %1428 = vmatprep.subr.bf16.mxu0 %v1205
      %1429 = vmatpush1.bf16.msra.mxu0 %v1204
      %1430 = vmatprep.subr.bf16.mxu0 %v1207
      %1431 = vmatpush1.bf16.msra.mxu0 %v1206
      %1432 = vmatprep.subr.bf16.mxu0 %v1209
      %1433 = vmatpush1.bf16.msra.mxu0 %v1208
      %1434 = vmatprep.mubr.bf16.mxu0 %v787
      %1435 = vmatmul.mubr.bf16.gmra.mrb[0].mxu0 %v786
      %v1436 = vpop.f32.mrb[0].mxu0
      %v1437 = vadd.f32 %v691, %v1436
      %v1438 = vpop.f32.mrb[0].mxu0
      %v1439 = vadd.f32 %v695, %v1438
      %v1440 = vpop.f32.mrb[0].mxu0
      %v1441 = vadd.f32 %v691, %v1440
      %v1442 = vpop.f32.mrb[0].mxu0
      %v1443 = vadd.f32 %v695, %v1442
      %1444 = vmatprep.mubr.bf16.mxu0 %v794
      %1445 = vmatmul.mubr.bf16.gmra.mrb[0].mxu0 %v793
      %v1446 = vpop.f32.mrb[0].mxu0
      %v1447 = vadd.f32 %v691, %v1446
      %v1448 = vpop.f32.mrb[0].mxu0
      %v1449 = vadd.f32 %v695, %v1448
      %v1450 = vpop.f32.mrb[0].mxu0
      %v1451 = vadd.f32 %v691, %v1450
      %v1452 = vpop.f32.mrb[0].mxu0
      %v1453 = vadd.f32 %v695, %v1452
      %1454 = vmatprep.mubr.bf16.mxu0 %v801
      %1455 = vmatmul.mubr.bf16.gmra.mrb[0].mxu0 %v800
      %v1456 = vpop.f32.mrb[0].mxu0
      %v1457 = vadd.f32 %v691, %v1456
      %v1458 = vpop.f32.mrb[0].mxu0
      %v1459 = vadd.f32 %v695, %v1458
      %v1460 = vpop.f32.mrb[0].mxu0
      %v1461 = vadd.f32 %v691, %v1460
      %v1462 = vpop.f32.mrb[0].mxu0
      %v1463 = vadd.f32 %v695, %v1462
      %1464 = vmatprep.mubr.bf16.mxu0 %v808
      %1465 = vmatmul.mubr.bf16.gmra.mrb[0].mxu0 %v807
      %v1466 = vpop.f32.mrb[0].mxu0
      %v1467 = vadd.f32 %v691, %v1466
      %v1468 = vpop.f32.mrb[0].mxu0
      %v1469 = vadd.f32 %v695, %v1468
      %v1470 = vpop.f32.mrb[0].mxu0
      %v1471 = vadd.f32 %v691, %v1470
      %v1472 = vpop.f32.mrb[0].mxu0
      %v1473 = vadd.f32 %v695, %v1472
      %1474 = vdwg.mxu0
      %1475 = vmatprep.subr.bf16.mxu0 %v1211
      %1476 = vmatpush1.bf16.msra.mxu0 %v1210
      %1477 = vmatprep.subr.bf16.mxu0 %v1213
      %1478 = vmatpush1.bf16.msra.mxu0 %v1212
      %1479 = vmatprep.subr.bf16.mxu0 %v1215
      %1480 = vmatpush1.bf16.msra.mxu0 %v1214
      %1481 = vmatprep.subr.bf16.mxu0 %v1217
      %1482 = vmatpush1.bf16.msra.mxu0 %v1216
      %1483 = vmatprep.subr.bf16.mxu0 %v1219
      %1484 = vmatpush1.bf16.msra.mxu0 %v1218
      %1485 = vmatprep.subr.bf16.mxu0 %v1221
      %1486 = vmatpush1.bf16.msra.mxu0 %v1220
      %1487 = vmatprep.subr.bf16.mxu0 %v1223
      %1488 = vmatpush1.bf16.msra.mxu0 %v1222
      %1489 = vmatprep.subr.bf16.mxu0 %v1225
      %1490 = vmatpush1.bf16.msra.mxu0 %v1224
      %1491 = vmatprep.subr.bf16.mxu0 %v1227
      %1492 = vmatpush1.bf16.msra.mxu0 %v1226
      %1493 = vmatprep.subr.bf16.mxu0 %v1229
      %1494 = vmatpush1.bf16.msra.mxu0 %v1228
      %1495 = vmatprep.subr.bf16.mxu0 %v1231
      %1496 = vmatpush1.bf16.msra.mxu0 %v1230
      %1497 = vmatprep.subr.bf16.mxu0 %v1233
      %1498 = vmatpush1.bf16.msra.mxu0 %v1232
      %1499 = vmatprep.subr.bf16.mxu0 %v1235
      %1500 = vmatpush1.bf16.msra.mxu0 %v1234
      %1501 = vmatprep.subr.bf16.mxu0 %v1237
      %1502 = vmatpush1.bf16.msra.mxu0 %v1236
      %1503 = vmatprep.subr.bf16.mxu0 %v1239
      %1504 = vmatpush1.bf16.msra.mxu0 %v1238
      %1505 = vmatprep.subr.bf16.mxu0 %v1241
      %1506 = vmatpush1.bf16.msra.mxu0 %v1240
      %1507 = vmatprep.mubr.bf16.mxu0 %v789
      %1508 = vmatmul.mubr.bf16.gmra.mrb[0].mxu0 %v788
      %v1509 = vpop.f32.mrb[0].mxu0
      %v1510 = vadd.f32 %v1437, %v1509
      %v1511 = vpop.f32.mrb[0].mxu0
      %v1512 = vadd.f32 %v1439, %v1511
      %v1513 = vpop.f32.mrb[0].mxu0
      %v1514 = vadd.f32 %v1441, %v1513
      %v1515 = vpop.f32.mrb[0].mxu0
      %v1516 = vadd.f32 %v1443, %v1515
      %1517 = vmatprep.mubr.bf16.mxu0 %v796
      %1518 = vmatmul.mubr.bf16.gmra.mrb[0].mxu0 %v795
      %v1519 = vpop.f32.mrb[0].mxu0
      %v1520 = vadd.f32 %v1447, %v1519
      %v1521 = vpop.f32.mrb[0].mxu0
      %v1522 = vadd.f32 %v1449, %v1521
      %v1523 = vpop.f32.mrb[0].mxu0
      %v1524 = vadd.f32 %v1451, %v1523
      %v1525 = vpop.f32.mrb[0].mxu0
      %v1526 = vadd.f32 %v1453, %v1525
      %1527 = vmatprep.mubr.bf16.mxu0 %v803
      %1528 = vmatmul.mubr.bf16.gmra.mrb[0].mxu0 %v802
      %v1529 = vpop.f32.mrb[0].mxu0
      %v1530 = vadd.f32 %v1457, %v1529
      %v1531 = vpop.f32.mrb[0].mxu0
      %v1532 = vadd.f32 %v1459, %v1531
      %v1533 = vpop.f32.mrb[0].mxu0
      %v1534 = vadd.f32 %v1461, %v1533
      %v1535 = vpop.f32.mrb[0].mxu0
      %v1536 = vadd.f32 %v1463, %v1535
      %1537 = vmatprep.mubr.bf16.mxu0 %v810
      %1538 = vmatmul.mubr.bf16.gmra.mrb[0].mxu0 %v809
      %v1539 = vpop.f32.mrb[0].mxu0
      %v1540 = vadd.f32 %v1467, %v1539
      %v1541 = vpop.f32.mrb[0].mxu0
      %v1542 = vadd.f32 %v1469, %v1541
      %v1543 = vpop.f32.mrb[0].mxu0
      %v1544 = vadd.f32 %v1471, %v1543
      %v1545 = vpop.f32.mrb[0].mxu0
      %v1546 = vadd.f32 %v1473, %v1545
      %1547 = vdwg.mxu0
      %1548 = vmatprep.subr.bf16.mxu0 %v1243
      %1549 = vmatpush1.bf16.msra.mxu0 %v1242
      %1550 = vmatprep.subr.bf16.mxu0 %v1245
      %1551 = vmatpush1.bf16.msra.mxu0 %v1244
      %1552 = vmatprep.subr.bf16.mxu0 %v1247
      %1553 = vmatpush1.bf16.msra.mxu0 %v1246
      %1554 = vmatprep.subr.bf16.mxu0 %v1249
      %1555 = vmatpush1.bf16.msra.mxu0 %v1248
      %1556 = vmatprep.subr.bf16.mxu0 %v1251
      %1557 = vmatpush1.bf16.msra.mxu0 %v1250
      %1558 = vmatprep.subr.bf16.mxu0 %v1253
      %1559 = vmatpush1.bf16.msra.mxu0 %v1252
      %1560 = vmatprep.subr.bf16.mxu0 %v1255
      %1561 = vmatpush1.bf16.msra.mxu0 %v1254
      %1562 = vmatprep.subr.bf16.mxu0 %v1257
      %1563 = vmatpush1.bf16.msra.mxu0 %v1256
      %1564 = vmatprep.subr.bf16.mxu0 %v1259
      %1565 = vmatpush1.bf16.msra.mxu0 %v1258
      %1566 = vmatprep.subr.bf16.mxu0 %v1261
      %1567 = vmatpush1.bf16.msra.mxu0 %v1260
      %1568 = vmatprep.subr.bf16.mxu0 %v1263
      %1569 = vmatpush1.bf16.msra.mxu0 %v1262
      %1570 = vmatprep.subr.bf16.mxu0 %v1265
      %1571 = vmatpush1.bf16.msra.mxu0 %v1264
      %1572 = vmatprep.subr.bf16.mxu0 %v1267
      %1573 = vmatpush1.bf16.msra.mxu0 %v1266
      %1574 = vmatprep.subr.bf16.mxu0 %v1269
      %1575 = vmatpush1.bf16.msra.mxu0 %v1268
      %1576 = vmatprep.subr.bf16.mxu0 %v1271
      %1577 = vmatpush1.bf16.msra.mxu0 %v1270
      %1578 = vmatprep.subr.bf16.mxu0 %v1273
      %1579 = vmatpush1.bf16.msra.mxu0 %v1272
      %1580 = vmatprep.mubr.bf16.mxu0 %v791
      %1581 = vmatmul.mubr.bf16.gmra.mrb[0].mxu0 %v790
      %v1582 = vpop.f32.mrb[0].mxu0
      %v1583 = vadd.f32 %v1510, %v1582
      %v1584 = vpop.f32.mrb[0].mxu0
      %v1585 = vadd.f32 %v1512, %v1584
      %v1586 = vpop.f32.mrb[0].mxu0
      %v1587 = vadd.f32 %v1514, %v1586
      %v1588 = vpop.f32.mrb[0].mxu0
      %v1589 = vadd.f32 %v1516, %v1588
      %1590 = vmatprep.mubr.bf16.mxu0 %v798
      %1591 = vmatmul.mubr.bf16.gmra.mrb[0].mxu0 %v797
      %v1592 = vpop.f32.mrb[0].mxu0
      %v1593 = vadd.f32 %v1520, %v1592
      %v1594 = vpop.f32.mrb[0].mxu0
      %v1595 = vadd.f32 %v1522, %v1594
      %v1596 = vpop.f32.mrb[0].mxu0
      %v1597 = vadd.f32 %v1524, %v1596
      %v1598 = vpop.f32.mrb[0].mxu0
      %v1599 = vadd.f32 %v1526, %v1598
      %1600 = vmatprep.mubr.bf16.mxu0 %v805
      %1601 = vmatmul.mubr.bf16.gmra.mrb[0].mxu0 %v804
      %v1602 = vpop.f32.mrb[0].mxu0
      %v1603 = vadd.f32 %v1530, %v1602
      %v1604 = vpop.f32.mrb[0].mxu0
      %v1605 = vadd.f32 %v1532, %v1604
      %v1606 = vpop.f32.mrb[0].mxu0
      %v1607 = vadd.f32 %v1534, %v1606
      %v1608 = vpop.f32.mrb[0].mxu0
      %v1609 = vadd.f32 %v1536, %v1608
      %1610 = vmatprep.mubr.bf16.mxu0 %v812
      %1611 = vmatmul.mubr.bf16.gmra.mrb[0].mxu0 %v811
      %v1612 = vpop.f32.mrb[0].mxu0
      %v1613 = vadd.f32 %v1540, %v1612
      %v1614 = vpop.f32.mrb[0].mxu0
      %v1615 = vadd.f32 %v1542, %v1614
      %v1616 = vpop.f32.mrb[0].mxu0
      %v1617 = vadd.f32 %v1544, %v1616
      %v1618 = vpop.f32.mrb[0].mxu0
      %v1619 = vadd.f32 %v1546, %v1618
      %1620 = vdwg.mxu0
      %1621 = vmatprep.subr.bf16.mxu0 %v1275
      %1622 = vmatpush1.bf16.msra.mxu0 %v1274
      %1623 = vmatprep.subr.bf16.mxu0 %v1277
      %1624 = vmatpush1.bf16.msra.mxu0 %v1276
      %1625 = vmatprep.subr.bf16.mxu0 %v1279
      %1626 = vmatpush1.bf16.msra.mxu0 %v1278
      %1627 = vmatprep.subr.bf16.mxu0 %v1281
      %1628 = vmatpush1.bf16.msra.mxu0 %v1280
      %1629 = vmatprep.subr.bf16.mxu0 %v1283
      %1630 = vmatpush1.bf16.msra.mxu0 %v1282
      %1631 = vmatprep.subr.bf16.mxu0 %v1285
      %1632 = vmatpush1.bf16.msra.mxu0 %v1284
      %1633 = vmatprep.subr.bf16.mxu0 %v1287
      %1634 = vmatpush1.bf16.msra.mxu0 %v1286
      %1635 = vmatprep.subr.bf16.mxu0 %v1289
      %1636 = vmatpush1.bf16.msra.mxu0 %v1288
      %1637 = vmatprep.subr.bf16.mxu0 0
      %1638 = vmatpush1.bf16.msra.mxu0 0
      %1639 = vmatprep.subr.bf16.mxu0 0
      %1640 = vmatpush1.bf16.msra.mxu0 0
      %1641 = vmatprep.subr.bf16.mxu0 0
      %1642 = vmatpush1.bf16.msra.mxu0 0
      %1643 = vmatprep.subr.bf16.mxu0 0
      %1644 = vmatpush1.bf16.msra.mxu0 0
      %1645 = vmatprep.subr.bf16.mxu0 0
      %1646 = vmatpush1.bf16.msra.mxu0 0
      %1647 = vmatprep.subr.bf16.mxu0 0
      %1648 = vmatpush1.bf16.msra.mxu0 0
      %1649 = vmatprep.subr.bf16.mxu0 0
      %1650 = vmatpush1.bf16.msra.mxu0 0
      %1651 = vmatprep.subr.bf16.mxu0 0
      %1652 = vmatpush1.bf16.msra.mxu0 0
      %1653 = vmatprep.mubr.bf16.mxu0 0
      %1654 = vmatmul.mubr.bf16.gmra.mrb[0].mxu0 %v792
      %v1655 = vpop.f32.mrb[0].mxu0
      %v1656 = vadd.f32 %v1583, %v1655
      %v1657 = vpop.f32.mrb[0].mxu0
      %v1658 = vadd.f32 %v1585, %v1657
      %v1659 = vpop.f32.mrb[0].mxu0
      %v1660 = vadd.f32 %v1587, %v1659
      %v1661 = vpop.f32.mrb[0].mxu0
      %v1662 = vadd.f32 %v1589, %v1661
      %1663 = vmatprep.mubr.bf16.mxu0 0
      %1664 = vmatmul.mubr.bf16.gmra.mrb[0].mxu0 %v799
      %v1665 = vpop.f32.mrb[0].mxu0
      %v1666 = vadd.f32 %v1593, %v1665
      %v1667 = vpop.f32.mrb[0].mxu0
      %v1668 = vadd.f32 %v1595, %v1667
      %v1669 = vpop.f32.mrb[0].mxu0
      %v1670 = vadd.f32 %v1597, %v1669
      %v1671 = vpop.f32.mrb[0].mxu0
      %v1672 = vadd.f32 %v1599, %v1671
      %1673 = vmatprep.mubr.bf16.mxu0 0
      %1674 = vmatmul.mubr.bf16.gmra.mrb[0].mxu0 %v806
      %v1675 = vpop.f32.mrb[0].mxu0
      %v1676 = vadd.f32 %v1603, %v1675
      %v1677 = vpop.f32.mrb[0].mxu0
      %v1678 = vadd.f32 %v1605, %v1677
      %v1679 = vpop.f32.mrb[0].mxu0
      %v1680 = vadd.f32 %v1607, %v1679
      %v1681 = vpop.f32.mrb[0].mxu0
      %v1682 = vadd.f32 %v1609, %v1681
      %1683 = vmatprep.mubr.bf16.mxu0 0
      %1684 = vmatmul.mubr.bf16.gmra.mrb[0].mxu0 %v813
      %v1685 = vpop.f32.mrb[0].mxu0
      %v1686 = vadd.f32 %v1613, %v1685
      %v1687 = vpop.f32.mrb[0].mxu0
      %v1688 = vadd.f32 %v1615, %v1687
      %v1689 = vpop.f32.mrb[0].mxu0
      %v1690 = vadd.f32 %v1617, %v1689
      %v1691 = vpop.f32.mrb[0].mxu0
      %v1692 = vadd.f32 %v1619, %v1691
      %1693 = vdwg.mxu0
      %v1694 = vmax.f32 %v1656, 0.0
      %v1695 = vmax.f32 %v1658, 0.0
      %v1696 = vmax.f32 %v1660, 0.0
      %v1697 = vmax.f32 %v1662, 0.0
      %v1698 = vmax.f32 %v1666, 0.0
      %v1699 = vmax.f32 %v1668, 0.0
      %v1700 = vmax.f32 %v1670, 0.0
      %v1701 = vmax.f32 %v1672, 0.0
      %v1702 = vmax.f32 %v1676, 0.0
      %v1703 = vmax.f32 %v1678, 0.0
      %v1704 = vmax.f32 %v1680, 0.0
      %v1705 = vmax.f32 %v1682, 0.0
      %v1706 = vmax.f32 %v1686, 0.0
      %v1707 = vmax.f32 %v1688, 0.0
      %v1708 = vmax.f32 %v1690, 0.0
      %v1709 = vmax.f32 %v1692, 0.0
      %v1710 = vpack.c.bf16 %v1696, %v1694
      %v1711 = vpack.c.bf16 %v1697, %v1695
      %v1712 = vpack.c.bf16 %v1700, %v1698
      %v1713 = vpack.c.bf16 %v1701, %v1699
      %v1714 = vpack.c.bf16 %v1704, %v1702
      %v1715 = vpack.c.bf16 %v1705, %v1703
      %v1716 = vpack.c.bf16 %v1708, %v1706
      %v1717 = vpack.c.bf16 %v1709, %v1707
      %v1718 = vld [vmem:[%s4] sm:$0xff]
      %v1719 = vld [vmem:[%s4 + $0x8] sm:$0xff]
      %v1720 = vld [vmem:[%s4 + $0x10] sm:$0xff]
      %v1721 = vld [vmem:[%s4 + $0x18] sm:$0xff]
      %v1722 = vld [vmem:[%s4 + $0x20] sm:$0xff]
      %v1723 = vld [vmem:[%s4 + $0x28] sm:$0xff]
      %v1724 = vld [vmem:[%s4 + $0x30] sm:$0xff]
      %v1725 = vld [vmem:[%s4 + $0x38] sm:$0xff]
      %v1726 = vld [vmem:[%s4 + $0x40] sm:$0xff]
      %v1727 = vld [vmem:[%s4 + $0x48] sm:$0xff]
      %v1728 = vld [vmem:[%s4 + $0x50] sm:$0xff]
      %v1729 = vld [vmem:[%s4 + $0x58] sm:$0xff]
      %v1730 = vld [vmem:[%s4 + $0x60] sm:$0xff]
      %v1731 = vld [vmem:[%s4 + $0x68] sm:$0xff]
      %v1732 = vld [vmem:[%s4 + $0x70] sm:$0xff]
      %v1733 = vld [vmem:[%s4 + $0x78] sm:$0xff]
      %v1734 = vld [vmem:[%s4 + $0x80] sm:$0xff]
      %v1735 = vld [vmem:[%s4 + $0x88] sm:$0xff]
      %v1736 = vld [vmem:[%s4 + $0x90] sm:$0xff]
      %v1737 = vld [vmem:[%s4 + $0x98] sm:$0xff]
      %v1738 = vld [vmem:[%s4 + $0xa0] sm:$0xff]
      %v1739 = vld [vmem:[%s4 + $0xa8] sm:$0xff]
      %v1740 = vld [vmem:[%s4 + $0xb0] sm:$0xff]
      %v1741 = vld [vmem:[%s4 + $0xb8] sm:$0xff]
      %v1742 = vld [vmem:[%s4 + $0xc0] sm:$0xff]
      %v1743 = vld [vmem:[%s4 + $0xc8] sm:$0xff]
      %v1744 = vld [vmem:[%s4 + $0xd0] sm:$0xff]
      %v1745 = vld [vmem:[%s4 + $0xd8] sm:$0xff]
      %v1746 = vld [vmem:[%s4 + $0xe0] sm:$0xff]
      %v1747 = vld [vmem:[%s4 + $0xe8] sm:$0xff]
      %v1748 = vld [vmem:[%s4 + $0xf0] sm:$0xff]
      %v1749 = vld [vmem:[%s4 + $0xf8] sm:$0xff]
      %v1750 = vld [vmem:[%s5] sm:$0x3]
      %v1752 = vlaneseq
      %v1753 = vshrl.u32 %v1752, 7
      %v1754 = vsub.s32 0, %v1753
      %v1755 = vrot.slane %v1750, %v1754
      %v1756 = vlaneseq
      %v1757 = vshrl.u32 %v1756, 7
      %v1758 = vsub.s32 1, %v1757
      %v1759 = vrot.slane %v1750, %v1758
      %v1794 = vunpack.c.l.b16 %v1718
      %v1795 = vunpack.c.h.b16 %v1718
      %v1796 = vunpack.c.l.b16 %v1719
      %v1797 = vunpack.c.h.b16 %v1719
      %v1798 = vunpack.c.l.b16 %v1720
      %v1799 = vunpack.c.h.b16 %v1720
      %v1800 = vunpack.c.l.b16 %v1721
      %v1801 = vunpack.c.h.b16 %v1721
      %v1802 = vunpack.c.l.b16 %v1722
      %v1803 = vunpack.c.h.b16 %v1722
      %v1804 = vunpack.c.l.b16 %v1723
      %v1805 = vunpack.c.h.b16 %v1723
      %v1806 = vunpack.c.l.b16 %v1724
      %v1807 = vunpack.c.h.b16 %v1724
      %v1808 = vunpack.c.l.b16 %v1725
      %v1809 = vunpack.c.h.b16 %v1725
      %v1810 = vunpack.c.l.b16 %v1726
      %v1811 = vunpack.c.h.b16 %v1726
      %v1812 = vunpack.c.l.b16 %v1727
      %v1813 = vunpack.c.h.b16 %v1727
      %v1814 = vunpack.c.l.b16 %v1728
      %v1815 = vunpack.c.h.b16 %v1728
      %v1816 = vunpack.c.l.b16 %v1729
      %v1817 = vunpack.c.h.b16 %v1729
      %v1818 = vunpack.c.l.b16 %v1730
      %v1819 = vunpack.c.h.b16 %v1730
      %v1820 = vunpack.c.l.b16 %v1731
      %v1821 = vunpack.c.h.b16 %v1731
      %v1822 = vunpack.c.l.b16 %v1732
      %v1823 = vunpack.c.h.b16 %v1732
      %v1824 = vunpack.c.l.b16 %v1733
      %v1825 = vunpack.c.h.b16 %v1733
      %v1826 = vunpack.c.l.b16 %v1734
      %v1827 = vunpack.c.h.b16 %v1734
      %v1828 = vunpack.c.l.b16 %v1735
      %v1829 = vunpack.c.h.b16 %v1735
      %v1830 = vunpack.c.l.b16 %v1736
      %v1831 = vunpack.c.h.b16 %v1736
      %v1832 = vunpack.c.l.b16 %v1737
      %v1833 = vunpack.c.h.b16 %v1737
      %v1834 = vunpack.c.l.b16 %v1738
      %v1835 = vunpack.c.h.b16 %v1738
      %v1836 = vunpack.c.l.b16 %v1739
      %v1837 = vunpack.c.h.b16 %v1739
      %v1838 = vunpack.c.l.b16 %v1740
      %v1839 = vunpack.c.h.b16 %v1740
      %v1840 = vunpack.c.l.b16 %v1741
      %v1841 = vunpack.c.h.b16 %v1741
      %v1842 = vunpack.c.l.b16 %v1742
      %v1843 = vunpack.c.h.b16 %v1742
      %v1844 = vunpack.c.l.b16 %v1743
      %v1845 = vunpack.c.h.b16 %v1743
      %v1846 = vunpack.c.l.b16 %v1744
      %v1847 = vunpack.c.h.b16 %v1744
      %v1848 = vunpack.c.l.b16 %v1745
      %v1849 = vunpack.c.h.b16 %v1745
      %v1850 = vunpack.c.l.b16 %v1746
      %v1851 = vunpack.c.h.b16 %v1746
      %v1852 = vunpack.c.l.b16 %v1747
      %v1853 = vunpack.c.h.b16 %v1747
      %v1854 = vunpack.c.l.b16 %v1748
      %v1855 = vunpack.c.h.b16 %v1748
      %v1856 = vunpack.c.l.b16 %v1749
      %v1857 = vunpack.c.h.b16 %v1749
      %v1858 = vpack.c.b16 %v1796, %v1794
      %v1859 = vpack.c.b16 %v1797, %v1795
      %v1860 = vpack.c.b16 %v1800, %v1798
      %v1861 = vpack.c.b16 %v1801, %v1799
      %v1862 = vpack.c.b16 %v1804, %v1802
      %v1863 = vpack.c.b16 %v1805, %v1803
      %v1864 = vpack.c.b16 %v1808, %v1806
      %v1865 = vpack.c.b16 %v1809, %v1807
      %v1866 = vpack.c.b16 %v1812, %v1810
      %v1867 = vpack.c.b16 %v1813, %v1811
      %v1868 = vpack.c.b16 %v1816, %v1814
      %v1869 = vpack.c.b16 %v1817, %v1815
      %v1870 = vpack.c.b16 %v1820, %v1818
      %v1871 = vpack.c.b16 %v1821, %v1819
      %v1872 = vpack.c.b16 %v1824, %v1822
      %v1873 = vpack.c.b16 %v1825, %v1823
      %v1874 = vpack.c.b16 %v1828, %v1826
      %v1875 = vpack.c.b16 %v1829, %v1827
      %v1876 = vpack.c.b16 %v1832, %v1830
      %v1877 = vpack.c.b16 %v1833, %v1831
      %v1878 = vpack.c.b16 %v1836, %v1834
      %v1879 = vpack.c.b16 %v1837, %v1835
      %v1880 = vpack.c.b16 %v1840, %v1838
      %v1881 = vpack.c.b16 %v1841, %v1839
      %v1882 = vpack.c.b16 %v1844, %v1842
      %v1883 = vpack.c.b16 %v1845, %v1843
      %v1884 = vpack.c.b16 %v1848, %v1846
      %v1885 = vpack.c.b16 %v1849, %v1847
      %v1886 = vpack.c.b16 %v1852, %v1850
      %v1887 = vpack.c.b16 %v1853, %v1851
      %v1888 = vpack.c.b16 %v1856, %v1854
      %v1889 = vpack.c.b16 %v1857, %v1855
      %1922 = vmatprep.subr.bf16.mxu0 %v1859
      %1923 = vmatpush1.bf16.msra.mxu0 %v1858
      %1924 = vmatprep.subr.bf16.mxu0 %v1861
      %1925 = vmatpush1.bf16.msra.mxu0 %v1860
      %1926 = vmatprep.subr.bf16.mxu0 %v1863
      %1927 = vmatpush1.bf16.msra.mxu0 %v1862
      %1928 = vmatprep.subr.bf16.mxu0 %v1865
      %1929 = vmatpush1.bf16.msra.mxu0 %v1864
      %1930 = vmatprep.subr.bf16.mxu0 %v1867
      %1931 = vmatpush1.bf16.msra.mxu0 %v1866
      %1932 = vmatprep.subr.bf16.mxu0 %v1869
      %1933 = vmatpush1.bf16.msra.mxu0 %v1868
      %1934 = vmatprep.subr.bf16.mxu0 %v1871
      %1935 = vmatpush1.bf16.msra.mxu0 %v1870
      %1936 = vmatprep.subr.bf16.mxu0 %v1873
      %1937 = vmatpush1.bf16.msra.mxu0 %v1872
      %1938 = vmatprep.subr.bf16.mxu0 %v1875
      %1939 = vmatpush1.bf16.msra.mxu0 %v1874
      %1940 = vmatprep.subr.bf16.mxu0 %v1877
      %1941 = vmatpush1.bf16.msra.mxu0 %v1876
      %1942 = vmatprep.subr.bf16.mxu0 %v1879
      %1943 = vmatpush1.bf16.msra.mxu0 %v1878
      %1944 = vmatprep.subr.bf16.mxu0 %v1881
      %1945 = vmatpush1.bf16.msra.mxu0 %v1880
      %1946 = vmatprep.subr.bf16.mxu0 %v1883
      %1947 = vmatpush1.bf16.msra.mxu0 %v1882
      %1948 = vmatprep.subr.bf16.mxu0 %v1885
      %1949 = vmatpush1.bf16.msra.mxu0 %v1884
      %1950 = vmatprep.subr.bf16.mxu0 %v1887
      %1951 = vmatpush1.bf16.msra.mxu0 %v1886
      %1952 = vmatprep.subr.bf16.mxu0 %v1889
      %1953 = vmatpush1.bf16.msra.mxu0 %v1888
      %1954 = vmatprep.mubr.bf16.mxu0 %v1711
      %1955 = vmatmul.mubr.bf16.gmra.mrb[0].mxu0 %v1710
      %v1956 = vpop.f32.mrb[0].mxu0
      %v1957 = vadd.f32 %v1755, %v1956
      %v1958 = vpop.f32.mrb[0].mxu0
      %v1959 = vadd.f32 %v1759, %v1958
      %v1960 = vpop.f32.mrb[0].mxu0
      %v1961 = vadd.f32 %v1755, %v1960
      %v1962 = vpop.f32.mrb[0].mxu0
      %v1963 = vadd.f32 %v1759, %v1962
      %1964 = vmatprep.mubr.bf16.mxu0 %v1713
      %1965 = vmatmul.mubr.bf16.gmra.mrb[0].mxu0 %v1712
      %v1966 = vpop.f32.mrb[0].mxu0
      %v1967 = vadd.f32 %v1755, %v1966
      %v1968 = vpop.f32.mrb[0].mxu0
      %v1969 = vadd.f32 %v1759, %v1968
      %v1970 = vpop.f32.mrb[0].mxu0
      %v1971 = vadd.f32 %v1755, %v1970
      %v1972 = vpop.f32.mrb[0].mxu0
      %v1973 = vadd.f32 %v1759, %v1972
      %1974 = vmatprep.mubr.bf16.mxu0 %v1715
      %1975 = vmatmul.mubr.bf16.gmra.mrb[0].mxu0 %v1714
      %v1976 = vpop.f32.mrb[0].mxu0
      %v1977 = vadd.f32 %v1755, %v1976
      %v1978 = vpop.f32.mrb[0].mxu0
      %v1979 = vadd.f32 %v1759, %v1978
      %v1980 = vpop.f32.mrb[0].mxu0
      %v1981 = vadd.f32 %v1755, %v1980
      %v1982 = vpop.f32.mrb[0].mxu0
      %v1983 = vadd.f32 %v1759, %v1982
      %1984 = vmatprep.mubr.bf16.mxu0 %v1717
      %1985 = vmatmul.mubr.bf16.gmra.mrb[0].mxu0 %v1716
      %v1986 = vpop.f32.mrb[0].mxu0
      %v1987 = vadd.f32 %v1755, %v1986
      %v1988 = vpop.f32.mrb[0].mxu0
      %v1989 = vadd.f32 %v1759, %v1988
      %v1990 = vpop.f32.mrb[0].mxu0
      %v1991 = vadd.f32 %v1755, %v1990
      %v1992 = vpop.f32.mrb[0].mxu0
      %v1993 = vadd.f32 %v1759, %v1992
      %1994 = vdwg.mxu0
      %v1995 = vmax.f32 %v1957, 0.0
      %v1996 = vmax.f32 %v1959, 0.0
      %v1997 = vmax.f32 %v1961, 0.0
      %v1998 = vmax.f32 %v1963, 0.0
      %v1999 = vmax.f32 %v1967, 0.0
      %v2000 = vmax.f32 %v1969, 0.0
      %v2001 = vmax.f32 %v1971, 0.0
      %v2002 = vmax.f32 %v1973, 0.0
      %v2003 = vmax.f32 %v1977, 0.0
      %v2004 = vmax.f32 %v1979, 0.0
      %v2005 = vmax.f32 %v1981, 0.0
      %v2006 = vmax.f32 %v1983, 0.0
      %v2007 = vmax.f32 %v1987, 0.0
      %v2008 = vmax.f32 %v1989, 0.0
      %v2009 = vmax.f32 %v1991, 0.0
      %v2010 = vmax.f32 %v1993, 0.0
      %v2011 = vpack.c.bf16 %v1997, %v1995
      %v2012 = vpack.c.bf16 %v1998, %v1996
      %v2013 = vpack.c.bf16 %v2001, %v1999
      %v2014 = vpack.c.bf16 %v2002, %v2000
      %v2015 = vpack.c.bf16 %v2005, %v2003
      %v2016 = vpack.c.bf16 %v2006, %v2004
      %v2017 = vpack.c.bf16 %v2009, %v2007
      %v2018 = vpack.c.bf16 %v2010, %v2008
      %v2019 = vld [vmem:[%s6] sm:$0xff]
      %v2020 = vld [vmem:[%s6 + $0x8] sm:$0xff]
      %v2021 = vld [vmem:[%s6 + $0x10] sm:$0xff]
      %v2022 = vld [vmem:[%s6 + $0x18] sm:$0xff]
      %v2023 = vld [vmem:[%s6 + $0x20] sm:$0xff]
      %v2024 = vld [vmem:[%s6 + $0x28] sm:$0xff]
      %v2025 = vld [vmem:[%s6 + $0x30] sm:$0xff]
      %v2026 = vld [vmem:[%s6 + $0x38] sm:$0xff]
      %v2027 = vld [vmem:[%s6 + $0x40] sm:$0xff]
      %v2028 = vld [vmem:[%s6 + $0x48] sm:$0xff]
      %v2029 = vld [vmem:[%s6 + $0x50] sm:$0xff]
      %v2030 = vld [vmem:[%s6 + $0x58] sm:$0xff]
      %v2031 = vld [vmem:[%s6 + $0x60] sm:$0xff]
      %v2032 = vld [vmem:[%s6 + $0x68] sm:$0xff]
      %v2033 = vld [vmem:[%s6 + $0x70] sm:$0xff]
      %v2034 = vld [vmem:[%s6 + $0x78] sm:$0xff]
      %v2035 = vld [vmem:[%s6 + $0x80] sm:$0xff]
      %v2036 = vld [vmem:[%s6 + $0x88] sm:$0xff]
      %v2037 = vld [vmem:[%s6 + $0x90] sm:$0xff]
      %v2038 = vld [vmem:[%s6 + $0x98] sm:$0xff]
      %v2039 = vld [vmem:[%s6 + $0xa0] sm:$0xff]
      %v2040 = vld [vmem:[%s6 + $0xa8] sm:$0xff]
      %v2041 = vld [vmem:[%s6 + $0xb0] sm:$0xff]
      %v2042 = vld [vmem:[%s6 + $0xb8] sm:$0xff]
      %v2043 = vld [vmem:[%s6 + $0xc0] sm:$0xff]
      %v2044 = vld [vmem:[%s6 + $0xc8] sm:$0xff]
      %v2045 = vld [vmem:[%s6 + $0xd0] sm:$0xff]
      %v2046 = vld [vmem:[%s6 + $0xd8] sm:$0xff]
      %v2047 = vld [vmem:[%s6 + $0xe0] sm:$0xff]
      %v2048 = vld [vmem:[%s6 + $0xe8] sm:$0xff]
      %v2049 = vld [vmem:[%s6 + $0xf0] sm:$0xff]
      %v2050 = vld [vmem:[%s6 + $0xf8] sm:$0xff]
      %v2051 = vld [vmem:[%s7] sm:$0x3]
      %v2053 = vlaneseq
      %v2054 = vshrl.u32 %v2053, 7
      %v2055 = vsub.s32 0, %v2054
      %v2056 = vrot.slane %v2051, %v2055
      %v2057 = vlaneseq
      %v2058 = vshrl.u32 %v2057, 7
      %v2059 = vsub.s32 1, %v2058
      %v2060 = vrot.slane %v2051, %v2059
      %v2095 = vunpack.c.l.b16 %v2019
      %v2096 = vunpack.c.h.b16 %v2019
      %v2097 = vunpack.c.l.b16 %v2020
      %v2098 = vunpack.c.h.b16 %v2020
      %v2099 = vunpack.c.l.b16 %v2021
      %v2100 = vunpack.c.h.b16 %v2021
      %v2101 = vunpack.c.l.b16 %v2022
      %v2102 = vunpack.c.h.b16 %v2022
      %v2103 = vunpack.c.l.b16 %v2023
      %v2104 = vunpack.c.h.b16 %v2023
      %v2105 = vunpack.c.l.b16 %v2024
      %v2106 = vunpack.c.h.b16 %v2024
      %v2107 = vunpack.c.l.b16 %v2025
      %v2108 = vunpack.c.h.b16 %v2025
      %v2109 = vunpack.c.l.b16 %v2026
      %v2110 = vunpack.c.h.b16 %v2026
      %v2111 = vunpack.c.l.b16 %v2027
      %v2112 = vunpack.c.h.b16 %v2027
      %v2113 = vunpack.c.l.b16 %v2028
      %v2114 = vunpack.c.h.b16 %v2028
      %v2115 = vunpack.c.l.b16 %v2029
      %v2116 = vunpack.c.h.b16 %v2029
      %v2117 = vunpack.c.l.b16 %v2030
      %v2118 = vunpack.c.h.b16 %v2030
      %v2119 = vunpack.c.l.b16 %v2031
      %v2120 = vunpack.c.h.b16 %v2031
      %v2121 = vunpack.c.l.b16 %v2032
      %v2122 = vunpack.c.h.b16 %v2032
      %v2123 = vunpack.c.l.b16 %v2033
      %v2124 = vunpack.c.h.b16 %v2033
      %v2125 = vunpack.c.l.b16 %v2034
      %v2126 = vunpack.c.h.b16 %v2034
      %v2127 = vunpack.c.l.b16 %v2035
      %v2128 = vunpack.c.h.b16 %v2035
      %v2129 = vunpack.c.l.b16 %v2036
      %v2130 = vunpack.c.h.b16 %v2036
      %v2131 = vunpack.c.l.b16 %v2037
      %v2132 = vunpack.c.h.b16 %v2037
      %v2133 = vunpack.c.l.b16 %v2038
      %v2134 = vunpack.c.h.b16 %v2038
      %v2135 = vunpack.c.l.b16 %v2039
      %v2136 = vunpack.c.h.b16 %v2039
      %v2137 = vunpack.c.l.b16 %v2040
      %v2138 = vunpack.c.h.b16 %v2040
      %v2139 = vunpack.c.l.b16 %v2041
      %v2140 = vunpack.c.h.b16 %v2041
      %v2141 = vunpack.c.l.b16 %v2042
      %v2142 = vunpack.c.h.b16 %v2042
      %v2143 = vunpack.c.l.b16 %v2043
      %v2144 = vunpack.c.h.b16 %v2043
      %v2145 = vunpack.c.l.b16 %v2044
      %v2146 = vunpack.c.h.b16 %v2044
      %v2147 = vunpack.c.l.b16 %v2045
      %v2148 = vunpack.c.h.b16 %v2045
      %v2149 = vunpack.c.l.b16 %v2046
      %v2150 = vunpack.c.h.b16 %v2046
      %v2151 = vunpack.c.l.b16 %v2047
      %v2152 = vunpack.c.h.b16 %v2047
      %v2153 = vunpack.c.l.b16 %v2048
      %v2154 = vunpack.c.h.b16 %v2048
      %v2155 = vunpack.c.l.b16 %v2049
      %v2156 = vunpack.c.h.b16 %v2049
      %v2157 = vunpack.c.l.b16 %v2050
      %v2158 = vunpack.c.h.b16 %v2050
      %v2159 = vpack.c.b16 %v2097, %v2095
      %v2160 = vpack.c.b16 %v2098, %v2096
      %v2161 = vpack.c.b16 %v2101, %v2099
      %v2162 = vpack.c.b16 %v2102, %v2100
      %v2163 = vpack.c.b16 %v2105, %v2103
      %v2164 = vpack.c.b16 %v2106, %v2104
      %v2165 = vpack.c.b16 %v2109, %v2107
      %v2166 = vpack.c.b16 %v2110, %v2108
      %v2167 = vpack.c.b16 %v2113, %v2111
      %v2168 = vpack.c.b16 %v2114, %v2112
      %v2169 = vpack.c.b16 %v2117, %v2115
      %v2170 = vpack.c.b16 %v2118, %v2116
      %v2171 = vpack.c.b16 %v2121, %v2119
      %v2172 = vpack.c.b16 %v2122, %v2120
      %v2173 = vpack.c.b16 %v2125, %v2123
      %v2174 = vpack.c.b16 %v2126, %v2124
      %v2175 = vpack.c.b16 %v2129, %v2127
      %v2176 = vpack.c.b16 %v2130, %v2128
      %v2177 = vpack.c.b16 %v2133, %v2131
      %v2178 = vpack.c.b16 %v2134, %v2132
      %v2179 = vpack.c.b16 %v2137, %v2135
      %v2180 = vpack.c.b16 %v2138, %v2136
      %v2181 = vpack.c.b16 %v2141, %v2139
      %v2182 = vpack.c.b16 %v2142, %v2140
      %v2183 = vpack.c.b16 %v2145, %v2143
      %v2184 = vpack.c.b16 %v2146, %v2144
      %v2185 = vpack.c.b16 %v2149, %v2147
      %v2186 = vpack.c.b16 %v2150, %v2148
      %v2187 = vpack.c.b16 %v2153, %v2151
      %v2188 = vpack.c.b16 %v2154, %v2152
      %v2189 = vpack.c.b16 %v2157, %v2155
      %v2190 = vpack.c.b16 %v2158, %v2156
      %2223 = vmatprep.subr.bf16.mxu0 %v2160
      %2224 = vmatpush1.bf16.msra.mxu0 %v2159
      %2225 = vmatprep.subr.bf16.mxu0 %v2162
      %2226 = vmatpush1.bf16.msra.mxu0 %v2161
      %2227 = vmatprep.subr.bf16.mxu0 %v2164
      %2228 = vmatpush1.bf16.msra.mxu0 %v2163
      %2229 = vmatprep.subr.bf16.mxu0 %v2166
      %2230 = vmatpush1.bf16.msra.mxu0 %v2165
      %2231 = vmatprep.subr.bf16.mxu0 %v2168
      %2232 = vmatpush1.bf16.msra.mxu0 %v2167
      %2233 = vmatprep.subr.bf16.mxu0 %v2170
      %2234 = vmatpush1.bf16.msra.mxu0 %v2169
      %2235 = vmatprep.subr.bf16.mxu0 %v2172
      %2236 = vmatpush1.bf16.msra.mxu0 %v2171
      %2237 = vmatprep.subr.bf16.mxu0 %v2174
      %2238 = vmatpush1.bf16.msra.mxu0 %v2173
      %2239 = vmatprep.subr.bf16.mxu0 %v2176
      %2240 = vmatpush1.bf16.msra.mxu0 %v2175
      %2241 = vmatprep.subr.bf16.mxu0 %v2178
      %2242 = vmatpush1.bf16.msra.mxu0 %v2177
      %2243 = vmatprep.subr.bf16.mxu0 %v2180
      %2244 = vmatpush1.bf16.msra.mxu0 %v2179
      %2245 = vmatprep.subr.bf16.mxu0 %v2182
      %2246 = vmatpush1.bf16.msra.mxu0 %v2181
      %2247 = vmatprep.subr.bf16.mxu0 %v2184
      %2248 = vmatpush1.bf16.msra.mxu0 %v2183
      %2249 = vmatprep.subr.bf16.mxu0 %v2186
      %2250 = vmatpush1.bf16.msra.mxu0 %v2185
      %2251 = vmatprep.subr.bf16.mxu0 %v2188
      %2252 = vmatpush1.bf16.msra.mxu0 %v2187
      %2253 = vmatprep.subr.bf16.mxu0 %v2190
      %2254 = vmatpush1.bf16.msra.mxu0 %v2189
      %2255 = vmatprep.mubr.bf16.mxu0 %v2012
      %2256 = vmatmul.mubr.bf16.gmra.mrb[0].mxu0 %v2011
      %v2257 = vpop.f32.mrb[0].mxu0
      %v2258 = vadd.f32 %v2056, %v2257
      %v2259 = vpop.f32.mrb[0].mxu0
      %v2260 = vadd.f32 %v2060, %v2259
      %v2261 = vpop.f32.mrb[0].mxu0
      %v2262 = vadd.f32 %v2056, %v2261
      %v2263 = vpop.f32.mrb[0].mxu0
      %v2264 = vadd.f32 %v2060, %v2263
      %2265 = vmatprep.mubr.bf16.mxu0 %v2014
      %2266 = vmatmul.mubr.bf16.gmra.mrb[0].mxu0 %v2013
      %v2267 = vpop.f32.mrb[0].mxu0
      %v2268 = vadd.f32 %v2056, %v2267
      %v2269 = vpop.f32.mrb[0].mxu0
      %v2270 = vadd.f32 %v2060, %v2269
      %v2271 = vpop.f32.mrb[0].mxu0
      %v2272 = vadd.f32 %v2056, %v2271
      %v2273 = vpop.f32.mrb[0].mxu0
      %v2274 = vadd.f32 %v2060, %v2273
      %2275 = vmatprep.mubr.bf16.mxu0 %v2016
      %2276 = vmatmul.mubr.bf16.gmra.mrb[0].mxu0 %v2015
      %v2277 = vpop.f32.mrb[0].mxu0
      %v2278 = vadd.f32 %v2056, %v2277
      %v2279 = vpop.f32.mrb[0].mxu0
      %v2280 = vadd.f32 %v2060, %v2279
      %v2281 = vpop.f32.mrb[0].mxu0
      %v2282 = vadd.f32 %v2056, %v2281
      %v2283 = vpop.f32.mrb[0].mxu0
      %v2284 = vadd.f32 %v2060, %v2283
      %2285 = vmatprep.mubr.bf16.mxu0 %v2018
      %2286 = vmatmul.mubr.bf16.gmra.mrb[0].mxu0 %v2017
      %v2287 = vpop.f32.mrb[0].mxu0
      %v2288 = vadd.f32 %v2056, %v2287
      %v2289 = vpop.f32.mrb[0].mxu0
      %v2290 = vadd.f32 %v2060, %v2289
      %v2291 = vpop.f32.mrb[0].mxu0
      %v2292 = vadd.f32 %v2056, %v2291
      %v2293 = vpop.f32.mrb[0].mxu0
      %v2294 = vadd.f32 %v2060, %v2293
      %2295 = vdwg.mxu0
      %2296 = vst [vmem:[%s539] sm:$0xff] %v2258
      %2297 = vst [vmem:[%s539 + $0x8] sm:$0xff] %v2260
      %2298 = vst [vmem:[%s539 + $0x10] sm:$0xff] %v2262
      %2299 = vst [vmem:[%s539 + $0x18] sm:$0xff] %v2264
      %2300 = vst [vmem:[%s539 + $0x20] sm:$0xff] %v2268
      %2301 = vst [vmem:[%s539 + $0x28] sm:$0xff] %v2270
      %2302 = vst [vmem:[%s539 + $0x30] sm:$0xff] %v2272
      %2303 = vst [vmem:[%s539 + $0x38] sm:$0xff] %v2274
      %2304 = vst [vmem:[%s539 + $0x40] sm:$0xff] %v2278
      %2305 = vst [vmem:[%s539 + $0x48] sm:$0xff] %v2280
      %2306 = vst [vmem:[%s539 + $0x50] sm:$0xff] %v2282
      %2307 = vst [vmem:[%s539 + $0x58] sm:$0xff] %v2284
      %2308 = vst [vmem:[%s539 + $0x60] sm:$0xff] %v2288
      %2309 = vst [vmem:[%s539 + $0x68] sm:$0xff] %v2290
      %2310 = vst [vmem:[%s539 + $0x70] sm:$0xff] %v2292
      %2311 = vst [vmem:[%s539 + $0x78] sm:$0xff] %v2294
      %v2312 = vld [vmem:[%s525] sm:$0xff]
      %v2313 = vld [vmem:[%s525 + $0x8] sm:$0xff]
      %v2314 = vld [vmem:[%s525 + $0x10] sm:$0xff]
      %v2315 = vld [vmem:[%s525 + $0x18] sm:$0xff]
      %v2316 = vld [vmem:[%s525 + $0x20] sm:$0xff]
      %v2317 = vld [vmem:[%s525 + $0x28] sm:$0xff]
      %v2318 = vld [vmem:[%s525 + $0x30] sm:$0xff]
      %v2319 = vld [vmem:[%s525 + $0x38] sm:$0xff]
      %v2320 = vmul.f32 %v2260, %v2312
      %v2321 = vmul.f32 %v2264, %v2313
      %v2322 = vmul.f32 %v2270, %v2314
      %v2323 = vmul.f32 %v2274, %v2315
      %v2324 = vmul.f32 %v2280, %v2316
      %v2325 = vmul.f32 %v2284, %v2317
      %v2326 = vmul.f32 %v2290, %v2318
      %v2327 = vmul.f32 %v2294, %v2319
      %v2328 = vadd.f32 %v2258, %v2320
      %v2329 = vadd.f32 %v2262, %v2321
      %v2330 = vadd.f32 %v2268, %v2322
      %v2331 = vadd.f32 %v2272, %v2323
      %v2332 = vadd.f32 %v2278, %v2324
      %v2333 = vadd.f32 %v2282, %v2325
      %v2334 = vadd.f32 %v2288, %v2326
      %v2335 = vadd.f32 %v2292, %v2327
      %v2336 = vpack.c.bf16 %v2329, %v2328
      %v2337 = vpack.c.bf16 %v2331, %v2330
      %v2338 = vpack.c.bf16 %v2333, %v2332
      %v2339 = vpack.c.bf16 %v2335, %v2334
      %v2340 = vld [vmem:[%s8] sm:$0xff]
      %v2341 = vld [vmem:[%s8 + $0x8] sm:$0xff]
      %v2342 = vld [vmem:[%s8 + $0x10] sm:$0xff]
      %v2343 = vld [vmem:[%s8 + $0x18] sm:$0xff]
      %v2344 = vld [vmem:[%s8 + $0x20] sm:$0xff]
      %v2345 = vld [vmem:[%s8 + $0x28] sm:$0xff]
      %v2346 = vld [vmem:[%s8 + $0x30] sm:$0xff]
      %v2347 = vld [vmem:[%s8 + $0x38] sm:$0xff]
      %v2348 = vld [vmem:[%s8 + $0x40] sm:$0xff]
      %v2349 = vld [vmem:[%s8 + $0x48] sm:$0xff]
      %v2350 = vld [vmem:[%s8 + $0x50] sm:$0xff]
      %v2351 = vld [vmem:[%s8 + $0x58] sm:$0xff]
      %v2352 = vld [vmem:[%s8 + $0x60] sm:$0xff]
      %v2353 = vld [vmem:[%s8 + $0x68] sm:$0xff]
      %v2354 = vld [vmem:[%s8 + $0x70] sm:$0xff]
      %v2355 = vld [vmem:[%s8 + $0x78] sm:$0xff]
      %v2356 = vld [vmem:[%s9] sm:$0x3]
      %v2358 = vlaneseq
      %v2359 = vshrl.u32 %v2358, 7
      %v2360 = vsub.s32 0, %v2359
      %v2361 = vrot.slane %v2356, %v2360
      %v2362 = vlaneseq
      %v2363 = vshrl.u32 %v2362, 7
      %v2364 = vsub.s32 1, %v2363
      %v2365 = vrot.slane %v2356, %v2364
      %v2384 = vunpack.c.l.b16 %v2340
      %v2385 = vunpack.c.h.b16 %v2340
      %v2386 = vunpack.c.l.b16 %v2341
      %v2387 = vunpack.c.h.b16 %v2341
      %v2388 = vunpack.c.l.b16 %v2342
      %v2389 = vunpack.c.h.b16 %v2342
      %v2390 = vunpack.c.l.b16 %v2343
      %v2391 = vunpack.c.h.b16 %v2343
      %v2392 = vunpack.c.l.b16 %v2344
      %v2393 = vunpack.c.h.b16 %v2344
      %v2394 = vunpack.c.l.b16 %v2345
      %v2395 = vunpack.c.h.b16 %v2345
      %v2396 = vunpack.c.l.b16 %v2346
      %v2397 = vunpack.c.h.b16 %v2346
      %v2398 = vunpack.c.l.b16 %v2347
      %v2399 = vunpack.c.h.b16 %v2347
      %v2400 = vunpack.c.l.b16 %v2348
      %v2401 = vunpack.c.h.b16 %v2348
      %v2402 = vunpack.c.l.b16 %v2349
      %v2403 = vunpack.c.h.b16 %v2349
      %v2404 = vunpack.c.l.b16 %v2350
      %v2405 = vunpack.c.h.b16 %v2350
      %v2406 = vunpack.c.l.b16 %v2351
      %v2407 = vunpack.c.h.b16 %v2351
      %v2408 = vunpack.c.l.b16 %v2352
      %v2409 = vunpack.c.h.b16 %v2352
      %v2410 = vunpack.c.l.b16 %v2353
      %v2411 = vunpack.c.h.b16 %v2353
      %v2412 = vunpack.c.l.b16 %v2354
      %v2413 = vunpack.c.h.b16 %v2354
      %v2414 = vunpack.c.l.b16 %v2355
      %v2415 = vunpack.c.h.b16 %v2355
      %v2416 = vpack.c.b16 %v2386, %v2384
      %v2417 = vpack.c.b16 %v2387, %v2385
      %v2418 = vpack.c.b16 %v2390, %v2388
      %v2419 = vpack.c.b16 %v2391, %v2389
      %v2420 = vpack.c.b16 %v2394, %v2392
      %v2421 = vpack.c.b16 %v2395, %v2393
      %v2422 = vpack.c.b16 %v2398, %v2396
      %v2423 = vpack.c.b16 %v2399, %v2397
      %v2424 = vpack.c.b16 %v2402, %v2400
      %v2425 = vpack.c.b16 %v2403, %v2401
      %v2426 = vpack.c.b16 %v2406, %v2404
      %v2427 = vpack.c.b16 %v2407, %v2405
      %v2428 = vpack.c.b16 %v2410, %v2408
      %v2429 = vpack.c.b16 %v2411, %v2409
      %v2430 = vpack.c.b16 %v2414, %v2412
      %v2431 = vpack.c.b16 %v2415, %v2413
      %2448 = vmatprep.subr.bf16.mxu0 %v2417
      %2449 = vmatpush1.bf16.msra.mxu0 %v2416
      %2450 = vmatprep.subr.bf16.mxu0 %v2419
      %2451 = vmatpush1.bf16.msra.mxu0 %v2418
      %2452 = vmatprep.subr.bf16.mxu0 %v2421
      %2453 = vmatpush1.bf16.msra.mxu0 %v2420
      %2454 = vmatprep.subr.bf16.mxu0 %v2423
      %2455 = vmatpush1.bf16.msra.mxu0 %v2422
      %2456 = vmatprep.subr.bf16.mxu0 %v2425
      %2457 = vmatpush1.bf16.msra.mxu0 %v2424
      %2458 = vmatprep.subr.bf16.mxu0 %v2427
      %2459 = vmatpush1.bf16.msra.mxu0 %v2426
      %2460 = vmatprep.subr.bf16.mxu0 %v2429
      %2461 = vmatpush1.bf16.msra.mxu0 %v2428
      %2462 = vmatprep.subr.bf16.mxu0 %v2431
      %2463 = vmatpush1.bf16.msra.mxu0 %v2430
      %2464 = vmatprep.subr.bf16.mxu0 0
      %2465 = vmatpush1.bf16.msra.mxu0 0
      %2466 = vmatprep.subr.bf16.mxu0 0
      %2467 = vmatpush1.bf16.msra.mxu0 0
      %2468 = vmatprep.subr.bf16.mxu0 0
      %2469 = vmatpush1.bf16.msra.mxu0 0
      %2470 = vmatprep.subr.bf16.mxu0 0
      %2471 = vmatpush1.bf16.msra.mxu0 0
      %2472 = vmatprep.subr.bf16.mxu0 0
      %2473 = vmatpush1.bf16.msra.mxu0 0
      %2474 = vmatprep.subr.bf16.mxu0 0
      %2475 = vmatpush1.bf16.msra.mxu0 0
      %2476 = vmatprep.subr.bf16.mxu0 0
      %2477 = vmatpush1.bf16.msra.mxu0 0
      %2478 = vmatprep.subr.bf16.mxu0 0
      %2479 = vmatpush1.bf16.msra.mxu0 0
      %2480 = vmatprep.mubr.bf16.mxu0 0
      %2481 = vmatmul.mubr.bf16.gmra.mrb[0].mxu0 %v2336
      %v2482 = vpop.f32.mrb[0].mxu0
      %v2483 = vadd.f32 %v2361, %v2482
      %v2484 = vpop.f32.mrb[0].mxu0
      %v2485 = vadd.f32 %v2365, %v2484
      %v2486 = vpop.f32.mrb[0].mxu0
      %v2487 = vadd.f32 %v2361, %v2486
      %v2488 = vpop.f32.mrb[0].mxu0
      %v2489 = vadd.f32 %v2365, %v2488
      %2490 = vmatprep.mubr.bf16.mxu0 0
      %2491 = vmatmul.mubr.bf16.gmra.mrb[0].mxu0 %v2337
      %v2492 = vpop.f32.mrb[0].mxu0
      %v2493 = vadd.f32 %v2361, %v2492
      %v2494 = vpop.f32.mrb[0].mxu0
      %v2495 = vadd.f32 %v2365, %v2494
      %v2496 = vpop.f32.mrb[0].mxu0
      %v2497 = vadd.f32 %v2361, %v2496
      %v2498 = vpop.f32.mrb[0].mxu0
      %v2499 = vadd.f32 %v2365, %v2498
      %2500 = vmatprep.mubr.bf16.mxu0 0
      %2501 = vmatmul.mubr.bf16.gmra.mrb[0].mxu0 %v2338
      %v2502 = vpop.f32.mrb[0].mxu0
      %v2503 = vadd.f32 %v2361, %v2502
      %v2504 = vpop.f32.mrb[0].mxu0
      %v2505 = vadd.f32 %v2365, %v2504
      %v2506 = vpop.f32.mrb[0].mxu0
      %v2507 = vadd.f32 %v2361, %v2506
      %v2508 = vpop.f32.mrb[0].mxu0
      %v2509 = vadd.f32 %v2365, %v2508
      %2510 = vmatprep.mubr.bf16.mxu0 0
      %2511 = vmatmul.mubr.bf16.gmra.mrb[0].mxu0 %v2339
      %v2512 = vpop.f32.mrb[0].mxu0
      %v2513 = vadd.f32 %v2361, %v2512
      %v2514 = vpop.f32.mrb[0].mxu0
      %v2515 = vadd.f32 %v2365, %v2514
      %v2516 = vpop.f32.mrb[0].mxu0
      %v2517 = vadd.f32 %v2361, %v2516
      %v2518 = vpop.f32.mrb[0].mxu0
      %v2519 = vadd.f32 %v2365, %v2518
      %2520 = vdwg.mxu0
      %v2521 = vmax.f32 %v2483, 0.0
      %v2522 = vmax.f32 %v2485, 0.0
      %v2523 = vmax.f32 %v2487, 0.0
      %v2524 = vmax.f32 %v2489, 0.0
      %v2525 = vmax.f32 %v2493, 0.0
      %v2526 = vmax.f32 %v2495, 0.0
      %v2527 = vmax.f32 %v2497, 0.0
      %v2528 = vmax.f32 %v2499, 0.0
      %v2529 = vmax.f32 %v2503, 0.0
      %v2530 = vmax.f32 %v2505, 0.0
      %v2531 = vmax.f32 %v2507, 0.0
      %v2532 = vmax.f32 %v2509, 0.0
      %v2533 = vmax.f32 %v2513, 0.0
      %v2534 = vmax.f32 %v2515, 0.0
      %v2535 = vmax.f32 %v2517, 0.0
      %v2536 = vmax.f32 %v2519, 0.0
      %v2537 = vpack.c.bf16 %v2523, %v2521
      %v2538 = vpack.c.bf16 %v2524, %v2522
      %v2539 = vpack.c.bf16 %v2527, %v2525
      %v2540 = vpack.c.bf16 %v2528, %v2526
      %v2541 = vpack.c.bf16 %v2531, %v2529
      %v2542 = vpack.c.bf16 %v2532, %v2530
      %v2543 = vpack.c.bf16 %v2535, %v2533
      %v2544 = vpack.c.bf16 %v2536, %v2534
      %v2545 = vld [vmem:[%s10] sm:$0xff]
      %v2546 = vld [vmem:[%s10 + $0x8] sm:$0xff]
      %v2547 = vld [vmem:[%s10 + $0x10] sm:$0xff]
      %v2548 = vld [vmem:[%s10 + $0x18] sm:$0xff]
      %v2549 = vld [vmem:[%s10 + $0x20] sm:$0xff]
      %v2550 = vld [vmem:[%s10 + $0x28] sm:$0xff]
      %v2551 = vld [vmem:[%s10 + $0x30] sm:$0xff]
      %v2552 = vld [vmem:[%s10 + $0x38] sm:$0xff]
      %v2553 = vld [vmem:[%s10 + $0x40] sm:$0xff]
      %v2554 = vld [vmem:[%s10 + $0x48] sm:$0xff]
      %v2555 = vld [vmem:[%s10 + $0x50] sm:$0xff]
      %v2556 = vld [vmem:[%s10 + $0x58] sm:$0xff]
      %v2557 = vld [vmem:[%s10 + $0x60] sm:$0xff]
      %v2558 = vld [vmem:[%s10 + $0x68] sm:$0xff]
      %v2559 = vld [vmem:[%s10 + $0x70] sm:$0xff]
      %v2560 = vld [vmem:[%s10 + $0x78] sm:$0xff]
      %v2561 = vld [vmem:[%s10 + $0x80] sm:$0xff]
      %v2562 = vld [vmem:[%s10 + $0x88] sm:$0xff]
      %v2563 = vld [vmem:[%s10 + $0x90] sm:$0xff]
      %v2564 = vld [vmem:[%s10 + $0x98] sm:$0xff]
      %v2565 = vld [vmem:[%s10 + $0xa0] sm:$0xff]
      %v2566 = vld [vmem:[%s10 + $0xa8] sm:$0xff]
      %v2567 = vld [vmem:[%s10 + $0xb0] sm:$0xff]
      %v2568 = vld [vmem:[%s10 + $0xb8] sm:$0xff]
      %v2569 = vld [vmem:[%s10 + $0xc0] sm:$0xff]
      %v2570 = vld [vmem:[%s10 + $0xc8] sm:$0xff]
      %v2571 = vld [vmem:[%s10 + $0xd0] sm:$0xff]
      %v2572 = vld [vmem:[%s10 + $0xd8] sm:$0xff]
      %v2573 = vld [vmem:[%s10 + $0xe0] sm:$0xff]
      %v2574 = vld [vmem:[%s10 + $0xe8] sm:$0xff]
      %v2575 = vld [vmem:[%s10 + $0xf0] sm:$0xff]
      %v2576 = vld [vmem:[%s10 + $0xf8] sm:$0xff]
      %v2577 = vld [vmem:[%s11] sm:$0x3]
      %v2579 = vlaneseq
      %v2580 = vshrl.u32 %v2579, 7
      %v2581 = vsub.s32 0, %v2580
      %v2582 = vrot.slane %v2577, %v2581
      %v2583 = vlaneseq
      %v2584 = vshrl.u32 %v2583, 7
      %v2585 = vsub.s32 1, %v2584
      %v2586 = vrot.slane %v2577, %v2585
      %v2621 = vunpack.c.l.b16 %v2545
      %v2622 = vunpack.c.h.b16 %v2545
      %v2623 = vunpack.c.l.b16 %v2546
      %v2624 = vunpack.c.h.b16 %v2546
      %v2625 = vunpack.c.l.b16 %v2547
      %v2626 = vunpack.c.h.b16 %v2547
      %v2627 = vunpack.c.l.b16 %v2548
      %v2628 = vunpack.c.h.b16 %v2548
      %v2629 = vunpack.c.l.b16 %v2549
      %v2630 = vunpack.c.h.b16 %v2549
      %v2631 = vunpack.c.l.b16 %v2550
      %v2632 = vunpack.c.h.b16 %v2550
      %v2633 = vunpack.c.l.b16 %v2551
      %v2634 = vunpack.c.h.b16 %v2551
      %v2635 = vunpack.c.l.b16 %v2552
      %v2636 = vunpack.c.h.b16 %v2552
      %v2637 = vunpack.c.l.b16 %v2553
      %v2638 = vunpack.c.h.b16 %v2553
      %v2639 = vunpack.c.l.b16 %v2554
      %v2640 = vunpack.c.h.b16 %v2554
      %v2641 = vunpack.c.l.b16 %v2555
      %v2642 = vunpack.c.h.b16 %v2555
      %v2643 = vunpack.c.l.b16 %v2556
      %v2644 = vunpack.c.h.b16 %v2556
      %v2645 = vunpack.c.l.b16 %v2557
      %v2646 = vunpack.c.h.b16 %v2557
      %v2647 = vunpack.c.l.b16 %v2558
      %v2648 = vunpack.c.h.b16 %v2558
      %v2649 = vunpack.c.l.b16 %v2559
      %v2650 = vunpack.c.h.b16 %v2559
      %v2651 = vunpack.c.l.b16 %v2560
      %v2652 = vunpack.c.h.b16 %v2560
      %v2653 = vunpack.c.l.b16 %v2561
      %v2654 = vunpack.c.h.b16 %v2561
      %v2655 = vunpack.c.l.b16 %v2562
      %v2656 = vunpack.c.h.b16 %v2562
      %v2657 = vunpack.c.l.b16 %v2563
      %v2658 = vunpack.c.h.b16 %v2563
      %v2659 = vunpack.c.l.b16 %v2564
      %v2660 = vunpack.c.h.b16 %v2564
      %v2661 = vunpack.c.l.b16 %v2565
      %v2662 = vunpack.c.h.b16 %v2565
      %v2663 = vunpack.c.l.b16 %v2566
      %v2664 = vunpack.c.h.b16 %v2566
      %v2665 = vunpack.c.l.b16 %v2567
      %v2666 = vunpack.c.h.b16 %v2567
      %v2667 = vunpack.c.l.b16 %v2568
      %v2668 = vunpack.c.h.b16 %v2568
      %v2669 = vunpack.c.l.b16 %v2569
      %v2670 = vunpack.c.h.b16 %v2569
      %v2671 = vunpack.c.l.b16 %v2570
      %v2672 = vunpack.c.h.b16 %v2570
      %v2673 = vunpack.c.l.b16 %v2571
      %v2674 = vunpack.c.h.b16 %v2571
      %v2675 = vunpack.c.l.b16 %v2572
      %v2676 = vunpack.c.h.b16 %v2572
      %v2677 = vunpack.c.l.b16 %v2573
      %v2678 = vunpack.c.h.b16 %v2573
      %v2679 = vunpack.c.l.b16 %v2574
      %v2680 = vunpack.c.h.b16 %v2574
      %v2681 = vunpack.c.l.b16 %v2575
      %v2682 = vunpack.c.h.b16 %v2575
      %v2683 = vunpack.c.l.b16 %v2576
      %v2684 = vunpack.c.h.b16 %v2576
      %v2685 = vpack.c.b16 %v2623, %v2621
      %v2686 = vpack.c.b16 %v2624, %v2622
      %v2687 = vpack.c.b16 %v2627, %v2625
      %v2688 = vpack.c.b16 %v2628, %v2626
      %v2689 = vpack.c.b16 %v2631, %v2629
      %v2690 = vpack.c.b16 %v2632, %v2630
      %v2691 = vpack.c.b16 %v2635, %v2633
      %v2692 = vpack.c.b16 %v2636, %v2634
      %v2693 = vpack.c.b16 %v2639, %v2637
      %v2694 = vpack.c.b16 %v2640, %v2638
      %v2695 = vpack.c.b16 %v2643, %v2641
      %v2696 = vpack.c.b16 %v2644, %v2642
      %v2697 = vpack.c.b16 %v2647, %v2645
      %v2698 = vpack.c.b16 %v2648, %v2646
      %v2699 = vpack.c.b16 %v2651, %v2649
      %v2700 = vpack.c.b16 %v2652, %v2650
      %v2701 = vpack.c.b16 %v2655, %v2653
      %v2702 = vpack.c.b16 %v2656, %v2654
      %v2703 = vpack.c.b16 %v2659, %v2657
      %v2704 = vpack.c.b16 %v2660, %v2658
      %v2705 = vpack.c.b16 %v2663, %v2661
      %v2706 = vpack.c.b16 %v2664, %v2662
      %v2707 = vpack.c.b16 %v2667, %v2665
      %v2708 = vpack.c.b16 %v2668, %v2666
      %v2709 = vpack.c.b16 %v2671, %v2669
      %v2710 = vpack.c.b16 %v2672, %v2670
      %v2711 = vpack.c.b16 %v2675, %v2673
      %v2712 = vpack.c.b16 %v2676, %v2674
      %v2713 = vpack.c.b16 %v2679, %v2677
      %v2714 = vpack.c.b16 %v2680, %v2678
      %v2715 = vpack.c.b16 %v2683, %v2681
      %v2716 = vpack.c.b16 %v2684, %v2682
      %2749 = vmatprep.subr.bf16.mxu0 %v2686
      %2750 = vmatpush1.bf16.msra.mxu0 %v2685
      %2751 = vmatprep.subr.bf16.mxu0 %v2688
      %2752 = vmatpush1.bf16.msra.mxu0 %v2687
      %2753 = vmatprep.subr.bf16.mxu0 %v2690
      %2754 = vmatpush1.bf16.msra.mxu0 %v2689
      %2755 = vmatprep.subr.bf16.mxu0 %v2692
      %2756 = vmatpush1.bf16.msra.mxu0 %v2691
      %2757 = vmatprep.subr.bf16.mxu0 %v2694
      %2758 = vmatpush1.bf16.msra.mxu0 %v2693
      %2759 = vmatprep.subr.bf16.mxu0 %v2696
      %2760 = vmatpush1.bf16.msra.mxu0 %v2695
      %2761 = vmatprep.subr.bf16.mxu0 %v2698
      %2762 = vmatpush1.bf16.msra.mxu0 %v2697
      %2763 = vmatprep.subr.bf16.mxu0 %v2700
      %2764 = vmatpush1.bf16.msra.mxu0 %v2699
      %2765 = vmatprep.subr.bf16.mxu0 %v2702
      %2766 = vmatpush1.bf16.msra.mxu0 %v2701
      %2767 = vmatprep.subr.bf16.mxu0 %v2704
      %2768 = vmatpush1.bf16.msra.mxu0 %v2703
      %2769 = vmatprep.subr.bf16.mxu0 %v2706
      %2770 = vmatpush1.bf16.msra.mxu0 %v2705
      %2771 = vmatprep.subr.bf16.mxu0 %v2708
      %2772 = vmatpush1.bf16.msra.mxu0 %v2707
      %2773 = vmatprep.subr.bf16.mxu0 %v2710
      %2774 = vmatpush1.bf16.msra.mxu0 %v2709
      %2775 = vmatprep.subr.bf16.mxu0 %v2712
      %2776 = vmatpush1.bf16.msra.mxu0 %v2711
      %2777 = vmatprep.subr.bf16.mxu0 %v2714
      %2778 = vmatpush1.bf16.msra.mxu0 %v2713
      %2779 = vmatprep.subr.bf16.mxu0 %v2716
      %2780 = vmatpush1.bf16.msra.mxu0 %v2715
      %2781 = vmatprep.mubr.bf16.mxu0 %v2538
      %2782 = vmatmul.mubr.bf16.gmra.mrb[0].mxu0 %v2537
      %v2783 = vpop.f32.mrb[0].mxu0
      %v2784 = vadd.f32 %v2582, %v2783
      %v2785 = vpop.f32.mrb[0].mxu0
      %v2786 = vadd.f32 %v2586, %v2785
      %v2787 = vpop.f32.mrb[0].mxu0
      %v2788 = vadd.f32 %v2582, %v2787
      %v2789 = vpop.f32.mrb[0].mxu0
      %v2790 = vadd.f32 %v2586, %v2789
      %2791 = vmatprep.mubr.bf16.mxu0 %v2540
      %2792 = vmatmul.mubr.bf16.gmra.mrb[0].mxu0 %v2539
      %v2793 = vpop.f32.mrb[0].mxu0
      %v2794 = vadd.f32 %v2582, %v2793
      %v2795 = vpop.f32.mrb[0].mxu0
      %v2796 = vadd.f32 %v2586, %v2795
      %v2797 = vpop.f32.mrb[0].mxu0
      %v2798 = vadd.f32 %v2582, %v2797
      %v2799 = vpop.f32.mrb[0].mxu0
      %v2800 = vadd.f32 %v2586, %v2799
      %2801 = vmatprep.mubr.bf16.mxu0 %v2542
      %2802 = vmatmul.mubr.bf16.gmra.mrb[0].mxu0 %v2541
      %v2803 = vpop.f32.mrb[0].mxu0
      %v2804 = vadd.f32 %v2582, %v2803
      %v2805 = vpop.f32.mrb[0].mxu0
      %v2806 = vadd.f32 %v2586, %v2805
      %v2807 = vpop.f32.mrb[0].mxu0
      %v2808 = vadd.f32 %v2582, %v2807
      %v2809 = vpop.f32.mrb[0].mxu0
      %v2810 = vadd.f32 %v2586, %v2809
      %2811 = vmatprep.mubr.bf16.mxu0 %v2544
      %2812 = vmatmul.mubr.bf16.gmra.mrb[0].mxu0 %v2543
      %v2813 = vpop.f32.mrb[0].mxu0
      %v2814 = vadd.f32 %v2582, %v2813
      %v2815 = vpop.f32.mrb[0].mxu0
      %v2816 = vadd.f32 %v2586, %v2815
      %v2817 = vpop.f32.mrb[0].mxu0
      %v2818 = vadd.f32 %v2582, %v2817
      %v2819 = vpop.f32.mrb[0].mxu0
      %v2820 = vadd.f32 %v2586, %v2819
      %2821 = vdwg.mxu0
      %v2822 = vmax.f32 %v2784, 0.0
      %v2823 = vmax.f32 %v2786, 0.0
      %v2824 = vmax.f32 %v2788, 0.0
      %v2825 = vmax.f32 %v2790, 0.0
      %v2826 = vmax.f32 %v2794, 0.0
      %v2827 = vmax.f32 %v2796, 0.0
      %v2828 = vmax.f32 %v2798, 0.0
      %v2829 = vmax.f32 %v2800, 0.0
      %v2830 = vmax.f32 %v2804, 0.0
      %v2831 = vmax.f32 %v2806, 0.0
      %v2832 = vmax.f32 %v2808, 0.0
      %v2833 = vmax.f32 %v2810, 0.0
      %v2834 = vmax.f32 %v2814, 0.0
      %v2835 = vmax.f32 %v2816, 0.0
      %v2836 = vmax.f32 %v2818, 0.0
      %v2837 = vmax.f32 %v2820, 0.0
      %v2838 = vpack.c.bf16 %v2824, %v2822
      %v2839 = vpack.c.bf16 %v2825, %v2823
      %v2840 = vpack.c.bf16 %v2828, %v2826
      %v2841 = vpack.c.bf16 %v2829, %v2827
      %v2842 = vpack.c.bf16 %v2832, %v2830
      %v2843 = vpack.c.bf16 %v2833, %v2831
      %v2844 = vpack.c.bf16 %v2836, %v2834
      %v2845 = vpack.c.bf16 %v2837, %v2835
      %v2846 = vld [vmem:[%s12] sm:$0xff]
      %v2847 = vld [vmem:[%s12 + $0x8] sm:$0xff]
      %v2848 = vld [vmem:[%s12 + $0x10] sm:$0xff]
      %v2849 = vld [vmem:[%s12 + $0x18] sm:$0xf]
      %v2850 = vld [vmem:[%s12 + $0x1c] sm:$0xff]
      %v2851 = vld [vmem:[%s12 + $0x24] sm:$0xff]
      %v2852 = vld [vmem:[%s12 + $0x2c] sm:$0xff]
      %v2853 = vld [vmem:[%s12 + $0x34] sm:$0xf]
      %v2854 = vld [vmem:[%s12 + $0x38] sm:$0xff]
      %v2855 = vld [vmem:[%s12 + $0x40] sm:$0xff]
      %v2856 = vld [vmem:[%s12 + $0x48] sm:$0xff]
      %v2857 = vld [vmem:[%s12 + $0x50] sm:$0xf]
      %v2858 = vld [vmem:[%s12 + $0x54] sm:$0xff]
      %v2859 = vld [vmem:[%s12 + $0x5c] sm:$0xff]
      %v2860 = vld [vmem:[%s12 + $0x64] sm:$0xff]
      %v2861 = vld [vmem:[%s12 + $0x6c] sm:$0xf]
      %v2862 = vld [vmem:[%s12 + $0x70] sm:$0xff]
      %v2863 = vld [vmem:[%s12 + $0x78] sm:$0xff]
      %v2864 = vld [vmem:[%s12 + $0x80] sm:$0xff]
      %v2865 = vld [vmem:[%s12 + $0x88] sm:$0xf]
      %v2866 = vld [vmem:[%s12 + $0x8c] sm:$0xff]
      %v2867 = vld [vmem:[%s12 + $0x94] sm:$0xff]
      %v2868 = vld [vmem:[%s12 + $0x9c] sm:$0xff]
      %v2869 = vld [vmem:[%s12 + $0xa4] sm:$0xf]
      %v2870 = vld [vmem:[%s12 + $0xa8] sm:$0xff]
      %v2871 = vld [vmem:[%s12 + $0xb0] sm:$0xff]
      %v2872 = vld [vmem:[%s12 + $0xb8] sm:$0xff]
      %v2873 = vld [vmem:[%s12 + $0xc0] sm:$0xf]
      %v2874 = vld [vmem:[%s12 + $0xc4] sm:$0xff]
      %v2875 = vld [vmem:[%s12 + $0xcc] sm:$0xff]
      %v2876 = vld [vmem:[%s12 + $0xd4] sm:$0xff]
      %v2877 = vld [vmem:[%s12 + $0xdc] sm:$0xf]
      %v2878 = vld [vmem:[%s12 + $0xe0] sm:$0xff]
      %v2879 = vld [vmem:[%s12 + $0xe8] sm:$0xff]
      %v2880 = vld [vmem:[%s12 + $0xf0] sm:$0xff]
      %v2881 = vld [vmem:[%s12 + $0xf8] sm:$0xf]
      %v2882 = vld [vmem:[%s12 + $0xfc] sm:$0xff]
      %v2883 = vld [vmem:[%s12 + $0x104] sm:$0xff]
      %v2884 = vld [vmem:[%s12 + $0x10c] sm:$0xff]
      %v2885 = vld [vmem:[%s12 + $0x114] sm:$0xf]
      %v2886 = vld [vmem:[%s12 + $0x118] sm:$0xff]
      %v2887 = vld [vmem:[%s12 + $0x120] sm:$0xff]
      %v2888 = vld [vmem:[%s12 + $0x128] sm:$0xff]
      %v2889 = vld [vmem:[%s12 + $0x130] sm:$0xf]
      %v2890 = vld [vmem:[%s12 + $0x134] sm:$0xff]
      %v2891 = vld [vmem:[%s12 + $0x13c] sm:$0xff]
      %v2892 = vld [vmem:[%s12 + $0x144] sm:$0xff]
      %v2893 = vld [vmem:[%s12 + $0x14c] sm:$0xf]
      %v2894 = vld [vmem:[%s12 + $0x150] sm:$0xff]
      %v2895 = vld [vmem:[%s12 + $0x158] sm:$0xff]
      %v2896 = vld [vmem:[%s12 + $0x160] sm:$0xff]
      %v2897 = vld [vmem:[%s12 + $0x168] sm:$0xf]
      %v2898 = vld [vmem:[%s12 + $0x16c] sm:$0xff]
      %v2899 = vld [vmem:[%s12 + $0x174] sm:$0xff]
      %v2900 = vld [vmem:[%s12 + $0x17c] sm:$0xff]
      %v2901 = vld [vmem:[%s12 + $0x184] sm:$0xf]
      %v2902 = vld [vmem:[%s12 + $0x188] sm:$0xff]
      %v2903 = vld [vmem:[%s12 + $0x190] sm:$0xff]
      %v2904 = vld [vmem:[%s12 + $0x198] sm:$0xff]
      %v2905 = vld [vmem:[%s12 + $0x1a0] sm:$0xf]
      %v2906 = vld [vmem:[%s12 + $0x1a4] sm:$0xff]
      %v2907 = vld [vmem:[%s12 + $0x1ac] sm:$0xff]
      %v2908 = vld [vmem:[%s12 + $0x1b4] sm:$0xff]
      %v2909 = vld [vmem:[%s12 + $0x1bc] sm:$0xf]
      %v2910 = vld [vmem:[%s12 + $0x1c0] sm:$0xff]
      %v2911 = vld [vmem:[%s12 + $0x1c8] sm:$0xff]
      %v2912 = vld [vmem:[%s12 + $0x1d0] sm:$0xff]
      %v2913 = vld [vmem:[%s12 + $0x1d8] sm:$0xf]
      %v2914 = vld [vmem:[%s12 + $0x1dc] sm:$0xff]
      %v2915 = vld [vmem:[%s12 + $0x1e4] sm:$0xff]
      %v2916 = vld [vmem:[%s12 + $0x1ec] sm:$0xff]
      %v2917 = vld [vmem:[%s12 + $0x1f4] sm:$0xf]
      %v2918 = vld [vmem:[%s12 + $0x1f8] sm:$0xff]
      %v2919 = vld [vmem:[%s12 + $0x200] sm:$0xff]
      %v2920 = vld [vmem:[%s12 + $0x208] sm:$0xff]
      %v2921 = vld [vmem:[%s12 + $0x210] sm:$0xf]
      %v2922 = vld [vmem:[%s12 + $0x214] sm:$0xff]
      %v2923 = vld [vmem:[%s12 + $0x21c] sm:$0xff]
      %v2924 = vld [vmem:[%s12 + $0x224] sm:$0xff]
      %v2925 = vld [vmem:[%s12 + $0x22c] sm:$0xf]
      %v2926 = vld [vmem:[%s12 + $0x230] sm:$0xff]
      %v2927 = vld [vmem:[%s12 + $0x238] sm:$0xff]
      %v2928 = vld [vmem:[%s12 + $0x240] sm:$0xff]
      %v2929 = vld [vmem:[%s12 + $0x248] sm:$0xf]
      %v2930 = vld [vmem:[%s12 + $0x24c] sm:$0xff]
      %v2931 = vld [vmem:[%s12 + $0x254] sm:$0xff]
      %v2932 = vld [vmem:[%s12 + $0x25c] sm:$0xff]
      %v2933 = vld [vmem:[%s12 + $0x264] sm:$0xf]
      %v2934 = vld [vmem:[%s12 + $0x268] sm:$0xff]
      %v2935 = vld [vmem:[%s12 + $0x270] sm:$0xff]
      %v2936 = vld [vmem:[%s12 + $0x278] sm:$0xff]
      %v2937 = vld [vmem:[%s12 + $0x280] sm:$0xf]
      %v2938 = vld [vmem:[%s12 + $0x284] sm:$0xff]
      %v2939 = vld [vmem:[%s12 + $0x28c] sm:$0xff]
      %v2940 = vld [vmem:[%s12 + $0x294] sm:$0xff]
      %v2941 = vld [vmem:[%s12 + $0x29c] sm:$0xf]
      %v2942 = vld [vmem:[%s12 + $0x2a0] sm:$0xff]
      %v2943 = vld [vmem:[%s12 + $0x2a8] sm:$0xff]
      %v2944 = vld [vmem:[%s12 + $0x2b0] sm:$0xff]
      %v2945 = vld [vmem:[%s12 + $0x2b8] sm:$0xf]
      %v2946 = vld [vmem:[%s12 + $0x2bc] sm:$0xff]
      %v2947 = vld [vmem:[%s12 + $0x2c4] sm:$0xff]
      %v2948 = vld [vmem:[%s12 + $0x2cc] sm:$0xff]
      %v2949 = vld [vmem:[%s12 + $0x2d4] sm:$0xf]
      %v2950 = vld [vmem:[%s12 + $0x2d8] sm:$0xff]
      %v2951 = vld [vmem:[%s12 + $0x2e0] sm:$0xff]
      %v2952 = vld [vmem:[%s12 + $0x2e8] sm:$0xff]
      %v2953 = vld [vmem:[%s12 + $0x2f0] sm:$0xf]
      %v2954 = vld [vmem:[%s12 + $0x2f4] sm:$0xff]
      %v2955 = vld [vmem:[%s12 + $0x2fc] sm:$0xff]
      %v2956 = vld [vmem:[%s12 + $0x304] sm:$0xff]
      %v2957 = vld [vmem:[%s12 + $0x30c] sm:$0xf]
      %v2958 = vld [vmem:[%s12 + $0x310] sm:$0xff]
      %v2959 = vld [vmem:[%s12 + $0x318] sm:$0xff]
      %v2960 = vld [vmem:[%s12 + $0x320] sm:$0xff]
      %v2961 = vld [vmem:[%s12 + $0x328] sm:$0xf]
      %v2962 = vld [vmem:[%s12 + $0x32c] sm:$0xff]
      %v2963 = vld [vmem:[%s12 + $0x334] sm:$0xff]
      %v2964 = vld [vmem:[%s12 + $0x33c] sm:$0xff]
      %v2965 = vld [vmem:[%s12 + $0x344] sm:$0xf]
      %v2966 = vld [vmem:[%s12 + $0x348] sm:$0xff]
      %v2967 = vld [vmem:[%s12 + $0x350] sm:$0xff]
      %v2968 = vld [vmem:[%s12 + $0x358] sm:$0xff]
      %v2969 = vld [vmem:[%s12 + $0x360] sm:$0xf]
      %v2970 = vld [vmem:[%s12 + $0x364] sm:$0xff]
      %v2971 = vld [vmem:[%s12 + $0x36c] sm:$0xff]
      %v2972 = vld [vmem:[%s12 + $0x374] sm:$0xff]
      %v2973 = vld [vmem:[%s12 + $0x37c] sm:$0xf]
      %v2974 = vld [vmem:[%s13] sm:$0xff]
      %v2976 = vlaneseq
      %v2977 = vshrl.u32 %v2976, 7
      %v2978 = vsub.s32 0, %v2977
      %v2979 = vrot.slane %v2974, %v2978
      %v2980 = vlaneseq
      %v2981 = vshrl.u32 %v2980, 7
      %v2982 = vsub.s32 1, %v2981
      %v2983 = vrot.slane %v2974, %v2982
      %v2984 = vlaneseq
      %v2985 = vshrl.u32 %v2984, 7
      %v2986 = vsub.s32 2, %v2985
      %v2987 = vrot.slane %v2974, %v2986
      %v2988 = vlaneseq
      %v2989 = vshrl.u32 %v2988, 7
      %v2990 = vsub.s32 3, %v2989
      %v2991 = vrot.slane %v2974, %v2990
      %v2992 = vlaneseq
      %v2993 = vshrl.u32 %v2992, 7
      %v2994 = vsub.s32 4, %v2993
      %v2995 = vrot.slane %v2974, %v2994
      %v2996 = vlaneseq
      %v2997 = vshrl.u32 %v2996, 7
      %v2998 = vsub.s32 5, %v2997
      %v2999 = vrot.slane %v2974, %v2998
      %v3000 = vlaneseq
      %v3001 = vshrl.u32 %v3000, 7
      %v3002 = vsub.s32 6, %v3001
      %v3003 = vrot.slane %v2974, %v3002
      %v3139 = vunpack.c.l.b16 %v2846
      %v3140 = vunpack.c.h.b16 %v2846
      %v3141 = vunpack.c.l.b16 %v2847
      %v3142 = vunpack.c.h.b16 %v2847
      %v3143 = vunpack.c.l.b16 %v2848
      %v3144 = vunpack.c.h.b16 %v2848
      %v3145 = vunpack.c.l.b16 %v2849
      %v3146 = vunpack.c.l.b16 %v2850
      %v3147 = vunpack.c.h.b16 %v2850
      %v3148 = vunpack.c.l.b16 %v2851
      %v3149 = vunpack.c.h.b16 %v2851
      %v3150 = vunpack.c.l.b16 %v2852
      %v3151 = vunpack.c.h.b16 %v2852
      %v3152 = vunpack.c.l.b16 %v2853
      %v3153 = vunpack.c.l.b16 %v2854
      %v3154 = vunpack.c.h.b16 %v2854
      %v3155 = vunpack.c.l.b16 %v2855
      %v3156 = vunpack.c.h.b16 %v2855
      %v3157 = vunpack.c.l.b16 %v2856
      %v3158 = vunpack.c.h.b16 %v2856
      %v3159 = vunpack.c.l.b16 %v2857
      %v3160 = vunpack.c.l.b16 %v2858
      %v3161 = vunpack.c.h.b16 %v2858
      %v3162 = vunpack.c.l.b16 %v2859
      %v3163 = vunpack.c.h.b16 %v2859
      %v3164 = vunpack.c.l.b16 %v2860
      %v3165 = vunpack.c.h.b16 %v2860
      %v3166 = vunpack.c.l.b16 %v2861
      %v3167 = vunpack.c.l.b16 %v2862
      %v3168 = vunpack.c.h.b16 %v2862
      %v3169 = vunpack.c.l.b16 %v2863
      %v3170 = vunpack.c.h.b16 %v2863
      %v3171 = vunpack.c.l.b16 %v2864
      %v3172 = vunpack.c.h.b16 %v2864
      %v3173 = vunpack.c.l.b16 %v2865
      %v3174 = vunpack.c.l.b16 %v2866
      %v3175 = vunpack.c.h.b16 %v2866
      %v3176 = vunpack.c.l.b16 %v2867
      %v3177 = vunpack.c.h.b16 %v2867
      %v3178 = vunpack.c.l.b16 %v2868
      %v3179 = vunpack.c.h.b16 %v2868
      %v3180 = vunpack.c.l.b16 %v2869
      %v3181 = vunpack.c.l.b16 %v2870
      %v3182 = vunpack.c.h.b16 %v2870
      %v3183 = vunpack.c.l.b16 %v2871
      %v3184 = vunpack.c.h.b16 %v2871
      %v3185 = vunpack.c.l.b16 %v2872
      %v3186 = vunpack.c.h.b16 %v2872
      %v3187 = vunpack.c.l.b16 %v2873
      %v3188 = vunpack.c.l.b16 %v2874
      %v3189 = vunpack.c.h.b16 %v2874
      %v3190 = vunpack.c.l.b16 %v2875
      %v3191 = vunpack.c.h.b16 %v2875
      %v3192 = vunpack.c.l.b16 %v2876
      %v3193 = vunpack.c.h.b16 %v2876
      %v3194 = vunpack.c.l.b16 %v2877
      %v3195 = vunpack.c.l.b16 %v2878
      %v3196 = vunpack.c.h.b16 %v2878
      %v3197 = vunpack.c.l.b16 %v2879
      %v3198 = vunpack.c.h.b16 %v2879
      %v3199 = vunpack.c.l.b16 %v2880
      %v3200 = vunpack.c.h.b16 %v2880
      %v3201 = vunpack.c.l.b16 %v2881
      %v3202 = vunpack.c.l.b16 %v2882
      %v3203 = vunpack.c.h.b16 %v2882
      %v3204 = vunpack.c.l.b16 %v2883
      %v3205 = vunpack.c.h.b16 %v2883
      %v3206 = vunpack.c.l.b16 %v2884
      %v3207 = vunpack.c.h.b16 %v2884
      %v3208 = vunpack.c.l.b16 %v2885
      %v3209 = vunpack.c.l.b16 %v2886
      %v3210 = vunpack.c.h.b16 %v2886
      %v3211 = vunpack.c.l.b16 %v2887
      %v3212 = vunpack.c.h.b16 %v2887
      %v3213 = vunpack.c.l.b16 %v2888
      %v3214 = vunpack.c.h.b16 %v2888
      %v3215 = vunpack.c.l.b16 %v2889
      %v3216 = vunpack.c.l.b16 %v2890
      %v3217 = vunpack.c.h.b16 %v2890
      %v3218 = vunpack.c.l.b16 %v2891
      %v3219 = vunpack.c.h.b16 %v2891
      %v3220 = vunpack.c.l.b16 %v2892
      %v3221 = vunpack.c.h.b16 %v2892
      %v3222 = vunpack.c.l.b16 %v2893
      %v3223 = vunpack.c.l.b16 %v2894
      %v3224 = vunpack.c.h.b16 %v2894
      %v3225 = vunpack.c.l.b16 %v2895
      %v3226 = vunpack.c.h.b16 %v2895
      %v3227 = vunpack.c.l.b16 %v2896
      %v3228 = vunpack.c.h.b16 %v2896
      %v3229 = vunpack.c.l.b16 %v2897
      %v3230 = vunpack.c.l.b16 %v2898
      %v3231 = vunpack.c.h.b16 %v2898
      %v3232 = vunpack.c.l.b16 %v2899
      %v3233 = vunpack.c.h.b16 %v2899
      %v3234 = vunpack.c.l.b16 %v2900
      %v3235 = vunpack.c.h.b16 %v2900
      %v3236 = vunpack.c.l.b16 %v2901
      %v3237 = vunpack.c.l.b16 %v2902
      %v3238 = vunpack.c.h.b16 %v2902
      %v3239 = vunpack.c.l.b16 %v2903
      %v3240 = vunpack.c.h.b16 %v2903
      %v3241 = vunpack.c.l.b16 %v2904
      %v3242 = vunpack.c.h.b16 %v2904
      %v3243 = vunpack.c.l.b16 %v2905
      %v3244 = vunpack.c.l.b16 %v2906
      %v3245 = vunpack.c.h.b16 %v2906
      %v3246 = vunpack.c.l.b16 %v2907
      %v3247 = vunpack.c.h.b16 %v2907
      %v3248 = vunpack.c.l.b16 %v2908
      %v3249 = vunpack.c.h.b16 %v2908
      %v3250 = vunpack.c.l.b16 %v2909
      %v3251 = vunpack.c.l.b16 %v2910
      %v3252 = vunpack.c.h.b16 %v2910
      %v3253 = vunpack.c.l.b16 %v2911
      %v3254 = vunpack.c.h.b16 %v2911
      %v3255 = vunpack.c.l.b16 %v2912
      %v3256 = vunpack.c.h.b16 %v2912
      %v3257 = vunpack.c.l.b16 %v2913
      %v3258 = vunpack.c.l.b16 %v2914
      %v3259 = vunpack.c.h.b16 %v2914
      %v3260 = vunpack.c.l.b16 %v2915
      %v3261 = vunpack.c.h.b16 %v2915
      %v3262 = vunpack.c.l.b16 %v2916
      %v3263 = vunpack.c.h.b16 %v2916
      %v3264 = vunpack.c.l.b16 %v2917
      %v3265 = vunpack.c.l.b16 %v2918
      %v3266 = vunpack.c.h.b16 %v2918
      %v3267 = vunpack.c.l.b16 %v2919
      %v3268 = vunpack.c.h.b16 %v2919
      %v3269 = vunpack.c.l.b16 %v2920
      %v3270 = vunpack.c.h.b16 %v2920
      %v3271 = vunpack.c.l.b16 %v2921
      %v3272 = vunpack.c.l.b16 %v2922
      %v3273 = vunpack.c.h.b16 %v2922
      %v3274 = vunpack.c.l.b16 %v2923
      %v3275 = vunpack.c.h.b16 %v2923
      %v3276 = vunpack.c.l.b16 %v2924
      %v3277 = vunpack.c.h.b16 %v2924
      %v3278 = vunpack.c.l.b16 %v2925
      %v3279 = vunpack.c.l.b16 %v2926
      %v3280 = vunpack.c.h.b16 %v2926
      %v3281 = vunpack.c.l.b16 %v2927
      %v3282 = vunpack.c.h.b16 %v2927
      %v3283 = vunpack.c.l.b16 %v2928
      %v3284 = vunpack.c.h.b16 %v2928
      %v3285 = vunpack.c.l.b16 %v2929
      %v3286 = vunpack.c.l.b16 %v2930
      %v3287 = vunpack.c.h.b16 %v2930
      %v3288 = vunpack.c.l.b16 %v2931
      %v3289 = vunpack.c.h.b16 %v2931
      %v3290 = vunpack.c.l.b16 %v2932
      %v3291 = vunpack.c.h.b16 %v2932
      %v3292 = vunpack.c.l.b16 %v2933
      %v3293 = vunpack.c.l.b16 %v2934
      %v3294 = vunpack.c.h.b16 %v2934
      %v3295 = vunpack.c.l.b16 %v2935
      %v3296 = vunpack.c.h.b16 %v2935
      %v3297 = vunpack.c.l.b16 %v2936
      %v3298 = vunpack.c.h.b16 %v2936
      %v3299 = vunpack.c.l.b16 %v2937
      %v3300 = vunpack.c.l.b16 %v2938
      %v3301 = vunpack.c.h.b16 %v2938
      %v3302 = vunpack.c.l.b16 %v2939
      %v3303 = vunpack.c.h.b16 %v2939
      %v3304 = vunpack.c.l.b16 %v2940
      %v3305 = vunpack.c.h.b16 %v2940
      %v3306 = vunpack.c.l.b16 %v2941
      %v3307 = vunpack.c.l.b16 %v2942
      %v3308 = vunpack.c.h.b16 %v2942
      %v3309 = vunpack.c.l.b16 %v2943
      %v3310 = vunpack.c.h.b16 %v2943
      %v3311 = vunpack.c.l.b16 %v2944
      %v3312 = vunpack.c.h.b16 %v2944
      %v3313 = vunpack.c.l.b16 %v2945
      %v3314 = vunpack.c.l.b16 %v2946
      %v3315 = vunpack.c.h.b16 %v2946
      %v3316 = vunpack.c.l.b16 %v2947
      %v3317 = vunpack.c.h.b16 %v2947
      %v3318 = vunpack.c.l.b16 %v2948
      %v3319 = vunpack.c.h.b16 %v2948
      %v3320 = vunpack.c.l.b16 %v2949
      %v3321 = vunpack.c.l.b16 %v2950
      %v3322 = vunpack.c.h.b16 %v2950
      %v3323 = vunpack.c.l.b16 %v2951
      %v3324 = vunpack.c.h.b16 %v2951
      %v3325 = vunpack.c.l.b16 %v2952
      %v3326 = vunpack.c.h.b16 %v2952
      %v3327 = vunpack.c.l.b16 %v2953
      %v3328 = vunpack.c.l.b16 %v2954
      %v3329 = vunpack.c.h.b16 %v2954
      %v3330 = vunpack.c.l.b16 %v2955
      %v3331 = vunpack.c.h.b16 %v2955
      %v3332 = vunpack.c.l.b16 %v2956
      %v3333 = vunpack.c.h.b16 %v2956
      %v3334 = vunpack.c.l.b16 %v2957
      %v3335 = vunpack.c.l.b16 %v2958
      %v3336 = vunpack.c.h.b16 %v2958
      %v3337 = vunpack.c.l.b16 %v2959
      %v3338 = vunpack.c.h.b16 %v2959
      %v3339 = vunpack.c.l.b16 %v2960
      %v3340 = vunpack.c.h.b16 %v2960
      %v3341 = vunpack.c.l.b16 %v2961
      %v3342 = vunpack.c.l.b16 %v2962
      %v3343 = vunpack.c.h.b16 %v2962
      %v3344 = vunpack.c.l.b16 %v2963
      %v3345 = vunpack.c.h.b16 %v2963
      %v3346 = vunpack.c.l.b16 %v2964
      %v3347 = vunpack.c.h.b16 %v2964
      %v3348 = vunpack.c.l.b16 %v2965
      %v3349 = vunpack.c.l.b16 %v2966
      %v3350 = vunpack.c.h.b16 %v2966
      %v3351 = vunpack.c.l.b16 %v2967
      %v3352 = vunpack.c.h.b16 %v2967
      %v3353 = vunpack.c.l.b16 %v2968
      %v3354 = vunpack.c.h.b16 %v2968
      %v3355 = vunpack.c.l.b16 %v2969
      %v3356 = vunpack.c.l.b16 %v2970
      %v3357 = vunpack.c.h.b16 %v2970
      %v3358 = vunpack.c.l.b16 %v2971
      %v3359 = vunpack.c.h.b16 %v2971
      %v3360 = vunpack.c.l.b16 %v2972
      %v3361 = vunpack.c.h.b16 %v2972
      %v3362 = vunpack.c.l.b16 %v2973
      %v3363 = vpack.c.b16 %v3146, %v3139
      %v3364 = vpack.c.b16 %v3147, %v3140
      %v3365 = vpack.c.b16 %v3148, %v3141
      %v3366 = vpack.c.b16 %v3149, %v3142
      %v3367 = vpack.c.b16 %v3150, %v3143
      %v3368 = vpack.c.b16 %v3151, %v3144
      %v3369 = vpack.c.b16 %v3152, %v3145
      %v3370 = vpack.c.b16 %v3160, %v3153
      %v3371 = vpack.c.b16 %v3161, %v3154
      %v3372 = vpack.c.b16 %v3162, %v3155
      %v3373 = vpack.c.b16 %v3163, %v3156
      %v3374 = vpack.c.b16 %v3164, %v3157
      %v3375 = vpack.c.b16 %v3165, %v3158
      %v3376 = vpack.c.b16 %v3166, %v3159
      %v3377 = vpack.c.b16 %v3174, %v3167
      %v3378 = vpack.c.b16 %v3175, %v3168
      %v3379 = vpack.c.b16 %v3176, %v3169
      %v3380 = vpack.c.b16 %v3177, %v3170
      %v3381 = vpack.c.b16 %v3178, %v3171
      %v3382 = vpack.c.b16 %v3179, %v3172
      %v3383 = vpack.c.b16 %v3180, %v3173
      %v3384 = vpack.c.b16 %v3188, %v3181
      %v3385 = vpack.c.b16 %v3189, %v3182
      %v3386 = vpack.c.b16 %v3190, %v3183
      %v3387 = vpack.c.b16 %v3191, %v3184
      %v3388 = vpack.c.b16 %v3192, %v3185
      %v3389 = vpack.c.b16 %v3193, %v3186
      %v3390 = vpack.c.b16 %v3194, %v3187
      %v3391 = vpack.c.b16 %v3202, %v3195
      %v3392 = vpack.c.b16 %v3203, %v3196
      %v3393 = vpack.c.b16 %v3204, %v3197
      %v3394 = vpack.c.b16 %v3205, %v3198
      %v3395 = vpack.c.b16 %v3206, %v3199
      %v3396 = vpack.c.b16 %v3207, %v3200
      %v3397 = vpack.c.b16 %v3208, %v3201
      %v3398 = vpack.c.b16 %v3216, %v3209
      %v3399 = vpack.c.b16 %v3217, %v3210
      %v3400 = vpack.c.b16 %v3218, %v3211
      %v3401 = vpack.c.b16 %v3219, %v3212
      %v3402 = vpack.c.b16 %v3220, %v3213
      %v3403 = vpack.c.b16 %v3221, %v3214
      %v3404 = vpack.c.b16 %v3222, %v3215
      %v3405 = vpack.c.b16 %v3230, %v3223
      %v3406 = vpack.c.b16 %v3231, %v3224
      %v3407 = vpack.c.b16 %v3232, %v3225
      %v3408 = vpack.c.b16 %v3233, %v3226
      %v3409 = vpack.c.b16 %v3234, %v3227
      %v3410 = vpack.c.b16 %v3235, %v3228
      %v3411 = vpack.c.b16 %v3236, %v3229
      %v3412 = vpack.c.b16 %v3244, %v3237
      %v3413 = vpack.c.b16 %v3245, %v3238
      %v3414 = vpack.c.b16 %v3246, %v3239
      %v3415 = vpack.c.b16 %v3247, %v3240
      %v3416 = vpack.c.b16 %v3248, %v3241
      %v3417 = vpack.c.b16 %v3249, %v3242
      %v3418 = vpack.c.b16 %v3250, %v3243
      %v3419 = vpack.c.b16 %v3258, %v3251
      %v3420 = vpack.c.b16 %v3259, %v3252
      %v3421 = vpack.c.b16 %v3260, %v3253
      %v3422 = vpack.c.b16 %v3261, %v3254
      %v3423 = vpack.c.b16 %v3262, %v3255
      %v3424 = vpack.c.b16 %v3263, %v3256
      %v3425 = vpack.c.b16 %v3264, %v3257
      %v3426 = vpack.c.b16 %v3272, %v3265
      %v3427 = vpack.c.b16 %v3273, %v3266
      %v3428 = vpack.c.b16 %v3274, %v3267
      %v3429 = vpack.c.b16 %v3275, %v3268
      %v3430 = vpack.c.b16 %v3276, %v3269
      %v3431 = vpack.c.b16 %v3277, %v3270
      %v3432 = vpack.c.b16 %v3278, %v3271
      %v3433 = vpack.c.b16 %v3286, %v3279
      %v3434 = vpack.c.b16 %v3287, %v3280
      %v3435 = vpack.c.b16 %v3288, %v3281
      %v3436 = vpack.c.b16 %v3289, %v3282
      %v3437 = vpack.c.b16 %v3290, %v3283
      %v3438 = vpack.c.b16 %v3291, %v3284
      %v3439 = vpack.c.b16 %v3292, %v3285
      %v3440 = vpack.c.b16 %v3300, %v3293
      %v3441 = vpack.c.b16 %v3301, %v3294
      %v3442 = vpack.c.b16 %v3302, %v3295
      %v3443 = vpack.c.b16 %v3303, %v3296
      %v3444 = vpack.c.b16 %v3304, %v3297
      %v3445 = vpack.c.b16 %v3305, %v3298
      %v3446 = vpack.c.b16 %v3306, %v3299
      %v3447 = vpack.c.b16 %v3314, %v3307
      %v3448 = vpack.c.b16 %v3315, %v3308
      %v3449 = vpack.c.b16 %v3316, %v3309
      %v3450 = vpack.c.b16 %v3317, %v3310
      %v3451 = vpack.c.b16 %v3318, %v3311
      %v3452 = vpack.c.b16 %v3319, %v3312
      %v3453 = vpack.c.b16 %v3320, %v3313
      %v3454 = vpack.c.b16 %v3328, %v3321
      %v3455 = vpack.c.b16 %v3329, %v3322
      %v3456 = vpack.c.b16 %v3330, %v3323
      %v3457 = vpack.c.b16 %v3331, %v3324
      %v3458 = vpack.c.b16 %v3332, %v3325
      %v3459 = vpack.c.b16 %v3333, %v3326
      %v3460 = vpack.c.b16 %v3334, %v3327
      %v3461 = vpack.c.b16 %v3342, %v3335
      %v3462 = vpack.c.b16 %v3343, %v3336
      %v3463 = vpack.c.b16 %v3344, %v3337
      %v3464 = vpack.c.b16 %v3345, %v3338
      %v3465 = vpack.c.b16 %v3346, %v3339
      %v3466 = vpack.c.b16 %v3347, %v3340
      %v3467 = vpack.c.b16 %v3348, %v3341
      %v3468 = vpack.c.b16 %v3356, %v3349
      %v3469 = vpack.c.b16 %v3357, %v3350
      %v3470 = vpack.c.b16 %v3358, %v3351
      %v3471 = vpack.c.b16 %v3359, %v3352
      %v3472 = vpack.c.b16 %v3360, %v3353
      %v3473 = vpack.c.b16 %v3361, %v3354
      %v3474 = vpack.c.b16 %v3362, %v3355
      %3587 = vmatprep.subr.bf16.mxu0 %v3364
      %3588 = vmatpush1.bf16.msra.mxu0 %v3363
      %3589 = vmatprep.subr.bf16.mxu0 %v3371
      %3590 = vmatpush1.bf16.msra.mxu0 %v3370
      %3591 = vmatprep.subr.bf16.mxu0 %v3378
      %3592 = vmatpush1.bf16.msra.mxu0 %v3377
      %3593 = vmatprep.subr.bf16.mxu0 %v3385
      %3594 = vmatpush1.bf16.msra.mxu0 %v3384
      %3595 = vmatprep.subr.bf16.mxu0 %v3392
      %3596 = vmatpush1.bf16.msra.mxu0 %v3391
      %3597 = vmatprep.subr.bf16.mxu0 %v3399
      %3598 = vmatpush1.bf16.msra.mxu0 %v3398
      %3599 = vmatprep.subr.bf16.mxu0 %v3406
      %3600 = vmatpush1.bf16.msra.mxu0 %v3405
      %3601 = vmatprep.subr.bf16.mxu0 %v3413
      %3602 = vmatpush1.bf16.msra.mxu0 %v3412
      %3603 = vmatprep.subr.bf16.mxu0 %v3420
      %3604 = vmatpush1.bf16.msra.mxu0 %v3419
      %3605 = vmatprep.subr.bf16.mxu0 %v3427
      %3606 = vmatpush1.bf16.msra.mxu0 %v3426
      %3607 = vmatprep.subr.bf16.mxu0 %v3434
      %3608 = vmatpush1.bf16.msra.mxu0 %v3433
      %3609 = vmatprep.subr.bf16.mxu0 %v3441
      %3610 = vmatpush1.bf16.msra.mxu0 %v3440
      %3611 = vmatprep.subr.bf16.mxu0 %v3448
      %3612 = vmatpush1.bf16.msra.mxu0 %v3447
      %3613 = vmatprep.subr.bf16.mxu0 %v3455
      %3614 = vmatpush1.bf16.msra.mxu0 %v3454
      %3615 = vmatprep.subr.bf16.mxu0 %v3462
      %3616 = vmatpush1.bf16.msra.mxu0 %v3461
      %3617 = vmatprep.subr.bf16.mxu0 %v3469
      %3618 = vmatpush1.bf16.msra.mxu0 %v3468
      %3619 = vmatprep.mubr.bf16.mxu0 %v2839
      %3620 = vmatmul.mubr.bf16.gmra.mrb[0].mxu0 %v2838
      %v3621 = vpop.f32.mrb[0].mxu0
      %v3622 = vadd.f32 %v2979, %v3621
      %v3623 = vpop.f32.mrb[0].mxu0
      %v3624 = vadd.f32 %v2983, %v3623
      %v3625 = vpop.f32.mrb[0].mxu0
      %v3626 = vadd.f32 %v2979, %v3625
      %v3627 = vpop.f32.mrb[0].mxu0
      %v3628 = vadd.f32 %v2983, %v3627
      %3629 = vmatprep.mubr.bf16.mxu0 %v2841
      %3630 = vmatmul.mubr.bf16.gmra.mrb[0].mxu0 %v2840
      %v3631 = vpop.f32.mrb[0].mxu0
      %v3632 = vadd.f32 %v2979, %v3631
      %v3633 = vpop.f32.mrb[0].mxu0
      %v3634 = vadd.f32 %v2983, %v3633
      %v3635 = vpop.f32.mrb[0].mxu0
      %v3636 = vadd.f32 %v2979, %v3635
      %v3637 = vpop.f32.mrb[0].mxu0
      %v3638 = vadd.f32 %v2983, %v3637
      %3639 = vmatprep.mubr.bf16.mxu0 %v2843
      %3640 = vmatmul.mubr.bf16.gmra.mrb[0].mxu0 %v2842
      %v3641 = vpop.f32.mrb[0].mxu0
      %v3642 = vadd.f32 %v2979, %v3641
      %v3643 = vpop.f32.mrb[0].mxu0
      %v3644 = vadd.f32 %v2983, %v3643
      %v3645 = vpop.f32.mrb[0].mxu0
      %v3646 = vadd.f32 %v2979, %v3645
      %v3647 = vpop.f32.mrb[0].mxu0
      %v3648 = vadd.f32 %v2983, %v3647
      %3649 = vmatprep.mubr.bf16.mxu0 %v2845
      %3650 = vmatmul.mubr.bf16.gmra.mrb[0].mxu0 %v2844
      %v3651 = vpop.f32.mrb[0].mxu0
      %v3652 = vadd.f32 %v2979, %v3651
      %v3653 = vpop.f32.mrb[0].mxu0
      %v3654 = vadd.f32 %v2983, %v3653
      %v3655 = vpop.f32.mrb[0].mxu0
      %v3656 = vadd.f32 %v2979, %v3655
      %v3657 = vpop.f32.mrb[0].mxu0
      %v3658 = vadd.f32 %v2983, %v3657
      %3659 = vdwg.mxu0
      %3660 = vmatprep.subr.bf16.mxu0 %v3366
      %3661 = vmatpush1.bf16.msra.mxu0 %v3365
      %3662 = vmatprep.subr.bf16.mxu0 %v3373
      %3663 = vmatpush1.bf16.msra.mxu0 %v3372
      %3664 = vmatprep.subr.bf16.mxu0 %v3380
      %3665 = vmatpush1.bf16.msra.mxu0 %v3379
      %3666 = vmatprep.subr.bf16.mxu0 %v3387
      %3667 = vmatpush1.bf16.msra.mxu0 %v3386
      %3668 = vmatprep.subr.bf16.mxu0 %v3394
      %3669 = vmatpush1.bf16.msra.mxu0 %v3393
      %3670 = vmatprep.subr.bf16.mxu0 %v3401
      %3671 = vmatpush1.bf16.msra.mxu0 %v3400
      %3672 = vmatprep.subr.bf16.mxu0 %v3408
      %3673 = vmatpush1.bf16.msra.mxu0 %v3407
      %3674 = vmatprep.subr.bf16.mxu0 %v3415
      %3675 = vmatpush1.bf16.msra.mxu0 %v3414
      %3676 = vmatprep.subr.bf16.mxu0 %v3422
      %3677 = vmatpush1.bf16.msra.mxu0 %v3421
      %3678 = vmatprep.subr.bf16.mxu0 %v3429
      %3679 = vmatpush1.bf16.msra.mxu0 %v3428
      %3680 = vmatprep.subr.bf16.mxu0 %v3436
      %3681 = vmatpush1.bf16.msra.mxu0 %v3435
      %3682 = vmatprep.subr.bf16.mxu0 %v3443
      %3683 = vmatpush1.bf16.msra.mxu0 %v3442
      %3684 = vmatprep.subr.bf16.mxu0 %v3450
      %3685 = vmatpush1.bf16.msra.mxu0 %v3449
      %3686 = vmatprep.subr.bf16.mxu0 %v3457
      %3687 = vmatpush1.bf16.msra.mxu0 %v3456
      %3688 = vmatprep.subr.bf16.mxu0 %v3464
      %3689 = vmatpush1.bf16.msra.mxu0 %v3463
      %3690 = vmatprep.subr.bf16.mxu0 %v3471
      %3691 = vmatpush1.bf16.msra.mxu0 %v3470
      %3692 = vmatprep.mubr.bf16.mxu0 %v2839
      %3693 = vmatmul.mubr.bf16.gmra.mrb[0].mxu0 %v2838
      %v3694 = vpop.f32.mrb[0].mxu0
      %v3695 = vadd.f32 %v2987, %v3694
      %v3696 = vpop.f32.mrb[0].mxu0
      %v3697 = vadd.f32 %v2991, %v3696
      %v3698 = vpop.f32.mrb[0].mxu0
      %v3699 = vadd.f32 %v2987, %v3698
      %v3700 = vpop.f32.mrb[0].mxu0
      %v3701 = vadd.f32 %v2991, %v3700
      %3702 = vmatprep.mubr.bf16.mxu0 %v2841
      %3703 = vmatmul.mubr.bf16.gmra.mrb[0].mxu0 %v2840
      %v3704 = vpop.f32.mrb[0].mxu0
      %v3705 = vadd.f32 %v2987, %v3704
      %v3706 = vpop.f32.mrb[0].mxu0
      %v3707 = vadd.f32 %v2991, %v3706
      %v3708 = vpop.f32.mrb[0].mxu0
      %v3709 = vadd.f32 %v2987, %v3708
      %v3710 = vpop.f32.mrb[0].mxu0
      %v3711 = vadd.f32 %v2991, %v3710
      %3712 = vmatprep.mubr.bf16.mxu0 %v2843
      %3713 = vmatmul.mubr.bf16.gmra.mrb[0].mxu0 %v2842
      %v3714 = vpop.f32.mrb[0].mxu0
      %v3715 = vadd.f32 %v2987, %v3714
      %v3716 = vpop.f32.mrb[0].mxu0
      %v3717 = vadd.f32 %v2991, %v3716
      %v3718 = vpop.f32.mrb[0].mxu0
      %v3719 = vadd.f32 %v2987, %v3718
      %v3720 = vpop.f32.mrb[0].mxu0
      %v3721 = vadd.f32 %v2991, %v3720
      %3722 = vmatprep.mubr.bf16.mxu0 %v2845
      %3723 = vmatmul.mubr.bf16.gmra.mrb[0].mxu0 %v2844
      %v3724 = vpop.f32.mrb[0].mxu0
      %v3725 = vadd.f32 %v2987, %v3724
      %v3726 = vpop.f32.mrb[0].mxu0
      %v3727 = vadd.f32 %v2991, %v3726
      %v3728 = vpop.f32.mrb[0].mxu0
      %v3729 = vadd.f32 %v2987, %v3728
      %v3730 = vpop.f32.mrb[0].mxu0
      %v3731 = vadd.f32 %v2991, %v3730
      %3732 = vdwg.mxu0
      %3733 = vmatprep.subr.bf16.mxu0 %v3368
      %3734 = vmatpush1.bf16.msra.mxu0 %v3367
      %3735 = vmatprep.subr.bf16.mxu0 %v3375
      %3736 = vmatpush1.bf16.msra.mxu0 %v3374
      %3737 = vmatprep.subr.bf16.mxu0 %v3382
      %3738 = vmatpush1.bf16.msra.mxu0 %v3381
      %3739 = vmatprep.subr.bf16.mxu0 %v3389
      %3740 = vmatpush1.bf16.msra.mxu0 %v3388
      %3741 = vmatprep.subr.bf16.mxu0 %v3396
      %3742 = vmatpush1.bf16.msra.mxu0 %v3395
      %3743 = vmatprep.subr.bf16.mxu0 %v3403
      %3744 = vmatpush1.bf16.msra.mxu0 %v3402
      %3745 = vmatprep.subr.bf16.mxu0 %v3410
      %3746 = vmatpush1.bf16.msra.mxu0 %v3409
      %3747 = vmatprep.subr.bf16.mxu0 %v3417
      %3748 = vmatpush1.bf16.msra.mxu0 %v3416
      %3749 = vmatprep.subr.bf16.mxu0 %v3424
      %3750 = vmatpush1.bf16.msra.mxu0 %v3423
      %3751 = vmatprep.subr.bf16.mxu0 %v3431
      %3752 = vmatpush1.bf16.msra.mxu0 %v3430
      %3753 = vmatprep.subr.bf16.mxu0 %v3438
      %3754 = vmatpush1.bf16.msra.mxu0 %v3437
      %3755 = vmatprep.subr.bf16.mxu0 %v3445
      %3756 = vmatpush1.bf16.msra.mxu0 %v3444
      %3757 = vmatprep.subr.bf16.mxu0 %v3452
      %3758 = vmatpush1.bf16.msra.mxu0 %v3451
      %3759 = vmatprep.subr.bf16.mxu0 %v3459
      %3760 = vmatpush1.bf16.msra.mxu0 %v3458
      %3761 = vmatprep.subr.bf16.mxu0 %v3466
      %3762 = vmatpush1.bf16.msra.mxu0 %v3465
      %3763 = vmatprep.subr.bf16.mxu0 %v3473
      %3764 = vmatpush1.bf16.msra.mxu0 %v3472
      %3765 = vmatprep.mubr.bf16.mxu0 %v2839
      %3766 = vmatmul.mubr.bf16.gmra.mrb[0].mxu0 %v2838
      %v3767 = vpop.f32.mrb[0].mxu0
      %v3768 = vadd.f32 %v2995, %v3767
      %v3769 = vpop.f32.mrb[0].mxu0
      %v3770 = vadd.f32 %v2999, %v3769
      %v3771 = vpop.f32.mrb[0].mxu0
      %v3772 = vadd.f32 %v2995, %v3771
      %v3773 = vpop.f32.mrb[0].mxu0
      %v3774 = vadd.f32 %v2999, %v3773
      %3775 = vmatprep.mubr.bf16.mxu0 %v2841
      %3776 = vmatmul.mubr.bf16.gmra.mrb[0].mxu0 %v2840
      %v3777 = vpop.f32.mrb[0].mxu0
      %v3778 = vadd.f32 %v2995, %v3777
      %v3779 = vpop.f32.mrb[0].mxu0
      %v3780 = vadd.f32 %v2999, %v3779
      %v3781 = vpop.f32.mrb[0].mxu0
      %v3782 = vadd.f32 %v2995, %v3781
      %v3783 = vpop.f32.mrb[0].mxu0
      %v3784 = vadd.f32 %v2999, %v3783
      %3785 = vmatprep.mubr.bf16.mxu0 %v2843
      %3786 = vmatmul.mubr.bf16.gmra.mrb[0].mxu0 %v2842
      %v3787 = vpop.f32.mrb[0].mxu0
      %v3788 = vadd.f32 %v2995, %v3787
      %v3789 = vpop.f32.mrb[0].mxu0
      %v3790 = vadd.f32 %v2999, %v3789
      %v3791 = vpop.f32.mrb[0].mxu0
      %v3792 = vadd.f32 %v2995, %v3791
      %v3793 = vpop.f32.mrb[0].mxu0
      %v3794 = vadd.f32 %v2999, %v3793
      %3795 = vmatprep.mubr.bf16.mxu0 %v2845
      %3796 = vmatmul.mubr.bf16.gmra.mrb[0].mxu0 %v2844
      %v3797 = vpop.f32.mrb[0].mxu0
      %v3798 = vadd.f32 %v2995, %v3797
      %v3799 = vpop.f32.mrb[0].mxu0
      %v3800 = vadd.f32 %v2999, %v3799
      %v3801 = vpop.f32.mrb[0].mxu0
      %v3802 = vadd.f32 %v2995, %v3801
      %v3803 = vpop.f32.mrb[0].mxu0
      %v3804 = vadd.f32 %v2999, %v3803
      %3805 = vdwg.mxu0
      %3806 = vmatprep.subr.bf16.mxu0 0
      %3807 = vmatpush1.bf16.msra.mxu0 %v3369
      %3808 = vmatprep.subr.bf16.mxu0 0
      %3809 = vmatpush1.bf16.msra.mxu0 %v3376
      %3810 = vmatprep.subr.bf16.mxu0 0
      %3811 = vmatpush1.bf16.msra.mxu0 %v3383
      %3812 = vmatprep.subr.bf16.mxu0 0
      %3813 = vmatpush1.bf16.msra.mxu0 %v3390
      %3814 = vmatprep.subr.bf16.mxu0 0
      %3815 = vmatpush1.bf16.msra.mxu0 %v3397
      %3816 = vmatprep.subr.bf16.mxu0 0
      %3817 = vmatpush1.bf16.msra.mxu0 %v3404
      %3818 = vmatprep.subr.bf16.mxu0 0
      %3819 = vmatpush1.bf16.msra.mxu0 %v3411
      %3820 = vmatprep.subr.bf16.mxu0 0
      %3821 = vmatpush1.bf16.msra.mxu0 %v3418
      %3822 = vmatprep.subr.bf16.mxu0 0
      %3823 = vmatpush1.bf16.msra.mxu0 %v3425
      %3824 = vmatprep.subr.bf16.mxu0 0
      %3825 = vmatpush1.bf16.msra.mxu0 %v3432
      %3826 = vmatprep.subr.bf16.mxu0 0
      %3827 = vmatpush1.bf16.msra.mxu0 %v3439
      %3828 = vmatprep.subr.bf16.mxu0 0
      %3829 = vmatpush1.bf16.msra.mxu0 %v3446
      %3830 = vmatprep.subr.bf16.mxu0 0
      %3831 = vmatpush1.bf16.msra.mxu0 %v3453
      %3832 = vmatprep.subr.bf16.mxu0 0
      %3833 = vmatpush1.bf16.msra.mxu0 %v3460
      %3834 = vmatprep.subr.bf16.mxu0 0
      %3835 = vmatpush1.bf16.msra.mxu0 %v3467
      %3836 = vmatprep.subr.bf16.mxu0 0
      %3837 = vmatpush1.bf16.msra.mxu0 %v3474
      %3838 = vmatprep.mubr.bf16.mxu0 %v2839
      %3839 = vmatmul.mubr.bf16.gmra.mrb[0].mxu0 %v2838
      %v3840 = vpop.f32.mrb[0].mxu0
      %v3841 = vadd.f32 %v3003, %v3840
      %v3842 = vpop.f32.mrb[0].mxu0
      %v3843 = vpop.f32.mrb[0].mxu0
      %v3844 = vadd.f32 %v3003, %v3843
      %v3845 = vpop.f32.mrb[0].mxu0
      %3846 = vmatprep.mubr.bf16.mxu0 %v2841
      %3847 = vmatmul.mubr.bf16.gmra.mrb[0].mxu0 %v2840
      %v3848 = vpop.f32.mrb[0].mxu0
      %v3849 = vadd.f32 %v3003, %v3848
      %v3850 = vpop.f32.mrb[0].mxu0
      %v3851 = vpop.f32.mrb[0].mxu0
      %v3852 = vadd.f32 %v3003, %v3851
      %v3853 = vpop.f32.mrb[0].mxu0
      %3854 = vmatprep.mubr.bf16.mxu0 %v2843
      %3855 = vmatmul.mubr.bf16.gmra.mrb[0].mxu0 %v2842
      %v3856 = vpop.f32.mrb[0].mxu0
      %v3857 = vadd.f32 %v3003, %v3856
      %v3858 = vpop.f32.mrb[0].mxu0
      %v3859 = vpop.f32.mrb[0].mxu0
      %v3860 = vadd.f32 %v3003, %v3859
      %v3861 = vpop.f32.mrb[0].mxu0
      %3862 = vmatprep.mubr.bf16.mxu0 %v2845
      %3863 = vmatmul.mubr.bf16.gmra.mrb[0].mxu0 %v2844
      %v3864 = vpop.f32.mrb[0].mxu0
      %v3865 = vadd.f32 %v3003, %v3864
      %v3866 = vpop.f32.mrb[0].mxu0
      %v3867 = vpop.f32.mrb[0].mxu0
      %v3868 = vadd.f32 %v3003, %v3867
      %v3869 = vpop.f32.mrb[0].mxu0
      %3870 = vdwg.mxu0
      %v3871 = vxor.u32 %v3622, 2147483648
      %v3872 = vxor.u32 %v3624, 2147483648
      %v3873 = vxor.u32 %v3695, 2147483648
      %v3874 = vxor.u32 %v3697, 2147483648
      %v3875 = vxor.u32 %v3768, 2147483648
      %v3876 = vxor.u32 %v3770, 2147483648
      %v3877 = vxor.u32 %v3841, 2147483648
      %v3878 = vxor.u32 %v3626, 2147483648
      %v3879 = vxor.u32 %v3628, 2147483648
      %v3880 = vxor.u32 %v3699, 2147483648
      %v3881 = vxor.u32 %v3701, 2147483648
      %v3882 = vxor.u32 %v3772, 2147483648
      %v3883 = vxor.u32 %v3774, 2147483648
      %v3884 = vxor.u32 %v3844, 2147483648
      %v3885 = vxor.u32 %v3632, 2147483648
      %v3886 = vxor.u32 %v3634, 2147483648
      %v3887 = vxor.u32 %v3705, 2147483648
      %v3888 = vxor.u32 %v3707, 2147483648
      %v3889 = vxor.u32 %v3778, 2147483648
      %v3890 = vxor.u32 %v3780, 2147483648
      %v3891 = vxor.u32 %v3849, 2147483648
      %v3892 = vxor.u32 %v3636, 2147483648
      %v3893 = vxor.u32 %v3638, 2147483648
      %v3894 = vxor.u32 %v3709, 2147483648
      %v3895 = vxor.u32 %v3711, 2147483648
      %v3896 = vxor.u32 %v3782, 2147483648
      %v3897 = vxor.u32 %v3784, 2147483648
      %v3898 = vxor.u32 %v3852, 2147483648
      %v3899 = vxor.u32 %v3642, 2147483648
      %v3900 = vxor.u32 %v3644, 2147483648
      %v3901 = vxor.u32 %v3715, 2147483648
      %v3902 = vxor.u32 %v3717, 2147483648
      %v3903 = vxor.u32 %v3788, 2147483648
      %v3904 = vxor.u32 %v3790, 2147483648
      %v3905 = vxor.u32 %v3857, 2147483648
      %v3906 = vxor.u32 %v3646, 2147483648
      %v3907 = vxor.u32 %v3648, 2147483648
      %v3908 = vxor.u32 %v3719, 2147483648
      %v3909 = vxor.u32 %v3721, 2147483648
      %v3910 = vxor.u32 %v3792, 2147483648
      %v3911 = vxor.u32 %v3794, 2147483648
      %v3912 = vxor.u32 %v3860, 2147483648
      %v3913 = vxor.u32 %v3652, 2147483648
      %v3914 = vxor.u32 %v3654, 2147483648
      %v3915 = vxor.u32 %v3725, 2147483648
      %v3916 = vxor.u32 %v3727, 2147483648
      %v3917 = vxor.u32 %v3798, 2147483648
      %v3918 = vxor.u32 %v3800, 2147483648
      %v3919 = vxor.u32 %v3865, 2147483648
      %v3920 = vxor.u32 %v3656, 2147483648
      %v3921 = vxor.u32 %v3658, 2147483648
      %v3922 = vxor.u32 %v3729, 2147483648
      %v3923 = vxor.u32 %v3731, 2147483648
      %v3924 = vxor.u32 %v3802, 2147483648
      %v3925 = vxor.u32 %v3804, 2147483648
      %v3926 = vxor.u32 %v3868, 2147483648
      %v3927 = vmul.f32 %v3871, 1.442695
      %v3928 = vpow.pop %v3927
      %v3929 = vmul.f32 %v3872, 1.442695
      %v3930 = vpow.pop %v3929
      %v3931 = vmul.f32 %v3873, 1.442695
      %v3932 = vpow.pop %v3931
      %v3933 = vmul.f32 %v3874, 1.442695
      %v3934 = vpow.pop %v3933
      %v3935 = vmul.f32 %v3875, 1.442695
      %v3936 = vpow.pop %v3935
      %v3937 = vmul.f32 %v3876, 1.442695
      %v3938 = vpow.pop %v3937
      %v3939 = vmul.f32 %v3877, 1.442695
      %v3940 = vpow.pop %v3939
      %v3941 = vmul.f32 %v3878, 1.442695
      %v3942 = vpow.pop %v3941
      %v3943 = vmul.f32 %v3879, 1.442695
      %v3944 = vpow.pop %v3943
      %v3945 = vmul.f32 %v3880, 1.442695
      %v3946 = vpow.pop %v3945
      %v3947 = vmul.f32 %v3881, 1.442695
      %v3948 = vpow.pop %v3947
      %v3949 = vmul.f32 %v3882, 1.442695
      %v3950 = vpow.pop %v3949
      %v3951 = vmul.f32 %v3883, 1.442695
      %v3952 = vpow.pop %v3951
      %v3953 = vmul.f32 %v3884, 1.442695
      %v3954 = vpow.pop %v3953
      %v3955 = vmul.f32 %v3885, 1.442695
      %v3956 = vpow.pop %v3955
      %v3957 = vmul.f32 %v3886, 1.442695
      %v3958 = vpow.pop %v3957
      %v3959 = vmul.f32 %v3887, 1.442695
      %v3960 = vpow.pop %v3959
      %v3961 = vmul.f32 %v3888, 1.442695
      %v3962 = vpow.pop %v3961
      %v3963 = vmul.f32 %v3889, 1.442695
      %v3964 = vpow.pop %v3963
      %v3965 = vmul.f32 %v3890, 1.442695
      %v3966 = vpow.pop %v3965
      %v3967 = vmul.f32 %v3891, 1.442695
      %v3968 = vpow.pop %v3967
      %v3969 = vmul.f32 %v3892, 1.442695
      %v3970 = vpow.pop %v3969
      %v3971 = vmul.f32 %v3893, 1.442695
      %v3972 = vpow.pop %v3971
      %v3973 = vmul.f32 %v3894, 1.442695
      %v3974 = vpow.pop %v3973
      %v3975 = vmul.f32 %v3895, 1.442695
      %v3976 = vpow.pop %v3975
      %v3977 = vmul.f32 %v3896, 1.442695
      %v3978 = vpow.pop %v3977
      %v3979 = vmul.f32 %v3897, 1.442695
      %v3980 = vpow.pop %v3979
      %v3981 = vmul.f32 %v3898, 1.442695
      %v3982 = vpow.pop %v3981
      %v3983 = vmul.f32 %v3899, 1.442695
      %v3984 = vpow.pop %v3983
      %v3985 = vmul.f32 %v3900, 1.442695
      %v3986 = vpow.pop %v3985
      %v3987 = vmul.f32 %v3901, 1.442695
      %v3988 = vpow.pop %v3987
      %v3989 = vmul.f32 %v3902, 1.442695
      %v3990 = vpow.pop %v3989
      %v3991 = vmul.f32 %v3903, 1.442695
      %v3992 = vpow.pop %v3991
      %v3993 = vmul.f32 %v3904, 1.442695
      %v3994 = vpow.pop %v3993
      %v3995 = vmul.f32 %v3905, 1.442695
      %v3996 = vpow.pop %v3995
      %v3997 = vmul.f32 %v3906, 1.442695
      %v3998 = vpow.pop %v3997
      %v3999 = vmul.f32 %v3907, 1.442695
      %v4000 = vpow.pop %v3999
      %v4001 = vmul.f32 %v3908, 1.442695
      %v4002 = vpow.pop %v4001
      %v4003 = vmul.f32 %v3909, 1.442695
      %v4004 = vpow.pop %v4003
      %v4005 = vmul.f32 %v3910, 1.442695
      %v4006 = vpow.pop %v4005
      %v4007 = vmul.f32 %v3911, 1.442695
      %v4008 = vpow.pop %v4007
      %v4009 = vmul.f32 %v3912, 1.442695
      %v4010 = vpow.pop %v4009
      %v4011 = vmul.f32 %v3913, 1.442695
      %v4012 = vpow.pop %v4011
      %v4013 = vmul.f32 %v3914, 1.442695
      %v4014 = vpow.pop %v4013
      %v4015 = vmul.f32 %v3915, 1.442695
      %v4016 = vpow.pop %v4015
      %v4017 = vmul.f32 %v3916, 1.442695
      %v4018 = vpow.pop %v4017
      %v4019 = vmul.f32 %v3917, 1.442695
      %v4020 = vpow.pop %v4019
      %v4021 = vmul.f32 %v3918, 1.442695
      %v4022 = vpow.pop %v4021
      %v4023 = vmul.f32 %v3919, 1.442695
      %v4024 = vpow.pop %v4023
      %v4025 = vmul.f32 %v3920, 1.442695
      %v4026 = vpow.pop %v4025
      %v4027 = vmul.f32 %v3921, 1.442695
      %v4028 = vpow.pop %v4027
      %v4029 = vmul.f32 %v3922, 1.442695
      %v4030 = vpow.pop %v4029
      %v4031 = vmul.f32 %v3923, 1.442695
      %v4032 = vpow.pop %v4031
      %v4033 = vmul.f32 %v3924, 1.442695
      %v4034 = vpow.pop %v4033
      %v4035 = vmul.f32 %v3925, 1.442695
      %v4036 = vpow.pop %v4035
      %v4037 = vmul.f32 %v3926, 1.442695
      %v4038 = vpow.pop %v4037
      %v4039 = vadd.f32 %v3928, 1.0
      %v4040 = vadd.f32 %v3930, 1.0
      %v4041 = vadd.f32 %v3932, 1.0
      %v4042 = vadd.f32 %v3934, 1.0
      %v4043 = vadd.f32 %v3936, 1.0
      %v4044 = vadd.f32 %v3938, 1.0
      %v4045 = vadd.f32 %v3940, 1.0
      %v4046 = vadd.f32 %v3942, 1.0
      %v4047 = vadd.f32 %v3944, 1.0
      %v4048 = vadd.f32 %v3946, 1.0
      %v4049 = vadd.f32 %v3948, 1.0
      %v4050 = vadd.f32 %v3950, 1.0
      %v4051 = vadd.f32 %v3952, 1.0
      %v4052 = vadd.f32 %v3954, 1.0
      %v4053 = vadd.f32 %v3956, 1.0
      %v4054 = vadd.f32 %v3958, 1.0
      %v4055 = vadd.f32 %v3960, 1.0
      %v4056 = vadd.f32 %v3962, 1.0
      %v4057 = vadd.f32 %v3964, 1.0
      %v4058 = vadd.f32 %v3966, 1.0
      %v4059 = vadd.f32 %v3968, 1.0
      %v4060 = vadd.f32 %v3970, 1.0
      %v4061 = vadd.f32 %v3972, 1.0
      %v4062 = vadd.f32 %v3974, 1.0
      %v4063 = vadd.f32 %v3976, 1.0
      %v4064 = vadd.f32 %v3978, 1.0
      %v4065 = vadd.f32 %v3980, 1.0
      %v4066 = vadd.f32 %v3982, 1.0
      %v4067 = vadd.f32 %v3984, 1.0
      %v4068 = vadd.f32 %v3986, 1.0
      %v4069 = vadd.f32 %v3988, 1.0
      %v4070 = vadd.f32 %v3990, 1.0
      %v4071 = vadd.f32 %v3992, 1.0
      %v4072 = vadd.f32 %v3994, 1.0
      %v4073 = vadd.f32 %v3996, 1.0
      %v4074 = vadd.f32 %v3998, 1.0
      %v4075 = vadd.f32 %v4000, 1.0
      %v4076 = vadd.f32 %v4002, 1.0
      %v4077 = vadd.f32 %v4004, 1.0
      %v4078 = vadd.f32 %v4006, 1.0
      %v4079 = vadd.f32 %v4008, 1.0
      %v4080 = vadd.f32 %v4010, 1.0
      %v4081 = vadd.f32 %v4012, 1.0
      %v4082 = vadd.f32 %v4014, 1.0
      %v4083 = vadd.f32 %v4016, 1.0
      %v4084 = vadd.f32 %v4018, 1.0
      %v4085 = vadd.f32 %v4020, 1.0
      %v4086 = vadd.f32 %v4022, 1.0
      %v4087 = vadd.f32 %v4024, 1.0
      %v4088 = vadd.f32 %v4026, 1.0
      %v4089 = vadd.f32 %v4028, 1.0
      %v4090 = vadd.f32 %v4030, 1.0
      %v4091 = vadd.f32 %v4032, 1.0
      %v4092 = vadd.f32 %v4034, 1.0
      %v4093 = vadd.f32 %v4036, 1.0
      %v4094 = vadd.f32 %v4038, 1.0
      %v4095 = vrcp.pop %v4039
      %v4096 = vmul.f32 1.0, %v4095
      %v4097 = vrcp.pop %v4040
      %v4098 = vmul.f32 1.0, %v4097
      %v4099 = vrcp.pop %v4041
      %v4100 = vmul.f32 1.0, %v4099
      %v4101 = vrcp.pop %v4042
      %v4102 = vmul.f32 1.0, %v4101
      %v4103 = vrcp.pop %v4043
      %v4104 = vmul.f32 1.0, %v4103
      %v4105 = vrcp.pop %v4044
      %v4106 = vmul.f32 1.0, %v4105
      %v4107 = vrcp.pop %v4045
      %v4108 = vmul.f32 1.0, %v4107
      %v4109 = vrcp.pop %v4046
      %v4110 = vmul.f32 1.0, %v4109
      %v4111 = vrcp.pop %v4047
      %v4112 = vmul.f32 1.0, %v4111
      %v4113 = vrcp.pop %v4048
      %v4114 = vmul.f32 1.0, %v4113
      %v4115 = vrcp.pop %v4049
      %v4116 = vmul.f32 1.0, %v4115
      %v4117 = vrcp.pop %v4050
      %v4118 = vmul.f32 1.0, %v4117
      %v4119 = vrcp.pop %v4051
      %v4120 = vmul.f32 1.0, %v4119
      %v4121 = vrcp.pop %v4052
      %v4122 = vmul.f32 1.0, %v4121
      %v4123 = vrcp.pop %v4053
      %v4124 = vmul.f32 1.0, %v4123
      %v4125 = vrcp.pop %v4054
      %v4126 = vmul.f32 1.0, %v4125
      %v4127 = vrcp.pop %v4055
      %v4128 = vmul.f32 1.0, %v4127
      %v4129 = vrcp.pop %v4056
      %v4130 = vmul.f32 1.0, %v4129
      %v4131 = vrcp.pop %v4057
      %v4132 = vmul.f32 1.0, %v4131
      %v4133 = vrcp.pop %v4058
      %v4134 = vmul.f32 1.0, %v4133
      %v4135 = vrcp.pop %v4059
      %v4136 = vmul.f32 1.0, %v4135
      %v4137 = vrcp.pop %v4060
      %v4138 = vmul.f32 1.0, %v4137
      %v4139 = vrcp.pop %v4061
      %v4140 = vmul.f32 1.0, %v4139
      %v4141 = vrcp.pop %v4062
      %v4142 = vmul.f32 1.0, %v4141
      %v4143 = vrcp.pop %v4063
      %v4144 = vmul.f32 1.0, %v4143
      %v4145 = vrcp.pop %v4064
      %v4146 = vmul.f32 1.0, %v4145
      %v4147 = vrcp.pop %v4065
      %v4148 = vmul.f32 1.0, %v4147
      %v4149 = vrcp.pop %v4066
      %v4150 = vmul.f32 1.0, %v4149
      %v4151 = vrcp.pop %v4067
      %v4152 = vmul.f32 1.0, %v4151
      %v4153 = vrcp.pop %v4068
      %v4154 = vmul.f32 1.0, %v4153
      %v4155 = vrcp.pop %v4069
      %v4156 = vmul.f32 1.0, %v4155
      %v4157 = vrcp.pop %v4070
      %v4158 = vmul.f32 1.0, %v4157
      %v4159 = vrcp.pop %v4071
      %v4160 = vmul.f32 1.0, %v4159
      %v4161 = vrcp.pop %v4072
      %v4162 = vmul.f32 1.0, %v4161
      %v4163 = vrcp.pop %v4073
      %v4164 = vmul.f32 1.0, %v4163
      %v4165 = vrcp.pop %v4074
      %v4166 = vmul.f32 1.0, %v4165
      %v4167 = vrcp.pop %v4075
      %v4168 = vmul.f32 1.0, %v4167
      %v4169 = vrcp.pop %v4076
      %v4170 = vmul.f32 1.0, %v4169
      %v4171 = vrcp.pop %v4077
      %v4172 = vmul.f32 1.0, %v4171
      %v4173 = vrcp.pop %v4078
      %v4174 = vmul.f32 1.0, %v4173
      %v4175 = vrcp.pop %v4079
      %v4176 = vmul.f32 1.0, %v4175
      %v4177 = vrcp.pop %v4080
      %v4178 = vmul.f32 1.0, %v4177
      %v4179 = vrcp.pop %v4081
      %v4180 = vmul.f32 1.0, %v4179
      %v4181 = vrcp.pop %v4082
      %v4182 = vmul.f32 1.0, %v4181
      %v4183 = vrcp.pop %v4083
      %v4184 = vmul.f32 1.0, %v4183
      %v4185 = vrcp.pop %v4084
      %v4186 = vmul.f32 1.0, %v4185
      %v4187 = vrcp.pop %v4085
      %v4188 = vmul.f32 1.0, %v4187
      %v4189 = vrcp.pop %v4086
      %v4190 = vmul.f32 1.0, %v4189
      %v4191 = vrcp.pop %v4087
      %v4192 = vmul.f32 1.0, %v4191
      %v4193 = vrcp.pop %v4088
      %v4194 = vmul.f32 1.0, %v4193
      %v4195 = vrcp.pop %v4089
      %v4196 = vmul.f32 1.0, %v4195
      %v4197 = vrcp.pop %v4090
      %v4198 = vmul.f32 1.0, %v4197
      %v4199 = vrcp.pop %v4091
      %v4200 = vmul.f32 1.0, %v4199
      %v4201 = vrcp.pop %v4092
      %v4202 = vmul.f32 1.0, %v4201
      %v4203 = vrcp.pop %v4093
      %v4204 = vmul.f32 1.0, %v4203
      %v4205 = vrcp.pop %v4094
      %v4206 = vmul.f32 1.0, %v4205
      %4207 = vst [vmem:[%s532] sm:$0xff] %v4096
      %4208 = vst [vmem:[%s532 + $0x8] sm:$0xff] %v4098
      %4209 = vst [vmem:[%s532 + $0x10] sm:$0xff] %v4100
      %4210 = vst [vmem:[%s532 + $0x18] sm:$0xff] %v4102
      %4211 = vst [vmem:[%s532 + $0x20] sm:$0xff] %v4104
      %4212 = vst [vmem:[%s532 + $0x28] sm:$0xff] %v4106
      %4213 = vst [vmem:[%s532 + $0x30] sm:$0xff] %v4108
      %4214 = vst [vmem:[%s532 + $0x38] sm:$0xff] %v4110
      %4215 = vst [vmem:[%s532 + $0x40] sm:$0xff] %v4112
      %4216 = vst [vmem:[%s532 + $0x48] sm:$0xff] %v4114
      %4217 = vst [vmem:[%s532 + $0x50] sm:$0xff] %v4116
      %4218 = vst [vmem:[%s532 + $0x58] sm:$0xff] %v4118
      %4219 = vst [vmem:[%s532 + $0x60] sm:$0xff] %v4120
      %4220 = vst [vmem:[%s532 + $0x68] sm:$0xff] %v4122
      %4221 = vst [vmem:[%s532 + $0x70] sm:$0xff] %v4124
      %4222 = vst [vmem:[%s532 + $0x78] sm:$0xff] %v4126
      %4223 = vst [vmem:[%s532 + $0x80] sm:$0xff] %v4128
      %4224 = vst [vmem:[%s532 + $0x88] sm:$0xff] %v4130
      %4225 = vst [vmem:[%s532 + $0x90] sm:$0xff] %v4132
      %4226 = vst [vmem:[%s532 + $0x98] sm:$0xff] %v4134
      %4227 = vst [vmem:[%s532 + $0xa0] sm:$0xff] %v4136
      %4228 = vst [vmem:[%s532 + $0xa8] sm:$0xff] %v4138
      %4229 = vst [vmem:[%s532 + $0xb0] sm:$0xff] %v4140
      %4230 = vst [vmem:[%s532 + $0xb8] sm:$0xff] %v4142
      %4231 = vst [vmem:[%s532 + $0xc0] sm:$0xff] %v4144
      %4232 = vst [vmem:[%s532 + $0xc8] sm:$0xff] %v4146
      %4233 = vst [vmem:[%s532 + $0xd0] sm:$0xff] %v4148
      %4234 = vst [vmem:[%s532 + $0xd8] sm:$0xff] %v4150
      %4235 = vst [vmem:[%s532 + $0xe0] sm:$0xff] %v4152
      %4236 = vst [vmem:[%s532 + $0xe8] sm:$0xff] %v4154
      %4237 = vst [vmem:[%s532 + $0xf0] sm:$0xff] %v4156
      %4238 = vst [vmem:[%s532 + $0xf8] sm:$0xff] %v4158
      %4239 = vst [vmem:[%s532 + $0x100] sm:$0xff] %v4160
      %4240 = vst [vmem:[%s532 + $0x108] sm:$0xff] %v4162
      %4241 = vst [vmem:[%s532 + $0x110] sm:$0xff] %v4164
      %4242 = vst [vmem:[%s532 + $0x118] sm:$0xff] %v4166
      %4243 = vst [vmem:[%s532 + $0x120] sm:$0xff] %v4168
      %4244 = vst [vmem:[%s532 + $0x128] sm:$0xff] %v4170
      %4245 = vst [vmem:[%s532 + $0x130] sm:$0xff] %v4172
      %4246 = vst [vmem:[%s532 + $0x138] sm:$0xff] %v4174
      %4247 = vst [vmem:[%s532 + $0x140] sm:$0xff] %v4176
      %4248 = vst [vmem:[%s532 + $0x148] sm:$0xff] %v4178
      %4249 = vst [vmem:[%s532 + $0x150] sm:$0xff] %v4180
      %4250 = vst [vmem:[%s532 + $0x158] sm:$0xff] %v4182
      %4251 = vst [vmem:[%s532 + $0x160] sm:$0xff] %v4184
      %4252 = vst [vmem:[%s532 + $0x168] sm:$0xff] %v4186
      %4253 = vst [vmem:[%s532 + $0x170] sm:$0xff] %v4188
      %4254 = vst [vmem:[%s532 + $0x178] sm:$0xff] %v4190
      %4255 = vst [vmem:[%s532 + $0x180] sm:$0xff] %v4192
      %4256 = vst [vmem:[%s532 + $0x188] sm:$0xff] %v4194
      %4257 = vst [vmem:[%s532 + $0x190] sm:$0xff] %v4196
      %4258 = vst [vmem:[%s532 + $0x198] sm:$0xff] %v4198
      %4259 = vst [vmem:[%s532 + $0x1a0] sm:$0xff] %v4200
      %4260 = vst [vmem:[%s532 + $0x1a8] sm:$0xff] %v4202
      %4261 = vst [vmem:[%s532 + $0x1b0] sm:$0xff] %v4204
      %4262 = vst [vmem:[%s532 + $0x1b8] sm:$0xff] %v4206
      %s4263 = smul.u32 8, %s27
      %p4264 = scmp.lt.s32.totalorder %s4263, 15
      %s4265 = scalar_select %p4264, %s4263, 15
      %s4266 = smul.addr %s4265, 7
      %s4267 = smul.addr %s4266, 8
      %s4268 = scalar_lea.vmem %s14, %s4267
      %s4269 = smul.u32 8, %s27
      %p4270 = scmp.lt.s32.totalorder %s4269, 15
      %s4271 = scalar_select %p4270, %s4269, 15
      %s4272 = smul.addr %s4271, 2
      %s4273 = smul.addr %s4272, 8
      %s4274 = scalar_lea.vmem %s15, %s4273
      // Predicated region
      $region77: #{vae_forward.1} parent=75 // pred_check
        %p4275 = pneg %p349
      $region78: #{vae_forward.1} parent=75 // pred_check_branch
        %4277 = sbr.rel (%p4275) target = $region80
      $region79: #{vae_forward.1} parent=75 // pred_region
        %s4278 = smul.u32 8, %s27
      $region80: #{vae_forward.1} parent=75 // pred_fallthru
        _
      // Predicated region
      $region81: #{vae_forward.1} parent=75 // pred_check
        %p4279 = pneg %p375
      $region82: #{vae_forward.1} parent=75 // pred_check_branch
        %4281 = sbr.rel (%p4279) target = $region84
      $region83: #{vae_forward.1} parent=75 // pred_region
        %s4282 = smul.u32 8, %s27
      $region84: #{vae_forward.1} parent=75 // pred_fallthru
        _
    $region76: #{vae_forward.1} parent=5 // pred_fallthru
      _
    %p4283 = scmp.le.s32.totalorder 2, %s22
    // Predicated region
    $region85: #{vae_forward.1} parent=5 // pred_check
      %p4284 = pneg %p4283
    $region86: #{vae_forward.1} parent=5 // pred_check_branch
      %4286 = sbr.rel (%p4284) target = $region88
    $region87: #{vae_forward.1} parent=5 // pred_region
      %s4287 = ssub.s32 %s22, 2
      // Predicated region
      $region89: #{vae_forward.1} parent=87 // pred_check
        %p4288 = pneg %p355
      $region90: #{vae_forward.1} parent=87 // pred_check_branch
        %4290 = sbr.rel (%p4288) target = $region92
      $region91: #{vae_forward.1} parent=87 // pred_region
        %s4291 = smul.u32 8, %s28
        %p4292 = scmp.lt.s32.totalorder %s4291, 15
        %s4293 = scalar_select %p4292, %s4291, 15
        %s4294 = smul.addr %s4293, 7
        %s4295 = smul.addr %s4294, 8
        %s4296 = scalar_lea.vmem %s14, %s4295
      $region92: #{vae_forward.1} parent=87 // pred_fallthru
        _
      // Predicated region
      $region93: #{vae_forward.1} parent=87 // pred_check
        %p4297 = pneg %p381
      $region94: #{vae_forward.1} parent=87 // pred_check_branch
        %4299 = sbr.rel (%p4297) target = $region96
      $region95: #{vae_forward.1} parent=87 // pred_region
        %s4300 = smul.u32 8, %s28
        %p4301 = scmp.lt.s32.totalorder %s4300, 15
        %s4302 = scalar_select %p4301, %s4300, 15
        %s4303 = smul.addr %s4302, 2
        %s4304 = smul.addr %s4303, 8
        %s4305 = scalar_lea.vmem %s15, %s4304
      $region96: #{vae_forward.1} parent=87 // pred_fallthru
        _
    $region88: #{vae_forward.1} parent=5 // pred_fallthru
      _
  $region6: #{vae_forward.1} parent=0 // loop_footer
    %s26 = sadd.s32 1, %s22
  $region7: #{vae_forward.1} parent=0 // loop_footer_branch
    %21 = sbr.rel target = $region3
  $region8: #{vae_forward.1} parent=0 // loop_exit
    _

</llo_original>
